<compile_context>
chip_gen: v6e
topology: v6e:2x2x1
jax: 0.10.0
libtpu: 0.0.40
codegen_flags: <defaults>
</compile_context>

<pallas_src>
import jax
import jax.numpy as jnp
from jax.experimental import pallas as pl
from jax.experimental.pallas import tpu as pltpu

# ----- module configuration (NeRFOriginal defaults) --------------------------
D = 8
W = 256
INPUT_CH = 3
INPUT_CH_VIEWS = 3
OUTPUT_CH = 4
OUTPUT_COLOR_CH = 3
SKIPS = (4,)          # concat [pts, h] after layer 4 -> layer 5 consumes 3 + 256 inputs

OUT_PAD = 128         # lane-dense output width (cols 0..3 are the real outputs)
TILE_N = 512          # rows per grid step (multiple of 8); sweepable 512-1024


def _round_up(n, m):
    return -(-n // m) * m


# ----- parameter init (deterministic, PyTorch nn.Linear-style uniform) -------
def _linear_init(key, fan_in, fan_out):
    kw, kb = jax.random.split(key)
    bound = 1.0 / (fan_in ** 0.5)
    w = jax.random.uniform(kw, (fan_in, fan_out), jnp.float32, -bound, bound)
    b = jax.random.uniform(kb, (fan_out,), jnp.float32, -bound, bound)
    return w, b


def build_raw_params(key, use_viewdirs):
    """Raw f32 params, weights as (in_features, out_features)."""
    raw = {"pts": []}
    keys = jax.random.split(key, D + 5)
    ki = 0
    in_dims = [INPUT_CH] + [W + INPUT_CH if (i in SKIPS) else W for i in range(D - 1)]
    for fan_in in in_dims:
        raw["pts"].append(_linear_init(keys[ki], fan_in, W))
        ki += 1
    if use_viewdirs:
        raw["feature"] = _linear_init(keys[ki], W, W); ki += 1
        raw["alpha"] = _linear_init(keys[ki], W, 1); ki += 1
        raw["views"] = _linear_init(keys[ki], W + INPUT_CH_VIEWS, W // 2); ki += 1
        raw["rgb"] = _linear_init(keys[ki], W // 2, OUTPUT_COLOR_CH); ki += 1
    else:
        raw["out"] = _linear_init(keys[ki], W, OUTPUT_CH); ki += 1
    return raw


def build_kernel_params(raw, use_viewdirs):
    """Flat param list for the kernel.

    MXU operand weights are stored in bf16; everything consumed by the VPU
    (3-channel rows, alpha row, biases) stays f32.
    """
    ps = []
    w0, b0 = raw["pts"][0]
    ps += [w0, b0[None, :]]                                    # (3,W) f32, (1,W) f32
    for i in range(1, D):
        wi, bi = raw["pts"][i]
        if (i - 1) in SKIPS:   # layer consuming the [pts, h] concat
            ps += [wi[:INPUT_CH],                              # (3,W)  f32  (VPU FMA)
                   wi[INPUT_CH:].astype(jnp.bfloat16),         # (W,W)  bf16 (MXU)
                   bi[None, :]]                                # (1,W)  f32
        else:
            ps += [wi.astype(jnp.bfloat16), bi[None, :]]
    if use_viewdirs:
        wf, bf = raw["feature"]
        wa, ba = raw["alpha"]
        wv, bv = raw["views"]
        wr, br = raw["rgb"]
        wrp = (jnp.zeros((W // 2, OUT_PAD), jnp.float32)
               .at[:, :OUTPUT_COLOR_CH].set(wr)).astype(jnp.bfloat16)
        bop = (jnp.zeros((1, OUT_PAD), jnp.float32)
               .at[0, :OUTPUT_COLOR_CH].set(br)
               .at[0, OUTPUT_COLOR_CH].set(ba[0]))              # alpha bias -> col 3
        ps += [wf.astype(jnp.bfloat16), bf[None, :],            # feature
               wa.T,                                            # (1,W)  f32 alpha row
               wv[:W].astype(jnp.bfloat16),                     # (W, W//2) bf16
               wv[W:],                                          # (3, W//2) f32
               bv[None, :],                                     # (1, W//2) f32
               wrp, bop]                                        # rgb -> cols 0..2
    else:
        wo, bo = raw["out"]
        wop = (jnp.zeros((W, OUT_PAD), jnp.float32)
               .at[:, :OUTPUT_CH].set(wo)).astype(jnp.bfloat16)
        bop = jnp.zeros((1, OUT_PAD), jnp.float32).at[0, :OUTPUT_CH].set(bo)
        ps += [wop, bop]
    return ps


# ----- Pallas kernels ---------------------------------------------------------
def _mxu(a_f32, w_bf16):
    return jnp.dot(a_f32.astype(jnp.bfloat16), w_bf16,
                   preferred_element_type=jnp.float32)


def _fma3(cx, cy, cz, w3):
    # (T,1) x (1,Wout) broadcast FMAs on the VPU: replaces a 97.6%-zero MXU pass.
    return cx * w3[0:1, :] + cy * w3[1:2, :] + cz * w3[2:3, :]


def _trunk(pts, w):
    """Shared 8-layer MLP trunk with ReLU and additive skip (no concat copy)."""
    px = pts[:, 0:1]
    py = pts[:, 1:2]
    pz = pts[:, 2:3]
    w0 = w[0][...]
    b0 = w[1][...]
    h = jnp.maximum(_fma3(px, py, pz, w0) + b0, 0.0)
    idx = 2
    for i in range(1, D):
        if (i - 1) in SKIPS:
            w_pts = w[idx][...]
            w_h = w[idx + 1][...]
            b = w[idx + 2][...]
            idx += 3
            acc = _mxu(h, w_h) + _fma3(px, py, pz, w_pts) + b
        else:
            w_h = w[idx][...]
            b = w[idx + 1][...]
            idx += 2
            acc = _mxu(h, w_h) + b
        h = jnp.maximum(acc, 0.0)
    return h, px, py, pz, idx


def _nerf_kernel_simple(pts_ref, *refs):
    out_ref = refs[-1]
    w = refs[:-1]
    h, _, _, _, idx = _trunk(pts_ref[...], w)
    wout = w[idx][...]
    bout = w[idx + 1][...]
    out_ref[...] = _mxu(h, wout) + bout


def _nerf_kernel_viewdirs(pts_ref, views_ref, *refs):
    out_ref = refs[-1]
    w = refs[:-1]
    h, _, _, _, idx = _trunk(pts_ref[...], w)

    wfeat = w[idx][...];   bfeat = w[idx + 1][...]
    a_row = w[idx + 2][...]
    wv_ft = w[idx + 3][...]; wv_dir = w[idx + 4][...]; bv = w[idx + 5][...]
    wrgb = w[idx + 6][...]; bout = w[idx + 7][...]

    # alpha = h @ alpha_col -> VPU multiply + lane (XLU) reduce; MXU stays free.
    alpha = jnp.sum(h * a_row, axis=-1, keepdims=True)          # (T, 1) f32

    feature = _mxu(h, wfeat) + bfeat                            # (T, W) f32

    views = views_ref[...]
    vx = views[:, 0:1]; vy = views[:, 1:2]; vz = views[:, 2:3]
    hv = _mxu(feature, wv_ft) + _fma3(vx, vy, vz, wv_dir) + bv  # no concat copy
    hv = jnp.maximum(hv, 0.0)                                   # (T, W//2)

    rgb = _mxu(hv, wrgb)                                        # cols 0..2 real

    lane = jax.lax.broadcasted_iota(jnp.int32, (1, OUT_PAD), 1)
    alpha_mask = (lane == OUTPUT_COLOR_CH).astype(jnp.float32)  # one-hot col 3
    out_ref[...] = rgb + alpha * alpha_mask + bout


# ----- wrapper ----------------------------------------------------------------
def _vmem_limit_bytes():
    # Generation-aware: never request more than 3/4 of physical VMEM (v7x only
    # has 64 MiB per TensorCore); cap at 64 MiB on the 128 MiB parts.
    cap = 64 << 20
    try:
        cap = int(getattr(pltpu.get_tpu_info(), "vmem_capacity_bytes", cap))
    except Exception:
        pass
    return int(min(64 << 20, (3 * cap) // 4))


def nerf_forward(x, ts, kernel_params, use_viewdirs):
    del ts  # unused, exactly like the PyTorch forward
    n = x.shape[0]
    pts = x[:, :INPUT_CH].astype(jnp.float32)
    views = x[:, INPUT_CH:INPUT_CH + INPUT_CH_VIEWS].astype(jnp.float32)

    tile = max(8, min(TILE_N, _round_up(n, 8)))   # don't over-pad tiny batches
    n_pad = _round_up(n, tile)
    pts_p = jnp.zeros((n_pad, INPUT_CH), jnp.float32).at[:n].set(pts)
    views_p = jnp.zeros((n_pad, INPUT_CH_VIEWS), jnp.float32).at[:n].set(views)

    def full_spec(arr):
        # Grid-invariant weights/biases: whole array, constant index_map ->
        # fetched once and kept resident in VMEM across the row grid.
        nd = arr.ndim
        return pl.BlockSpec(arr.shape, lambda i, _nd=nd: (0,) * _nd)

    pts_spec = pl.BlockSpec((tile, INPUT_CH), lambda i: (i, 0))

    if use_viewdirs:
        kernel = _nerf_kernel_viewdirs
        inputs = [pts_p, views_p] + list(kernel_params)
        in_specs = [pts_spec,
                    pl.BlockSpec((tile, INPUT_CH_VIEWS), lambda i: (i, 0))]
        in_specs += [full_spec(a) for a in kernel_params]
    else:
        kernel = _nerf_kernel_simple
        inputs = [pts_p] + list(kernel_params)
        in_specs = [pts_spec] + [full_spec(a) for a in kernel_params]

    out_p = pl.pallas_call(
        kernel,
        out_shape=jax.ShapeDtypeStruct((n_pad, OUT_PAD), jnp.float32),
        grid_spec=pltpu.PrefetchScalarGridSpec(
            num_scalar_prefetch=0,
            grid=(n_pad // tile,),
            in_specs=in_specs,
            out_specs=pl.BlockSpec((tile, OUT_PAD), lambda i: (i, 0)),
        ),
        compiler_params=pltpu.CompilerParams(
            dimension_semantics=("parallel",),
            vmem_limit_bytes=_vmem_limit_bytes(),
        ),
    )(*inputs)

    outputs = out_p[:n, :OUTPUT_CH]
    return outputs, jnp.zeros_like(pts[:, :3])


# ----- pure-JAX reference (mirrors the PyTorch forward) ------------------------
def nerf_reference(x, raw, use_viewdirs, matmul_dtype=jnp.float32):
    """Canonical-structure reference.  With matmul_dtype=bf16 the matmul
    operands are cast like the kernel's MXU path (f32 accumulation)."""
    def mm(a, w):
        return jnp.dot(a.astype(matmul_dtype), w.astype(matmul_dtype),
                       preferred_element_type=jnp.float32)
    pts = x[:, :INPUT_CH]
    views = x[:, INPUT_CH:INPUT_CH + INPUT_CH_VIEWS]
    h = pts
    for i in range(D):
        w, b = raw["pts"][i]
        h = jax.nn.relu(mm(h, w) + b)
        if i in SKIPS:
            h = jnp.concatenate([pts, h], -1)
    if use_viewdirs:
        alpha = mm(h, raw["alpha"][0]) + raw["alpha"][1]
        feature = mm(h, raw["feature"][0]) + raw["feature"][1]
        hv = jnp.concatenate([feature, views], -1)
        hv = jax.nn.relu(mm(hv, raw["views"][0]) + raw["views"][1])
        rgb = mm(hv, raw["rgb"][0]) + raw["rgb"][1]
        out = jnp.concatenate([rgb, alpha], -1)
    else:
        out = mm(h, raw["out"][0]) + raw["out"][1]
    return out, jnp.zeros_like(pts[:, :3])


if __name__ == "__main__":
    key = jax.random.PRNGKey(0)
    kx, kt, kp = jax.random.split(key, 3)

    N = 256  # number of rays/points (small test shape)
    x = jax.random.normal(kx, (N, INPUT_CH + INPUT_CH_VIEWS), jnp.float32)
    ts = jax.random.normal(kt, (N, 1), jnp.float32)

    for use_viewdirs in (False, True):
        raw = build_raw_params(kp, use_viewdirs)
        kparams = build_kernel_params(raw, use_viewdirs)

        out, zeros = nerf_forward(x, ts, kparams, use_viewdirs)
        jax.block_until_ready(out)

        # Compare against a reference whose matmul operands are bf16 like the
        # kernel's MXU path (the pure-f32 reference agrees to ~bf16 precision).
        ref_out, ref_zeros = nerf_reference(x, raw, use_viewdirs,
                                            matmul_dtype=jnp.bfloat16)
        assert out.shape == (N, OUTPUT_CH) and out.dtype == jnp.float32
        assert zeros.shape == (N, 3)
        max_err = float(jnp.max(jnp.abs(out - ref_out)))
        assert jnp.allclose(out, ref_out, atol=3e-2, rtol=3e-2), \
            f"mismatch (use_viewdirs={use_viewdirs}), max abs err {max_err}"
        assert jnp.allclose(zeros, ref_zeros)

    print("KERNEL_OK")
</pallas_src>

<mosaic_0001>
module attributes {stable_mosaic.version = 11 : i64} {
  func.func @_nerf_kernel_simple(%arg0: i32, %arg1: memref<256x3xf32, #tpu.memory_space<vmem>>, %arg2: memref<3x256xf32, #tpu.memory_space<vmem>>, %arg3: memref<1x256xf32, #tpu.memory_space<vmem>>, %arg4: memref<256x256xbf16, #tpu.memory_space<vmem>>, %arg5: memref<1x256xf32, #tpu.memory_space<vmem>>, %arg6: memref<256x256xbf16, #tpu.memory_space<vmem>>, %arg7: memref<1x256xf32, #tpu.memory_space<vmem>>, %arg8: memref<256x256xbf16, #tpu.memory_space<vmem>>, %arg9: memref<1x256xf32, #tpu.memory_space<vmem>>, %arg10: memref<256x256xbf16, #tpu.memory_space<vmem>>, %arg11: memref<1x256xf32, #tpu.memory_space<vmem>>, %arg12: memref<3x256xf32, #tpu.memory_space<vmem>>, %arg13: memref<256x256xbf16, #tpu.memory_space<vmem>>, %arg14: memref<1x256xf32, #tpu.memory_space<vmem>>, %arg15: memref<256x256xbf16, #tpu.memory_space<vmem>>, %arg16: memref<1x256xf32, #tpu.memory_space<vmem>>, %arg17: memref<256x256xbf16, #tpu.memory_space<vmem>>, %arg18: memref<1x256xf32, #tpu.memory_space<vmem>>, %arg19: memref<256x128xbf16, #tpu.memory_space<vmem>>, %arg20: memref<1x128xf32, #tpu.memory_space<vmem>>, %arg21: memref<256x128xf32, #tpu.memory_space<vmem>>) attributes {dimension_semantics = [#tpu.dimension_semantics<parallel>], iteration_bounds = array<i64: 1>, scalar_prefetch = 0 : i64, scratch_operands = 0 : i64, tpu.core_type = #tpu.core_type<tc>, window_params = [{transform_indices = @transform_0, window_bounds = array<i64: 256, 3>}, {pipeline_mode = #tpu.pipeline_mode<synchronous>, transform_indices = @transform_1, window_bounds = array<i64: 3, 256>}, {pipeline_mode = #tpu.pipeline_mode<synchronous>, transform_indices = @transform_2, window_bounds = array<i64: 1, 256>}, {pipeline_mode = #tpu.pipeline_mode<synchronous>, transform_indices = @transform_3, window_bounds = array<i64: 256, 256>}, {pipeline_mode = #tpu.pipeline_mode<synchronous>, transform_indices = @transform_4, window_bounds = array<i64: 1, 256>}, {pipeline_mode = #tpu.pipeline_mode<synchronous>, transform_indices = @transform_5, window_bounds = array<i64: 256, 256>}, {pipeline_mode = #tpu.pipeline_mode<synchronous>, transform_indices = @transform_6, window_bounds = array<i64: 1, 256>}, {pipeline_mode = #tpu.pipeline_mode<synchronous>, transform_indices = @transform_7, window_bounds = array<i64: 256, 256>}, {pipeline_mode = #tpu.pipeline_mode<synchronous>, transform_indices = @transform_8, window_bounds = array<i64: 1, 256>}, {pipeline_mode = #tpu.pipeline_mode<synchronous>, transform_indices = @transform_9, window_bounds = array<i64: 256, 256>}, {pipeline_mode = #tpu.pipeline_mode<synchronous>, transform_indices = @transform_10, window_bounds = array<i64: 1, 256>}, {pipeline_mode = #tpu.pipeline_mode<synchronous>, transform_indices = @transform_11, window_bounds = array<i64: 3, 256>}, {pipeline_mode = #tpu.pipeline_mode<synchronous>, transform_indices = @transform_12, window_bounds = array<i64: 256, 256>}, {pipeline_mode = #tpu.pipeline_mode<synchronous>, transform_indices = @transform_13, window_bounds = array<i64: 1, 256>}, {pipeline_mode = #tpu.pipeline_mode<synchronous>, transform_indices = @transform_14, window_bounds = array<i64: 256, 256>}, {pipeline_mode = #tpu.pipeline_mode<synchronous>, transform_indices = @transform_15, window_bounds = array<i64: 1, 256>}, {pipeline_mode = #tpu.pipeline_mode<synchronous>, transform_indices = @transform_16, window_bounds = array<i64: 256, 256>}, {pipeline_mode = #tpu.pipeline_mode<synchronous>, transform_indices = @transform_17, window_bounds = array<i64: 1, 256>}, {pipeline_mode = #tpu.pipeline_mode<synchronous>, transform_indices = @transform_18, window_bounds = array<i64: 256, 128>}, {pipeline_mode = #tpu.pipeline_mode<synchronous>, transform_indices = @transform_19, window_bounds = array<i64: 1, 128>}, {transform_indices = @transform_20, window_bounds = array<i64: 256, 128>}]} {
    %c0 = arith.constant 0 : index
    %c0_0 = arith.constant 0 : index
    %0 = vector.load %arg1[%c0, %c0_0] : memref<256x3xf32, #tpu.memory_space<vmem>>, vector<256x3xf32>
    %1 = vector.extract_strided_slice %0 {offsets = [0, 0], sizes = [256, 1], strides = [1, 1]} : vector<256x3xf32> to vector<256x1xf32>
    %2 = vector.extract_strided_slice %0 {offsets = [0, 1], sizes = [256, 1], strides = [1, 1]} : vector<256x3xf32> to vector<256x1xf32>
    %3 = vector.extract_strided_slice %0 {offsets = [0, 2], sizes = [256, 1], strides = [1, 1]} : vector<256x3xf32> to vector<256x1xf32>
    %c0_1 = arith.constant 0 : index
    %c0_2 = arith.constant 0 : index
    %4 = vector.load %arg2[%c0_1, %c0_2] : memref<3x256xf32, #tpu.memory_space<vmem>>, vector<3x256xf32>
    %c0_3 = arith.constant 0 : index
    %c0_4 = arith.constant 0 : index
    %5 = vector.load %arg3[%c0_3, %c0_4] : memref<1x256xf32, #tpu.memory_space<vmem>>, vector<1x256xf32>
    %6 = vector.extract_strided_slice %4 {offsets = [0, 0], sizes = [1, 256], strides = [1, 1]} : vector<3x256xf32> to vector<1x256xf32>
    %7 = vector.broadcast %1 : vector<256x1xf32> to vector<256x256xf32>
    %8 = vector.broadcast %6 : vector<1x256xf32> to vector<256x256xf32>
    %9 = arith.mulf %7, %8 : vector<256x256xf32>
    %10 = vector.extract_strided_slice %4 {offsets = [1, 0], sizes = [1, 256], strides = [1, 1]} : vector<3x256xf32> to vector<1x256xf32>
    %11 = vector.broadcast %2 : vector<256x1xf32> to vector<256x256xf32>
    %12 = vector.broadcast %10 : vector<1x256xf32> to vector<256x256xf32>
    %13 = arith.mulf %11, %12 : vector<256x256xf32>
    %14 = arith.addf %9, %13 : vector<256x256xf32>
    %15 = vector.extract_strided_slice %4 {offsets = [2, 0], sizes = [1, 256], strides = [1, 1]} : vector<3x256xf32> to vector<1x256xf32>
    %16 = vector.broadcast %3 : vector<256x1xf32> to vector<256x256xf32>
    %17 = vector.broadcast %15 : vector<1x256xf32> to vector<256x256xf32>
    %18 = arith.mulf %16, %17 : vector<256x256xf32>
    %19 = arith.addf %14, %18 : vector<256x256xf32>
    %20 = vector.broadcast %5 : vector<1x256xf32> to vector<256x256xf32>
    %21 = arith.addf %19, %20 : vector<256x256xf32>
    %cst = arith.constant 0.000000e+00 : f32
    %22 = vector.broadcast %cst : f32 to vector<256x256xf32>
    %23 = arith.maximumf %21, %22 : vector<256x256xf32>
    %c0_5 = arith.constant 0 : index
    %c0_6 = arith.constant 0 : index
    %24 = vector.load %arg4[%c0_5, %c0_6] : memref<256x256xbf16, #tpu.memory_space<vmem>>, vector<256x256xbf16>
    %c0_7 = arith.constant 0 : index
    %c0_8 = arith.constant 0 : index
    %25 = vector.load %arg5[%c0_7, %c0_8] : memref<1x256xf32, #tpu.memory_space<vmem>>, vector<1x256xf32>
    %26 = arith.truncf %23 : vector<256x256xf32> to vector<256x256xbf16>
    %cst_9 = arith.constant dense<0.000000e+00> : vector<256x256xf32>
    %27 = tpu.matmul %26, %24, %cst_9 {dimension_numbers = #tpu.dot_dimension_numbers<[1], [0], [0], [1], [0, 0, 1, 1], [], []>} : vector<256x256xbf16>, vector<256x256xbf16>, vector<256x256xf32> -> vector<256x256xf32>
    %28 = vector.broadcast %25 : vector<1x256xf32> to vector<256x256xf32>
    %29 = arith.addf %27, %28 : vector<256x256xf32>
    %cst_10 = arith.constant 0.000000e+00 : f32
    %30 = vector.broadcast %cst_10 : f32 to vector<256x256xf32>
    %31 = arith.maximumf %29, %30 : vector<256x256xf32>
    %c0_11 = arith.constant 0 : index
    %c0_12 = arith.constant 0 : index
    %32 = vector.load %arg6[%c0_11, %c0_12] : memref<256x256xbf16, #tpu.memory_space<vmem>>, vector<256x256xbf16>
    %c0_13 = arith.constant 0 : index
    %c0_14 = arith.constant 0 : index
    %33 = vector.load %arg7[%c0_13, %c0_14] : memref<1x256xf32, #tpu.memory_space<vmem>>, vector<1x256xf32>
    %34 = arith.truncf %31 : vector<256x256xf32> to vector<256x256xbf16>
    %cst_15 = arith.constant dense<0.000000e+00> : vector<256x256xf32>
    %35 = tpu.matmul %34, %32, %cst_15 {dimension_numbers = #tpu.dot_dimension_numbers<[1], [0], [0], [1], [0, 0, 1, 1], [], []>} : vector<256x256xbf16>, vector<256x256xbf16>, vector<256x256xf32> -> vector<256x256xf32>
    %36 = vector.broadcast %33 : vector<1x256xf32> to vector<256x256xf32>
    %37 = arith.addf %35, %36 : vector<256x256xf32>
    %cst_16 = arith.constant 0.000000e+00 : f32
    %38 = vector.broadcast %cst_16 : f32 to vector<256x256xf32>
    %39 = arith.maximumf %37, %38 : vector<256x256xf32>
    %c0_17 = arith.constant 0 : index
    %c0_18 = arith.constant 0 : index
    %40 = vector.load %arg8[%c0_17, %c0_18] : memref<256x256xbf16, #tpu.memory_space<vmem>>, vector<256x256xbf16>
    %c0_19 = arith.constant 0 : index
    %c0_20 = arith.constant 0 : index
    %41 = vector.load %arg9[%c0_19, %c0_20] : memref<1x256xf32, #tpu.memory_space<vmem>>, vector<1x256xf32>
    %42 = arith.truncf %39 : vector<256x256xf32> to vector<256x256xbf16>
    %cst_21 = arith.constant dense<0.000000e+00> : vector<256x256xf32>
    %43 = tpu.matmul %42, %40, %cst_21 {dimension_numbers = #tpu.dot_dimension_numbers<[1], [0], [0], [1], [0, 0, 1, 1], [], []>} : vector<256x256xbf16>, vector<256x256xbf16>, vector<256x256xf32> -> vector<256x256xf32>
    %44 = vector.broadcast %41 : vector<1x256xf32> to vector<256x256xf32>
    %45 = arith.addf %43, %44 : vector<256x256xf32>
    %cst_22 = arith.constant 0.000000e+00 : f32
    %46 = vector.broadcast %cst_22 : f32 to vector<256x256xf32>
    %47 = arith.maximumf %45, %46 : vector<256x256xf32>
    %c0_23 = arith.constant 0 : index
    %c0_24 = arith.constant 0 : index
    %48 = vector.load %arg10[%c0_23, %c0_24] : memref<256x256xbf16, #tpu.memory_space<vmem>>, vector<256x256xbf16>
    %c0_25 = arith.constant 0 : index
    %c0_26 = arith.constant 0 : index
    %49 = vector.load %arg11[%c0_25, %c0_26] : memref<1x256xf32, #tpu.memory_space<vmem>>, vector<1x256xf32>
    %50 = arith.truncf %47 : vector<256x256xf32> to vector<256x256xbf16>
    %cst_27 = arith.constant dense<0.000000e+00> : vector<256x256xf32>
    %51 = tpu.matmul %50, %48, %cst_27 {dimension_numbers = #tpu.dot_dimension_numbers<[1], [0], [0], [1], [0, 0, 1, 1], [], []>} : vector<256x256xbf16>, vector<256x256xbf16>, vector<256x256xf32> -> vector<256x256xf32>
    %52 = vector.broadcast %49 : vector<1x256xf32> to vector<256x256xf32>
    %53 = arith.addf %51, %52 : vector<256x256xf32>
    %cst_28 = arith.constant 0.000000e+00 : f32
    %54 = vector.broadcast %cst_28 : f32 to vector<256x256xf32>
    %55 = arith.maximumf %53, %54 : vector<256x256xf32>
    %c0_29 = arith.constant 0 : index
    %c0_30 = arith.constant 0 : index
    %56 = vector.load %arg12[%c0_29, %c0_30] : memref<3x256xf32, #tpu.memory_space<vmem>>, vector<3x256xf32>
    %c0_31 = arith.constant 0 : index
    %c0_32 = arith.constant 0 : index
    %57 = vector.load %arg13[%c0_31, %c0_32] : memref<256x256xbf16, #tpu.memory_space<vmem>>, vector<256x256xbf16>
    %c0_33 = arith.constant 0 : index
    %c0_34 = arith.constant 0 : index
    %58 = vector.load %arg14[%c0_33, %c0_34] : memref<1x256xf32, #tpu.memory_space<vmem>>, vector<1x256xf32>
    %59 = arith.truncf %55 : vector<256x256xf32> to vector<256x256xbf16>
    %cst_35 = arith.constant dense<0.000000e+00> : vector<256x256xf32>
    %60 = tpu.matmul %59, %57, %cst_35 {dimension_numbers = #tpu.dot_dimension_numbers<[1], [0], [0], [1], [0, 0, 1, 1], [], []>} : vector<256x256xbf16>, vector<256x256xbf16>, vector<256x256xf32> -> vector<256x256xf32>
    %61 = vector.extract_strided_slice %56 {offsets = [0, 0], sizes = [1, 256], strides = [1, 1]} : vector<3x256xf32> to vector<1x256xf32>
    %62 = vector.broadcast %1 : vector<256x1xf32> to vector<256x256xf32>
    %63 = vector.broadcast %61 : vector<1x256xf32> to vector<256x256xf32>
    %64 = arith.mulf %62, %63 : vector<256x256xf32>
    %65 = vector.extract_strided_slice %56 {offsets = [1, 0], sizes = [1, 256], strides = [1, 1]} : vector<3x256xf32> to vector<1x256xf32>
    %66 = vector.broadcast %2 : vector<256x1xf32> to vector<256x256xf32>
    %67 = vector.broadcast %65 : vector<1x256xf32> to vector<256x256xf32>
    %68 = arith.mulf %66, %67 : vector<256x256xf32>
    %69 = arith.addf %64, %68 : vector<256x256xf32>
    %70 = vector.extract_strided_slice %56 {offsets = [2, 0], sizes = [1, 256], strides = [1, 1]} : vector<3x256xf32> to vector<1x256xf32>
    %71 = vector.broadcast %3 : vector<256x1xf32> to vector<256x256xf32>
    %72 = vector.broadcast %70 : vector<1x256xf32> to vector<256x256xf32>
    %73 = arith.mulf %71, %72 : vector<256x256xf32>
    %74 = arith.addf %69, %73 : vector<256x256xf32>
    %75 = arith.addf %60, %74 : vector<256x256xf32>
    %76 = vector.broadcast %58 : vector<1x256xf32> to vector<256x256xf32>
    %77 = arith.addf %75, %76 : vector<256x256xf32>
    %cst_36 = arith.constant 0.000000e+00 : f32
    %78 = vector.broadcast %cst_36 : f32 to vector<256x256xf32>
    %79 = arith.maximumf %77, %78 : vector<256x256xf32>
    %c0_37 = arith.constant 0 : index
    %c0_38 = arith.constant 0 : index
    %80 = vector.load %arg15[%c0_37, %c0_38] : memref<256x256xbf16, #tpu.memory_space<vmem>>, vector<256x256xbf16>
    %c0_39 = arith.constant 0 : index
    %c0_40 = arith.constant 0 : index
    %81 = vector.load %arg16[%c0_39, %c0_40] : memref<1x256xf32, #tpu.memory_space<vmem>>, vector<1x256xf32>
    %82 = arith.truncf %79 : vector<256x256xf32> to vector<256x256xbf16>
    %cst_41 = arith.constant dense<0.000000e+00> : vector<256x256xf32>
    %83 = tpu.matmul %82, %80, %cst_41 {dimension_numbers = #tpu.dot_dimension_numbers<[1], [0], [0], [1], [0, 0, 1, 1], [], []>} : vector<256x256xbf16>, vector<256x256xbf16>, vector<256x256xf32> -> vector<256x256xf32>
    %84 = vector.broadcast %81 : vector<1x256xf32> to vector<256x256xf32>
    %85 = arith.addf %83, %84 : vector<256x256xf32>
    %cst_42 = arith.constant 0.000000e+00 : f32
    %86 = vector.broadcast %cst_42 : f32 to vector<256x256xf32>
    %87 = arith.maximumf %85, %86 : vector<256x256xf32>
    %c0_43 = arith.constant 0 : index
    %c0_44 = arith.constant 0 : index
    %88 = vector.load %arg17[%c0_43, %c0_44] : memref<256x256xbf16, #tpu.memory_space<vmem>>, vector<256x256xbf16>
    %c0_45 = arith.constant 0 : index
    %c0_46 = arith.constant 0 : index
    %89 = vector.load %arg18[%c0_45, %c0_46] : memref<1x256xf32, #tpu.memory_space<vmem>>, vector<1x256xf32>
    %90 = arith.truncf %87 : vector<256x256xf32> to vector<256x256xbf16>
    %cst_47 = arith.constant dense<0.000000e+00> : vector<256x256xf32>
    %91 = tpu.matmul %90, %88, %cst_47 {dimension_numbers = #tpu.dot_dimension_numbers<[1], [0], [0], [1], [0, 0, 1, 1], [], []>} : vector<256x256xbf16>, vector<256x256xbf16>, vector<256x256xf32> -> vector<256x256xf32>
    %92 = vector.broadcast %89 : vector<1x256xf32> to vector<256x256xf32>
    %93 = arith.addf %91, %92 : vector<256x256xf32>
    %cst_48 = arith.constant 0.000000e+00 : f32
    %94 = vector.broadcast %cst_48 : f32 to vector<256x256xf32>
    %95 = arith.maximumf %93, %94 : vector<256x256xf32>
    %c0_49 = arith.constant 0 : index
    %c0_50 = arith.constant 0 : index
    %96 = vector.load %arg19[%c0_49, %c0_50] : memref<256x128xbf16, #tpu.memory_space<vmem>>, vector<256x128xbf16>
    %c0_51 = arith.constant 0 : index
    %c0_52 = arith.constant 0 : index
    %97 = vector.load %arg20[%c0_51, %c0_52] : memref<1x128xf32, #tpu.memory_space<vmem>>, vector<1x128xf32>
    %98 = arith.truncf %95 : vector<256x256xf32> to vector<256x256xbf16>
    %cst_53 = arith.constant dense<0.000000e+00> : vector<256x128xf32>
    %99 = tpu.matmul %98, %96, %cst_53 {dimension_numbers = #tpu.dot_dimension_numbers<[1], [0], [0], [1], [0, 0, 1, 1], [], []>} : vector<256x256xbf16>, vector<256x128xbf16>, vector<256x128xf32> -> vector<256x128xf32>
    %100 = vector.broadcast %97 : vector<1x128xf32> to vector<256x128xf32>
    %101 = arith.addf %99, %100 : vector<256x128xf32>
    %c0_54 = arith.constant 0 : index
    %c0_55 = arith.constant 0 : index
    %102 = vector.load %arg21[%c0_54, %c0_55] : memref<256x128xf32, #tpu.memory_space<vmem>>, vector<256x128xf32>
    tpu.vector_store %arg21[%c0_54, %c0_55], %101 {strides = array<i32>} : memref<256x128xf32, #tpu.memory_space<vmem>>, vector<256x128xf32>,
    return
  }
  func.func @transform_0(%arg0: i32) -> (i32, i32) {
    %c0_i32 = arith.constant 0 : i32
    %c0_i32_0 = arith.constant 0 : i32
    return %arg0, %c0_i32 : i32, i32
  }
  func.func @transform_1(%arg0: i32) -> (i32, i32) {
    %c0_i32 = arith.constant 0 : i32
    %c0_i32_0 = arith.constant 0 : i32
    %c0_i32_1 = arith.constant 0 : i32
    return %c0_i32, %c0_i32_0 : i32, i32
  }
  func.func @transform_2(%arg0: i32) -> (i32, i32) {
    %c0_i32 = arith.constant 0 : i32
    %c0_i32_0 = arith.constant 0 : i32
    %c0_i32_1 = arith.constant 0 : i32
    return %c0_i32, %c0_i32_0 : i32, i32
  }
  func.func @transform_3(%arg0: i32) -> (i32, i32) {
    %c0_i32 = arith.constant 0 : i32
    %c0_i32_0 = arith.constant 0 : i32
    %c0_i32_1 = arith.constant 0 : i32
    return %c0_i32, %c0_i32_0 : i32, i32
  }
  func.func @transform_4(%arg0: i32) -> (i32, i32) {
    %c0_i32 = arith.constant 0 : i32
    %c0_i32_0 = arith.constant 0 : i32
    %c0_i32_1 = arith.constant 0 : i32
    return %c0_i32, %c0_i32_0 : i32, i32
  }
  func.func @transform_5(%arg0: i32) -> (i32, i32) {
    %c0_i32 = arith.constant 0 : i32
    %c0_i32_0 = arith.constant 0 : i32
    %c0_i32_1 = arith.constant 0 : i32
    return %c0_i32, %c0_i32_0 : i32, i32
  }
  func.func @transform_6(%arg0: i32) -> (i32, i32) {
    %c0_i32 = arith.constant 0 : i32
    %c0_i32_0 = arith.constant 0 : i32
    %c0_i32_1 = arith.constant 0 : i32
    return %c0_i32, %c0_i32_0 : i32, i32
  }
  func.func @transform_7(%arg0: i32) -> (i32, i32) {
    %c0_i32 = arith.constant 0 : i32
    %c0_i32_0 = arith.constant 0 : i32
    %c0_i32_1 = arith.constant 0 : i32
    return %c0_i32, %c0_i32_0 : i32, i32
  }
  func.func @transform_8(%arg0: i32) -> (i32, i32) {
    %c0_i32 = arith.constant 0 : i32
    %c0_i32_0 = arith.constant 0 : i32
    %c0_i32_1 = arith.constant 0 : i32
    return %c0_i32, %c0_i32_0 : i32, i32
  }
  func.func @transform_9(%arg0: i32) -> (i32, i32) {
    %c0_i32 = arith.constant 0 : i32
    %c0_i32_0 = arith.constant 0 : i32
    %c0_i32_1 = arith.constant 0 : i32
    return %c0_i32, %c0_i32_0 : i32, i32
  }
  func.func @transform_10(%arg0: i32) -> (i32, i32) {
    %c0_i32 = arith.constant 0 : i32
    %c0_i32_0 = arith.constant 0 : i32
    %c0_i32_1 = arith.constant 0 : i32
    return %c0_i32, %c0_i32_0 : i32, i32
  }
  func.func @transform_11(%arg0: i32) -> (i32, i32) {
    %c0_i32 = arith.constant 0 : i32
    %c0_i32_0 = arith.constant 0 : i32
    %c0_i32_1 = arith.constant 0 : i32
    return %c0_i32, %c0_i32_0 : i32, i32
  }
  func.func @transform_12(%arg0: i32) -> (i32, i32) {
    %c0_i32 = arith.constant 0 : i32
    %c0_i32_0 = arith.constant 0 : i32
    %c0_i32_1 = arith.constant 0 : i32
    return %c0_i32, %c0_i32_0 : i32, i32
  }
  func.func @transform_13(%arg0: i32) -> (i32, i32) {
    %c0_i32 = arith.constant 0 : i32
    %c0_i32_0 = arith.constant 0 : i32
    %c0_i32_1 = arith.constant 0 : i32
    return %c0_i32, %c0_i32_0 : i32, i32
  }
  func.func @transform_14(%arg0: i32) -> (i32, i32) {
    %c0_i32 = arith.constant 0 : i32
    %c0_i32_0 = arith.constant 0 : i32
    %c0_i32_1 = arith.constant 0 : i32
    return %c0_i32, %c0_i32_0 : i32, i32
  }
  func.func @transform_15(%arg0: i32) -> (i32, i32) {
    %c0_i32 = arith.constant 0 : i32
    %c0_i32_0 = arith.constant 0 : i32
    %c0_i32_1 = arith.constant 0 : i32
    return %c0_i32, %c0_i32_0 : i32, i32
  }
  func.func @transform_16(%arg0: i32) -> (i32, i32) {
    %c0_i32 = arith.constant 0 : i32
    %c0_i32_0 = arith.constant 0 : i32
    %c0_i32_1 = arith.constant 0 : i32
    return %c0_i32, %c0_i32_0 : i32, i32
  }
  func.func @transform_17(%arg0: i32) -> (i32, i32) {
    %c0_i32 = arith.constant 0 : i32
    %c0_i32_0 = arith.constant 0 : i32
    %c0_i32_1 = arith.constant 0 : i32
    return %c0_i32, %c0_i32_0 : i32, i32
  }
  func.func @transform_18(%arg0: i32) -> (i32, i32) {
    %c0_i32 = arith.constant 0 : i32
    %c0_i32_0 = arith.constant 0 : i32
    %c0_i32_1 = arith.constant 0 : i32
    return %c0_i32, %c0_i32_0 : i32, i32
  }
  func.func @transform_19(%arg0: i32) -> (i32, i32) {
    %c0_i32 = arith.constant 0 : i32
    %c0_i32_0 = arith.constant 0 : i32
    %c0_i32_1 = arith.constant 0 : i32
    return %c0_i32, %c0_i32_0 : i32, i32
  }
  func.func @transform_20(%arg0: i32) -> (i32, i32) {
    %c0_i32 = arith.constant 0 : i32
    %c0_i32_0 = arith.constant 0 : i32
    return %arg0, %c0_i32 : i32, i32
  }
}

</mosaic_0001>

<llo_original>
// kernel: tpu_custom_call.1
$region0: #{tpu_custom_call.1}
  #allocation0 [shape = 'u32[]', space=smem, size = 0x4, offset = 0x4, fixed_abs, tag = 'smem constant byte address 0x4 - core index']
  #allocation1 [shape = 'u32[144,128]{1,0:T(1,128)}', space=vmem, size = 0x12000, scoped, tag = 'internal scratch']
  %s0 = inlined_call_operand.vmem [shape: f32[256,3], index: 0, kind: input, shape index: {}]
  %s1 = inlined_call_operand.vmem [shape: f32[3,256], index: 1, kind: input, shape index: {}]
  %s2 = inlined_call_operand.vmem [shape: f32[1,256], index: 2, kind: input, shape index: {}]
  %s3 = inlined_call_operand.vmem [shape: bf16[256,256], index: 3, kind: input, shape index: {}]
  %s4 = inlined_call_operand.hbm [shape: f32[1,256], index: 4, kind: input, shape index: {}]
  %s5 = inlined_call_operand.hbm [shape: bf16[256,256], index: 5, kind: input, shape index: {}]
  %s6 = inlined_call_operand.hbm [shape: f32[1,256], index: 6, kind: input, shape index: {}]
  %s7 = inlined_call_operand.hbm [shape: bf16[256,256], index: 7, kind: input, shape index: {}]
  %s8 = inlined_call_operand.vmem [shape: f32[1,256], index: 8, kind: input, shape index: {}]
  %s9 = inlined_call_operand.hbm [shape: bf16[256,256], index: 9, kind: input, shape index: {}]
  %s10 = inlined_call_operand.vmem [shape: f32[1,256], index: 10, kind: input, shape index: {}]
  %s11 = inlined_call_operand.vmem [shape: f32[3,256], index: 11, kind: input, shape index: {}]
  %s12 = inlined_call_operand.hbm [shape: bf16[256,256], index: 12, kind: input, shape index: {}]
  %s13 = inlined_call_operand.vmem [shape: f32[1,256], index: 13, kind: input, shape index: {}]
  %s14 = inlined_call_operand.hbm [shape: bf16[256,256], index: 14, kind: input, shape index: {}]
  %s15 = inlined_call_operand.vmem [shape: f32[1,256], index: 15, kind: input, shape index: {}]
  %s16 = inlined_call_operand.hbm [shape: bf16[256,256], index: 16, kind: input, shape index: {}]
  %s17 = inlined_call_operand.vmem [shape: f32[1,256], index: 17, kind: input, shape index: {}]
  %s18 = inlined_call_operand.hbm [shape: bf16[256,128], index: 18, kind: input, shape index: {}]
  %s19 = inlined_call_operand.vmem [shape: f32[1,128], index: 19, kind: input, shape index: {}]
  %s20 = inlined_call_operand.hbm [shape: f32[256,128], index: 20, kind: output, shape index: {}]
  %s21 = sld [smem:[#allocation0]]
  $region126: #{tpu_custom_call.1} parent=0
    _
  %s23 = ssub.s32 1, %s21
  %s24 = scalar_select 0, %s23, %s21
  $region1: #{tpu_custom_call.1} parent=0
    #allocation2 [shape = 'u8[1024]{0}', space=vmem, size = 0x400, scoped, tag = 'input window, operand 4, single buffered']
    #allocation3 [shape = 's32[1]{0}', space=sflag, size = 0x4, scoped, tag = 'scoped memory for tpu_custom_call.1']
    #allocation4 [shape = 's32[1]{0}', space=sflag, size = 0x4, scoped, tag = 'scoped memory for tpu_custom_call.1']
    #allocation5 [shape = 'u8[131072]{0}', space=vmem, size = 0x20000, scoped, tag = 'input window, operand 5, single buffered']
    #allocation6 [shape = 's32[1]{0}', space=sflag, size = 0x4, scoped, tag = 'scoped memory for tpu_custom_call.1']
    #allocation7 [shape = 'u8[1024]{0}', space=vmem, size = 0x400, scoped, tag = 'input window, operand 6, single buffered']
    #allocation8 [shape = 'u8[131072]{0}', space=vmem, size = 0x20000, scoped, tag = 'input window, operand 7, single buffered']
    #allocation9 [shape = 's32[1]{0}', space=sflag, size = 0x4, scoped, tag = 'scoped memory for tpu_custom_call.1']
    #allocation10 [shape = 'u8[131072]{0}', space=vmem, size = 0x20000, scoped, tag = 'input window, operand 9, single buffered']
    #allocation11 [shape = 'u8[131072]{0}', space=vmem, size = 0x20000, scoped, tag = 'input window, operand 12, single buffered']
    #allocation12 [shape = 's32[1]{0}', space=sflag, size = 0x4, scoped, tag = 'scoped memory for tpu_custom_call.1']
    #allocation13 [shape = 'u8[131072]{0}', space=vmem, size = 0x20000, scoped, tag = 'input window, operand 14, single buffered']
    #allocation14 [shape = 'u8[131072]{0}', space=vmem, size = 0x20000, scoped, tag = 'input window, operand 16, single buffered']
    #allocation15 [shape = 's32[1]{0}', space=sflag, size = 0x4, scoped, tag = 'scoped memory for tpu_custom_call.1']
    #allocation16 [shape = 'u8[65536]{0}', space=vmem, size = 0x10000, scoped, tag = 'input window, operand 18, single buffered']
    #allocation17 [shape = 'u8[131072]{0}', space=vmem, size = 0x20000, scoped, tag = 'output window, operand 0, single buffered']
    %25 = vsyncpa [#allocation3], 0
    %26 = vsyncpa [#allocation6], 0
    %27 = vsyncpa [#allocation9], 0
    %28 = vsyncpa [#allocation12], 0
    %29 = vsyncpa [#allocation15], 0
    %30 = vsyncpa [#allocation4], 0
    // Predicated region
    $region2: #{tpu_custom_call.1} parent=1 // pred_check
      _
    $region3: #{tpu_custom_call.1} parent=1 // pred_check_branch
      %32 = sbr.rel (0) target = $region5
    $region4: #{tpu_custom_call.1} parent=1 // pred_region
      _
    $region5: #{tpu_custom_call.1} parent=1 // pred_fallthru
      _
    // Predicated region
    $region6: #{tpu_custom_call.1} parent=1 // pred_check
      _
    $region7: #{tpu_custom_call.1} parent=1 // pred_check_branch
      %34 = sbr.rel (0) target = $region9
    $region8: #{tpu_custom_call.1} parent=1 // pred_region
      _
    $region9: #{tpu_custom_call.1} parent=1 // pred_fallthru
      _
    // Predicated region
    $region10: #{tpu_custom_call.1} parent=1 // pred_check
      _
    $region11: #{tpu_custom_call.1} parent=1 // pred_check_branch
      %36 = sbr.rel (0) target = $region13
    $region12: #{tpu_custom_call.1} parent=1 // pred_region
      _
    $region13: #{tpu_custom_call.1} parent=1 // pred_fallthru
      _
    // Predicated region
    $region14: #{tpu_custom_call.1} parent=1 // pred_check
      _
    $region15: #{tpu_custom_call.1} parent=1 // pred_check_branch
      %38 = sbr.rel (0) target = $region17
    $region16: #{tpu_custom_call.1} parent=1 // pred_region
      _
    $region17: #{tpu_custom_call.1} parent=1 // pred_fallthru
      _
    // Predicated region
    $region18: #{tpu_custom_call.1} parent=1 // pred_check
      _
    $region19: #{tpu_custom_call.1} parent=1 // pred_check_branch
      %40 = sbr.rel (0) target = $region21
    $region20: #{tpu_custom_call.1} parent=1 // pred_region
      %s42 = ssub.s32 32, 32
      %43 = vsyncadd [#allocation3], %s42
      %s45 = sshll.u32 [#allocation2], 4
      %s46 = int_to_ptr.vmem [resolvable:$true] %s45
      %48 = dma.hbm_to_vmem [thread:$0]  %s4, 32, %s46, [#allocation3]
    $region21: #{tpu_custom_call.1} parent=1 // pred_fallthru
      _
    // Predicated region
    $region22: #{tpu_custom_call.1} parent=1 // pred_check
      _
    $region23: #{tpu_custom_call.1} parent=1 // pred_check_branch
      %50 = sbr.rel (0) target = $region25
    $region24: #{tpu_custom_call.1} parent=1 // pred_region
      %s52 = ssub.s32 4096, 4096
      %53 = vsyncadd [#allocation6], %s52
      %s54 = sshll.u32 [#allocation5], 4
      %s55 = int_to_ptr.vmem [resolvable:$true] %s54
      %60 = dma.hbm_to_vmem [thread:$0]  %s5, 4096, %s55, [#allocation6], 128, 128, 8
    $region25: #{tpu_custom_call.1} parent=1 // pred_fallthru
      _
    // Predicated region
    $region26: #{tpu_custom_call.1} parent=1 // pred_check
      _
    $region27: #{tpu_custom_call.1} parent=1 // pred_check_branch
      %62 = sbr.rel (0) target = $region29
    $region28: #{tpu_custom_call.1} parent=1 // pred_region
      %s64 = ssub.s32 32, 32
      %65 = vsyncadd [#allocation6], %s64
      %s67 = sshll.u32 [#allocation7], 4
      %s68 = int_to_ptr.vmem [resolvable:$true] %s67
      %70 = dma.hbm_to_vmem [thread:$0]  %s6, 32, %s68, [#allocation6]
    $region29: #{tpu_custom_call.1} parent=1 // pred_fallthru
      _
    // Predicated region
    $region30: #{tpu_custom_call.1} parent=1 // pred_check
      _
    $region31: #{tpu_custom_call.1} parent=1 // pred_check_branch
      %72 = sbr.rel (0) target = $region33
    $region32: #{tpu_custom_call.1} parent=1 // pred_region
      %s74 = ssub.s32 4096, 4096
      %75 = vsyncadd [#allocation9], %s74
      %s76 = sshll.u32 [#allocation8], 4
      %s77 = int_to_ptr.vmem [resolvable:$true] %s76
      %82 = dma.hbm_to_vmem [thread:$0]  %s7, 4096, %s77, [#allocation9], 128, 128, 8
    $region33: #{tpu_custom_call.1} parent=1 // pred_fallthru
      _
    // Predicated region
    $region34: #{tpu_custom_call.1} parent=1 // pred_check
      _
    $region35: #{tpu_custom_call.1} parent=1 // pred_check_branch
      %84 = sbr.rel (0) target = $region37
    $region36: #{tpu_custom_call.1} parent=1 // pred_region
      _
    $region37: #{tpu_custom_call.1} parent=1 // pred_fallthru
      _
    // Predicated region
    $region38: #{tpu_custom_call.1} parent=1 // pred_check
      _
    $region39: #{tpu_custom_call.1} parent=1 // pred_check_branch
      %86 = sbr.rel (0) target = $region41
    $region40: #{tpu_custom_call.1} parent=1 // pred_region
      %s88 = ssub.s32 4096, 4096
      %89 = vsyncadd [#allocation9], %s88
      %s90 = sshll.u32 [#allocation10], 4
      %s91 = int_to_ptr.vmem [resolvable:$true] %s90
      %96 = dma.hbm_to_vmem [thread:$0]  %s9, 4096, %s91, [#allocation9], 128, 128, 8
    $region41: #{tpu_custom_call.1} parent=1 // pred_fallthru
      _
    // Predicated region
    $region42: #{tpu_custom_call.1} parent=1 // pred_check
      _
    $region43: #{tpu_custom_call.1} parent=1 // pred_check_branch
      %98 = sbr.rel (0) target = $region45
    $region44: #{tpu_custom_call.1} parent=1 // pred_region
      _
    $region45: #{tpu_custom_call.1} parent=1 // pred_fallthru
      _
    // Predicated region
    $region46: #{tpu_custom_call.1} parent=1 // pred_check
      _
    $region47: #{tpu_custom_call.1} parent=1 // pred_check_branch
      %100 = sbr.rel (0) target = $region49
    $region48: #{tpu_custom_call.1} parent=1 // pred_region
      _
    $region49: #{tpu_custom_call.1} parent=1 // pred_fallthru
      _
    // Predicated region
    $region50: #{tpu_custom_call.1} parent=1 // pred_check
      _
    $region51: #{tpu_custom_call.1} parent=1 // pred_check_branch
      %102 = sbr.rel (0) target = $region53
    $region52: #{tpu_custom_call.1} parent=1 // pred_region
      %s104 = ssub.s32 4096, 4096
      %105 = vsyncadd [#allocation12], %s104
      %s106 = sshll.u32 [#allocation11], 4
      %s107 = int_to_ptr.vmem [resolvable:$true] %s106
      %112 = dma.hbm_to_vmem [thread:$0]  %s12, 4096, %s107, [#allocation12], 128, 128, 8
    $region53: #{tpu_custom_call.1} parent=1 // pred_fallthru
      _
    // Predicated region
    $region54: #{tpu_custom_call.1} parent=1 // pred_check
      _
    $region55: #{tpu_custom_call.1} parent=1 // pred_check_branch
      %114 = sbr.rel (0) target = $region57
    $region56: #{tpu_custom_call.1} parent=1 // pred_region
      _
    $region57: #{tpu_custom_call.1} parent=1 // pred_fallthru
      _
    // Predicated region
    $region58: #{tpu_custom_call.1} parent=1 // pred_check
      _
    $region59: #{tpu_custom_call.1} parent=1 // pred_check_branch
      %116 = sbr.rel (0) target = $region61
    $region60: #{tpu_custom_call.1} parent=1 // pred_region
      %s118 = ssub.s32 4096, 4096
      %119 = vsyncadd [#allocation12], %s118
      %s120 = sshll.u32 [#allocation13], 4
      %s121 = int_to_ptr.vmem [resolvable:$true] %s120
      %126 = dma.hbm_to_vmem [thread:$0]  %s14, 4096, %s121, [#allocation12], 128, 128, 8
    $region61: #{tpu_custom_call.1} parent=1 // pred_fallthru
      _
    // Predicated region
    $region62: #{tpu_custom_call.1} parent=1 // pred_check
      _
    $region63: #{tpu_custom_call.1} parent=1 // pred_check_branch
      %128 = sbr.rel (0) target = $region65
    $region64: #{tpu_custom_call.1} parent=1 // pred_region
      _
    $region65: #{tpu_custom_call.1} parent=1 // pred_fallthru
      _
    // Predicated region
    $region66: #{tpu_custom_call.1} parent=1 // pred_check
      _
    $region67: #{tpu_custom_call.1} parent=1 // pred_check_branch
      %130 = sbr.rel (0) target = $region69
    $region68: #{tpu_custom_call.1} parent=1 // pred_region
      %s132 = ssub.s32 4096, 4096
      %133 = vsyncadd [#allocation15], %s132
      %s134 = sshll.u32 [#allocation14], 4
      %s135 = int_to_ptr.vmem [resolvable:$true] %s134
      %140 = dma.hbm_to_vmem [thread:$0]  %s16, 4096, %s135, [#allocation15], 128, 128, 8
    $region69: #{tpu_custom_call.1} parent=1 // pred_fallthru
      _
    // Predicated region
    $region70: #{tpu_custom_call.1} parent=1 // pred_check
      _
    $region71: #{tpu_custom_call.1} parent=1 // pred_check_branch
      %142 = sbr.rel (0) target = $region73
    $region72: #{tpu_custom_call.1} parent=1 // pred_region
      _
    $region73: #{tpu_custom_call.1} parent=1 // pred_fallthru
      _
    // Predicated region
    $region74: #{tpu_custom_call.1} parent=1 // pred_check
      _
    $region75: #{tpu_custom_call.1} parent=1 // pred_check_branch
      %144 = sbr.rel (0) target = $region77
    $region76: #{tpu_custom_call.1} parent=1 // pred_region
      %s146 = ssub.s32 2048, 2048
      %147 = vsyncadd [#allocation15], %s146
      %s148 = sshll.u32 [#allocation16], 4
      %s149 = int_to_ptr.vmem [resolvable:$true] %s148
      %154 = dma.hbm_to_vmem [thread:$0]  %s18, 2048, %s149, [#allocation15], 64, 64, 4
    $region77: #{tpu_custom_call.1} parent=1 // pred_fallthru
      _
    // Predicated region
    $region78: #{tpu_custom_call.1} parent=1 // pred_check
      _
    $region79: #{tpu_custom_call.1} parent=1 // pred_check_branch
      %156 = sbr.rel (0) target = $region81
    $region80: #{tpu_custom_call.1} parent=1 // pred_region
      _
    $region81: #{tpu_custom_call.1} parent=1 // pred_fallthru
      _
    // Predicated region
    $region82: #{tpu_custom_call.1} parent=1 // pred_check
      _
    $region83: #{tpu_custom_call.1} parent=1 // pred_check_branch
      %158 = sbr.rel (0) target = $region85
    $region84: #{tpu_custom_call.1} parent=1 // pred_region
      %159 = dma.done [#allocation3], 32
    $region85: #{tpu_custom_call.1} parent=1 // pred_fallthru
      _
    // Predicated region
    $region86: #{tpu_custom_call.1} parent=1 // pred_check
      _
    $region87: #{tpu_custom_call.1} parent=1 // pred_check_branch
      %161 = sbr.rel (0) target = $region89
    $region88: #{tpu_custom_call.1} parent=1 // pred_region
      %162 = dma.done [#allocation6], 4096
    $region89: #{tpu_custom_call.1} parent=1 // pred_fallthru
      _
    // Predicated region
    $region90: #{tpu_custom_call.1} parent=1 // pred_check
      _
    $region91: #{tpu_custom_call.1} parent=1 // pred_check_branch
      %164 = sbr.rel (0) target = $region93
    $region92: #{tpu_custom_call.1} parent=1 // pred_region
      %165 = dma.done [#allocation6], 32
    $region93: #{tpu_custom_call.1} parent=1 // pred_fallthru
      _
    // Predicated region
    $region94: #{tpu_custom_call.1} parent=1 // pred_check
      _
    $region95: #{tpu_custom_call.1} parent=1 // pred_check_branch
      %167 = sbr.rel (0) target = $region97
    $region96: #{tpu_custom_call.1} parent=1 // pred_region
      %168 = dma.done [#allocation9], 4096
    $region97: #{tpu_custom_call.1} parent=1 // pred_fallthru
      _
    // Predicated region
    $region98: #{tpu_custom_call.1} parent=1 // pred_check
      _
    $region99: #{tpu_custom_call.1} parent=1 // pred_check_branch
      %170 = sbr.rel (0) target = $region101
    $region100: #{tpu_custom_call.1} parent=1 // pred_region
      %171 = dma.done [#allocation9], 4096
    $region101: #{tpu_custom_call.1} parent=1 // pred_fallthru
      _
    // Predicated region
    $region102: #{tpu_custom_call.1} parent=1 // pred_check
      _
    $region103: #{tpu_custom_call.1} parent=1 // pred_check_branch
      %173 = sbr.rel (0) target = $region105
    $region104: #{tpu_custom_call.1} parent=1 // pred_region
      %174 = dma.done [#allocation12], 4096
    $region105: #{tpu_custom_call.1} parent=1 // pred_fallthru
      _
    // Predicated region
    $region106: #{tpu_custom_call.1} parent=1 // pred_check
      _
    $region107: #{tpu_custom_call.1} parent=1 // pred_check_branch
      %176 = sbr.rel (0) target = $region109
    $region108: #{tpu_custom_call.1} parent=1 // pred_region
      %177 = dma.done [#allocation12], 4096
    $region109: #{tpu_custom_call.1} parent=1 // pred_fallthru
      _
    // Predicated region
    $region110: #{tpu_custom_call.1} parent=1 // pred_check
      _
    $region111: #{tpu_custom_call.1} parent=1 // pred_check_branch
      %179 = sbr.rel (0) target = $region113
    $region112: #{tpu_custom_call.1} parent=1 // pred_region
      %180 = dma.done [#allocation15], 4096
    $region113: #{tpu_custom_call.1} parent=1 // pred_fallthru
      _
    // Predicated region
    $region114: #{tpu_custom_call.1} parent=1 // pred_check
      _
    $region115: #{tpu_custom_call.1} parent=1 // pred_check_branch
      %182 = sbr.rel (0) target = $region117
    $region116: #{tpu_custom_call.1} parent=1 // pred_region
      %183 = dma.done [#allocation15], 2048
    $region117: #{tpu_custom_call.1} parent=1 // pred_fallthru
      _
    %v185 = vld [vmem:[%s0] sm:$0xff]
    %v186 = vld [vmem:[%s0 + $0x8] sm:$0xff]
    %v187 = vld [vmem:[%s0 + $0x10] sm:$0xff]
    %v188 = vld [vmem:[%s0 + $0x18] sm:$0xff]
    %v189 = vld [vmem:[%s0 + $0x20] sm:$0xff]
    %v190 = vld [vmem:[%s0 + $0x28] sm:$0xff]
    %v191 = vld [vmem:[%s0 + $0x30] sm:$0xff]
    %v192 = vld [vmem:[%s0 + $0x38] sm:$0xff]
    %v193 = vld [vmem:[%s0 + $0x40] sm:$0xff]
    %v194 = vld [vmem:[%s0 + $0x48] sm:$0xff]
    %v195 = vld [vmem:[%s0 + $0x50] sm:$0xff]
    %v196 = vld [vmem:[%s0 + $0x58] sm:$0xff]
    %v197 = vld [vmem:[%s0 + $0x60] sm:$0xff]
    %v198 = vld [vmem:[%s0 + $0x68] sm:$0xff]
    %v199 = vld [vmem:[%s0 + $0x70] sm:$0xff]
    %v200 = vld [vmem:[%s0 + $0x78] sm:$0xff]
    %v201 = vld [vmem:[%s0 + $0x80] sm:$0xff]
    %v202 = vld [vmem:[%s0 + $0x88] sm:$0xff]
    %v203 = vld [vmem:[%s0 + $0x90] sm:$0xff]
    %v204 = vld [vmem:[%s0 + $0x98] sm:$0xff]
    %v205 = vld [vmem:[%s0 + $0xa0] sm:$0xff]
    %v206 = vld [vmem:[%s0 + $0xa8] sm:$0xff]
    %v207 = vld [vmem:[%s0 + $0xb0] sm:$0xff]
    %v208 = vld [vmem:[%s0 + $0xb8] sm:$0xff]
    %v209 = vld [vmem:[%s0 + $0xc0] sm:$0xff]
    %v210 = vld [vmem:[%s0 + $0xc8] sm:$0xff]
    %v211 = vld [vmem:[%s0 + $0xd0] sm:$0xff]
    %v212 = vld [vmem:[%s0 + $0xd8] sm:$0xff]
    %v213 = vld [vmem:[%s0 + $0xe0] sm:$0xff]
    %v214 = vld [vmem:[%s0 + $0xe8] sm:$0xff]
    %v215 = vld [vmem:[%s0 + $0xf0] sm:$0xff]
    %v216 = vld [vmem:[%s0 + $0xf8] sm:$0xff]
    %v217 = vld [vmem:[%s1] sm:$0x77]
    %v218 = vld [vmem:[%s2] sm:$0x3]
    %220 = vset.pattern.permute.xlu0 0
    %221 = vperm.xlu0 %220, %v185
    %v222 = vpop.permute.xlu0 %221
    %225 = vset.pattern.permute.xlu0 0
    %226 = vperm.xlu0 %225, %v186
    %v227 = vpop.permute.xlu0 %226
    %230 = vset.pattern.permute.xlu0 0
    %231 = vperm.xlu0 %230, %v187
    %v232 = vpop.permute.xlu0 %231
    %235 = vset.pattern.permute.xlu0 0
    %236 = vperm.xlu0 %235, %v188
    %v237 = vpop.permute.xlu0 %236
    %240 = vset.pattern.permute.xlu0 0
    %241 = vperm.xlu0 %240, %v189
    %v242 = vpop.permute.xlu0 %241
    %245 = vset.pattern.permute.xlu0 0
    %246 = vperm.xlu0 %245, %v190
    %v247 = vpop.permute.xlu0 %246
    %250 = vset.pattern.permute.xlu0 0
    %251 = vperm.xlu0 %250, %v191
    %v252 = vpop.permute.xlu0 %251
    %255 = vset.pattern.permute.xlu0 0
    %256 = vperm.xlu0 %255, %v192
    %v257 = vpop.permute.xlu0 %256
    %260 = vset.pattern.permute.xlu0 0
    %261 = vperm.xlu0 %260, %v193
    %v262 = vpop.permute.xlu0 %261
    %265 = vset.pattern.permute.xlu0 0
    %266 = vperm.xlu0 %265, %v194
    %v267 = vpop.permute.xlu0 %266
    %270 = vset.pattern.permute.xlu0 0
    %271 = vperm.xlu0 %270, %v195
    %v272 = vpop.permute.xlu0 %271
    %275 = vset.pattern.permute.xlu0 0
    %276 = vperm.xlu0 %275, %v196
    %v277 = vpop.permute.xlu0 %276
    %280 = vset.pattern.permute.xlu0 0
    %281 = vperm.xlu0 %280, %v197
    %v282 = vpop.permute.xlu0 %281
    %285 = vset.pattern.permute.xlu0 0
    %286 = vperm.xlu0 %285, %v198
    %v287 = vpop.permute.xlu0 %286
    %290 = vset.pattern.permute.xlu0 0
    %291 = vperm.xlu0 %290, %v199
    %v292 = vpop.permute.xlu0 %291
    %295 = vset.pattern.permute.xlu0 0
    %296 = vperm.xlu0 %295, %v200
    %v297 = vpop.permute.xlu0 %296
    %300 = vset.pattern.permute.xlu0 0
    %301 = vperm.xlu0 %300, %v201
    %v302 = vpop.permute.xlu0 %301
    %305 = vset.pattern.permute.xlu0 0
    %306 = vperm.xlu0 %305, %v202
    %v307 = vpop.permute.xlu0 %306
    %310 = vset.pattern.permute.xlu0 0
    %311 = vperm.xlu0 %310, %v203
    %v312 = vpop.permute.xlu0 %311
    %315 = vset.pattern.permute.xlu0 0
    %316 = vperm.xlu0 %315, %v204
    %v317 = vpop.permute.xlu0 %316
    %320 = vset.pattern.permute.xlu0 0
    %321 = vperm.xlu0 %320, %v205
    %v322 = vpop.permute.xlu0 %321
    %325 = vset.pattern.permute.xlu0 0
    %326 = vperm.xlu0 %325, %v206
    %v327 = vpop.permute.xlu0 %326
    %330 = vset.pattern.permute.xlu0 0
    %331 = vperm.xlu0 %330, %v207
    %v332 = vpop.permute.xlu0 %331
    %335 = vset.pattern.permute.xlu0 0
    %336 = vperm.xlu0 %335, %v208
    %v337 = vpop.permute.xlu0 %336
    %340 = vset.pattern.permute.xlu0 0
    %341 = vperm.xlu0 %340, %v209
    %v342 = vpop.permute.xlu0 %341
    %345 = vset.pattern.permute.xlu0 0
    %346 = vperm.xlu0 %345, %v210
    %v347 = vpop.permute.xlu0 %346
    %350 = vset.pattern.permute.xlu0 0
    %351 = vperm.xlu0 %350, %v211
    %v352 = vpop.permute.xlu0 %351
    %355 = vset.pattern.permute.xlu0 0
    %356 = vperm.xlu0 %355, %v212
    %v357 = vpop.permute.xlu0 %356
    %360 = vset.pattern.permute.xlu0 0
    %361 = vperm.xlu0 %360, %v213
    %v362 = vpop.permute.xlu0 %361
    %365 = vset.pattern.permute.xlu0 0
    %366 = vperm.xlu0 %365, %v214
    %v367 = vpop.permute.xlu0 %366
    %370 = vset.pattern.permute.xlu0 0
    %371 = vperm.xlu0 %370, %v215
    %v372 = vpop.permute.xlu0 %371
    %375 = vset.pattern.permute.xlu0 0
    %376 = vperm.xlu0 %375, %v216
    %v377 = vpop.permute.xlu0 %376
    %v380 = vlaneseq
    %v381 = vshrl.u32 %v380, 7
    %v382 = vsub.s32 0, %v381
    %v383 = vrot.slane %v217, %v382
    %v384 = vlaneseq
    %v385 = vshrl.u32 %v384, 7
    %v386 = vsub.s32 4, %v385
    %v387 = vrot.slane %v217, %v386
    %v390 = vlaneseq
    %v391 = vshrl.u32 %v390, 7
    %v392 = vsub.s32 0, %v391
    %v393 = vrot.slane %v383, %v392
    %v394 = vlaneseq
    %v395 = vshrl.u32 %v394, 7
    %v396 = vsub.s32 0, %v395
    %v397 = vrot.slane %v387, %v396
    %v398 = vmul.f32 %v222, %v393
    %v399 = vmul.f32 %v222, %v397
    %v400 = vmul.f32 %v227, %v393
    %v401 = vmul.f32 %v227, %v397
    %v402 = vmul.f32 %v232, %v393
    %v403 = vmul.f32 %v232, %v397
    %v404 = vmul.f32 %v237, %v393
    %v405 = vmul.f32 %v237, %v397
    %v406 = vmul.f32 %v242, %v393
    %v407 = vmul.f32 %v242, %v397
    %v408 = vmul.f32 %v247, %v393
    %v409 = vmul.f32 %v247, %v397
    %v410 = vmul.f32 %v252, %v393
    %v411 = vmul.f32 %v252, %v397
    %v412 = vmul.f32 %v257, %v393
    %v413 = vmul.f32 %v257, %v397
    %v414 = vmul.f32 %v262, %v393
    %v415 = vmul.f32 %v262, %v397
    %v416 = vmul.f32 %v267, %v393
    %v417 = vmul.f32 %v267, %v397
    %v418 = vmul.f32 %v272, %v393
    %v419 = vmul.f32 %v272, %v397
    %v420 = vmul.f32 %v277, %v393
    %v421 = vmul.f32 %v277, %v397
    %v422 = vmul.f32 %v282, %v393
    %v423 = vmul.f32 %v282, %v397
    %v424 = vmul.f32 %v287, %v393
    %v425 = vmul.f32 %v287, %v397
    %v426 = vmul.f32 %v292, %v393
    %v427 = vmul.f32 %v292, %v397
    %v428 = vmul.f32 %v297, %v393
    %v429 = vmul.f32 %v297, %v397
    %v430 = vmul.f32 %v302, %v393
    %v431 = vmul.f32 %v302, %v397
    %v432 = vmul.f32 %v307, %v393
    %v433 = vmul.f32 %v307, %v397
    %v434 = vmul.f32 %v312, %v393
    %v435 = vmul.f32 %v312, %v397
    %v436 = vmul.f32 %v317, %v393
    %v437 = vmul.f32 %v317, %v397
    %v438 = vmul.f32 %v322, %v393
    %v439 = vmul.f32 %v322, %v397
    %v440 = vmul.f32 %v327, %v393
    %v441 = vmul.f32 %v327, %v397
    %v442 = vmul.f32 %v332, %v393
    %v443 = vmul.f32 %v332, %v397
    %v444 = vmul.f32 %v337, %v393
    %v445 = vmul.f32 %v337, %v397
    %v446 = vmul.f32 %v342, %v393
    %v447 = vmul.f32 %v342, %v397
    %v448 = vmul.f32 %v347, %v393
    %v449 = vmul.f32 %v347, %v397
    %v450 = vmul.f32 %v352, %v393
    %v451 = vmul.f32 %v352, %v397
    %v452 = vmul.f32 %v357, %v393
    %v453 = vmul.f32 %v357, %v397
    %v454 = vmul.f32 %v362, %v393
    %v455 = vmul.f32 %v362, %v397
    %v456 = vmul.f32 %v367, %v393
    %v457 = vmul.f32 %v367, %v397
    %v458 = vmul.f32 %v372, %v393
    %v459 = vmul.f32 %v372, %v397
    %v460 = vmul.f32 %v377, %v393
    %v461 = vmul.f32 %v377, %v397
    %462 = vset.pattern.permute.xlu0 1
    %463 = vperm.xlu0 %462, %v185
    %v464 = vpop.permute.xlu0 %463
    %466 = vset.pattern.permute.xlu0 1
    %467 = vperm.xlu0 %466, %v186
    %v468 = vpop.permute.xlu0 %467
    %470 = vset.pattern.permute.xlu0 1
    %471 = vperm.xlu0 %470, %v187
    %v472 = vpop.permute.xlu0 %471
    %474 = vset.pattern.permute.xlu0 1
    %475 = vperm.xlu0 %474, %v188
    %v476 = vpop.permute.xlu0 %475
    %478 = vset.pattern.permute.xlu0 1
    %479 = vperm.xlu0 %478, %v189
    %v480 = vpop.permute.xlu0 %479
    %482 = vset.pattern.permute.xlu0 1
    %483 = vperm.xlu0 %482, %v190
    %v484 = vpop.permute.xlu0 %483
    %486 = vset.pattern.permute.xlu0 1
    %487 = vperm.xlu0 %486, %v191
    %v488 = vpop.permute.xlu0 %487
    %490 = vset.pattern.permute.xlu0 1
    %491 = vperm.xlu0 %490, %v192
    %v492 = vpop.permute.xlu0 %491
    %494 = vset.pattern.permute.xlu0 1
    %495 = vperm.xlu0 %494, %v193
    %v496 = vpop.permute.xlu0 %495
    %498 = vset.pattern.permute.xlu0 1
    %499 = vperm.xlu0 %498, %v194
    %v500 = vpop.permute.xlu0 %499
    %502 = vset.pattern.permute.xlu0 1
    %503 = vperm.xlu0 %502, %v195
    %v504 = vpop.permute.xlu0 %503
    %506 = vset.pattern.permute.xlu0 1
    %507 = vperm.xlu0 %506, %v196
    %v508 = vpop.permute.xlu0 %507
    %510 = vset.pattern.permute.xlu0 1
    %511 = vperm.xlu0 %510, %v197
    %v512 = vpop.permute.xlu0 %511
    %514 = vset.pattern.permute.xlu0 1
    %515 = vperm.xlu0 %514, %v198
    %v516 = vpop.permute.xlu0 %515
    %518 = vset.pattern.permute.xlu0 1
    %519 = vperm.xlu0 %518, %v199
    %v520 = vpop.permute.xlu0 %519
    %522 = vset.pattern.permute.xlu0 1
    %523 = vperm.xlu0 %522, %v200
    %v524 = vpop.permute.xlu0 %523
    %526 = vset.pattern.permute.xlu0 1
    %527 = vperm.xlu0 %526, %v201
    %v528 = vpop.permute.xlu0 %527
    %530 = vset.pattern.permute.xlu0 1
    %531 = vperm.xlu0 %530, %v202
    %v532 = vpop.permute.xlu0 %531
    %534 = vset.pattern.permute.xlu0 1
    %535 = vperm.xlu0 %534, %v203
    %v536 = vpop.permute.xlu0 %535
    %538 = vset.pattern.permute.xlu0 1
    %539 = vperm.xlu0 %538, %v204
    %v540 = vpop.permute.xlu0 %539
    %542 = vset.pattern.permute.xlu0 1
    %543 = vperm.xlu0 %542, %v205
    %v544 = vpop.permute.xlu0 %543
    %546 = vset.pattern.permute.xlu0 1
    %547 = vperm.xlu0 %546, %v206
    %v548 = vpop.permute.xlu0 %547
    %550 = vset.pattern.permute.xlu0 1
    %551 = vperm.xlu0 %550, %v207
    %v552 = vpop.permute.xlu0 %551
    %554 = vset.pattern.permute.xlu0 1
    %555 = vperm.xlu0 %554, %v208
    %v556 = vpop.permute.xlu0 %555
    %558 = vset.pattern.permute.xlu0 1
    %559 = vperm.xlu0 %558, %v209
    %v560 = vpop.permute.xlu0 %559
    %562 = vset.pattern.permute.xlu0 1
    %563 = vperm.xlu0 %562, %v210
    %v564 = vpop.permute.xlu0 %563
    %566 = vset.pattern.permute.xlu0 1
    %567 = vperm.xlu0 %566, %v211
    %v568 = vpop.permute.xlu0 %567
    %570 = vset.pattern.permute.xlu0 1
    %571 = vperm.xlu0 %570, %v212
    %v572 = vpop.permute.xlu0 %571
    %574 = vset.pattern.permute.xlu0 1
    %575 = vperm.xlu0 %574, %v213
    %v576 = vpop.permute.xlu0 %575
    %578 = vset.pattern.permute.xlu0 1
    %579 = vperm.xlu0 %578, %v214
    %v580 = vpop.permute.xlu0 %579
    %582 = vset.pattern.permute.xlu0 1
    %583 = vperm.xlu0 %582, %v215
    %v584 = vpop.permute.xlu0 %583
    %586 = vset.pattern.permute.xlu0 1
    %587 = vperm.xlu0 %586, %v216
    %v588 = vpop.permute.xlu0 %587
    %v590 = vlaneseq
    %v591 = vshrl.u32 %v590, 7
    %v592 = vsub.s32 1, %v591
    %v593 = vrot.slane %v217, %v592
    %v594 = vlaneseq
    %v595 = vshrl.u32 %v594, 7
    %v596 = vsub.s32 5, %v595
    %v597 = vrot.slane %v217, %v596
    %v600 = vlaneseq
    %v601 = vshrl.u32 %v600, 7
    %v602 = vsub.s32 1, %v601
    %v603 = vrot.slane %v593, %v602
    %v604 = vlaneseq
    %v605 = vshrl.u32 %v604, 7
    %v606 = vsub.s32 1, %v605
    %v607 = vrot.slane %v597, %v606
    %v608 = vmul.f32 %v464, %v603
    %v609 = vmul.f32 %v464, %v607
    %v610 = vmul.f32 %v468, %v603
    %v611 = vmul.f32 %v468, %v607
    %v612 = vmul.f32 %v472, %v603
    %v613 = vmul.f32 %v472, %v607
    %v614 = vmul.f32 %v476, %v603
    %v615 = vmul.f32 %v476, %v607
    %v616 = vmul.f32 %v480, %v603
    %v617 = vmul.f32 %v480, %v607
    %v618 = vmul.f32 %v484, %v603
    %v619 = vmul.f32 %v484, %v607
    %v620 = vmul.f32 %v488, %v603
    %v621 = vmul.f32 %v488, %v607
    %v622 = vmul.f32 %v492, %v603
    %v623 = vmul.f32 %v492, %v607
    %v624 = vmul.f32 %v496, %v603
    %v625 = vmul.f32 %v496, %v607
    %v626 = vmul.f32 %v500, %v603
    %v627 = vmul.f32 %v500, %v607
    %v628 = vmul.f32 %v504, %v603
    %v629 = vmul.f32 %v504, %v607
    %v630 = vmul.f32 %v508, %v603
    %v631 = vmul.f32 %v508, %v607
    %v632 = vmul.f32 %v512, %v603
    %v633 = vmul.f32 %v512, %v607
    %v634 = vmul.f32 %v516, %v603
    %v635 = vmul.f32 %v516, %v607
    %v636 = vmul.f32 %v520, %v603
    %v637 = vmul.f32 %v520, %v607
    %v638 = vmul.f32 %v524, %v603
    %v639 = vmul.f32 %v524, %v607
    %v640 = vmul.f32 %v528, %v603
    %v641 = vmul.f32 %v528, %v607
    %v642 = vmul.f32 %v532, %v603
    %v643 = vmul.f32 %v532, %v607
    %v644 = vmul.f32 %v536, %v603
    %v645 = vmul.f32 %v536, %v607
    %v646 = vmul.f32 %v540, %v603
    %v647 = vmul.f32 %v540, %v607
    %v648 = vmul.f32 %v544, %v603
    %v649 = vmul.f32 %v544, %v607
    %v650 = vmul.f32 %v548, %v603
    %v651 = vmul.f32 %v548, %v607
    %v652 = vmul.f32 %v552, %v603
    %v653 = vmul.f32 %v552, %v607
    %v654 = vmul.f32 %v556, %v603
    %v655 = vmul.f32 %v556, %v607
    %v656 = vmul.f32 %v560, %v603
    %v657 = vmul.f32 %v560, %v607
    %v658 = vmul.f32 %v564, %v603
    %v659 = vmul.f32 %v564, %v607
    %v660 = vmul.f32 %v568, %v603
    %v661 = vmul.f32 %v568, %v607
    %v662 = vmul.f32 %v572, %v603
    %v663 = vmul.f32 %v572, %v607
    %v664 = vmul.f32 %v576, %v603
    %v665 = vmul.f32 %v576, %v607
    %v666 = vmul.f32 %v580, %v603
    %v667 = vmul.f32 %v580, %v607
    %v668 = vmul.f32 %v584, %v603
    %v669 = vmul.f32 %v584, %v607
    %v670 = vmul.f32 %v588, %v603
    %v671 = vmul.f32 %v588, %v607
    %v672 = vadd.f32 %v398, %v608
    %v673 = vadd.f32 %v399, %v609
    %v674 = vadd.f32 %v400, %v610
    %v675 = vadd.f32 %v401, %v611
    %v676 = vadd.f32 %v402, %v612
    %v677 = vadd.f32 %v403, %v613
    %v678 = vadd.f32 %v404, %v614
    %v679 = vadd.f32 %v405, %v615
    %v680 = vadd.f32 %v406, %v616
    %v681 = vadd.f32 %v407, %v617
    %v682 = vadd.f32 %v408, %v618
    %v683 = vadd.f32 %v409, %v619
    %v684 = vadd.f32 %v410, %v620
    %v685 = vadd.f32 %v411, %v621
    %v686 = vadd.f32 %v412, %v622
    %v687 = vadd.f32 %v413, %v623
    %v688 = vadd.f32 %v414, %v624
    %v689 = vadd.f32 %v415, %v625
    %v690 = vadd.f32 %v416, %v626
    %v691 = vadd.f32 %v417, %v627
    %v692 = vadd.f32 %v418, %v628
    %v693 = vadd.f32 %v419, %v629
    %v694 = vadd.f32 %v420, %v630
    %v695 = vadd.f32 %v421, %v631
    %v696 = vadd.f32 %v422, %v632
    %v697 = vadd.f32 %v423, %v633
    %v698 = vadd.f32 %v424, %v634
    %v699 = vadd.f32 %v425, %v635
    %v700 = vadd.f32 %v426, %v636
    %v701 = vadd.f32 %v427, %v637
    %v702 = vadd.f32 %v428, %v638
    %v703 = vadd.f32 %v429, %v639
    %v704 = vadd.f32 %v430, %v640
    %v705 = vadd.f32 %v431, %v641
    %v706 = vadd.f32 %v432, %v642
    %v707 = vadd.f32 %v433, %v643
    %v708 = vadd.f32 %v434, %v644
    %v709 = vadd.f32 %v435, %v645
    %v710 = vadd.f32 %v436, %v646
    %v711 = vadd.f32 %v437, %v647
    %v712 = vadd.f32 %v438, %v648
    %v713 = vadd.f32 %v439, %v649
    %v714 = vadd.f32 %v440, %v650
    %v715 = vadd.f32 %v441, %v651
    %v716 = vadd.f32 %v442, %v652
    %v717 = vadd.f32 %v443, %v653
    %v718 = vadd.f32 %v444, %v654
    %v719 = vadd.f32 %v445, %v655
    %v720 = vadd.f32 %v446, %v656
    %v721 = vadd.f32 %v447, %v657
    %v722 = vadd.f32 %v448, %v658
    %v723 = vadd.f32 %v449, %v659
    %v724 = vadd.f32 %v450, %v660
    %v725 = vadd.f32 %v451, %v661
    %v726 = vadd.f32 %v452, %v662
    %v727 = vadd.f32 %v453, %v663
    %v728 = vadd.f32 %v454, %v664
    %v729 = vadd.f32 %v455, %v665
    %v730 = vadd.f32 %v456, %v666
    %v731 = vadd.f32 %v457, %v667
    %v732 = vadd.f32 %v458, %v668
    %v733 = vadd.f32 %v459, %v669
    %v734 = vadd.f32 %v460, %v670
    %v735 = vadd.f32 %v461, %v671
    %736 = vset.pattern.permute.xlu0 2
    %737 = vperm.xlu0 %736, %v185
    %v738 = vpop.permute.xlu0 %737
    %740 = vset.pattern.permute.xlu0 2
    %741 = vperm.xlu0 %740, %v186
    %v742 = vpop.permute.xlu0 %741
    %744 = vset.pattern.permute.xlu0 2
    %745 = vperm.xlu0 %744, %v187
    %v746 = vpop.permute.xlu0 %745
    %748 = vset.pattern.permute.xlu0 2
    %749 = vperm.xlu0 %748, %v188
    %v750 = vpop.permute.xlu0 %749
    %752 = vset.pattern.permute.xlu0 2
    %753 = vperm.xlu0 %752, %v189
    %v754 = vpop.permute.xlu0 %753
    %756 = vset.pattern.permute.xlu0 2
    %757 = vperm.xlu0 %756, %v190
    %v758 = vpop.permute.xlu0 %757
    %760 = vset.pattern.permute.xlu0 2
    %761 = vperm.xlu0 %760, %v191
    %v762 = vpop.permute.xlu0 %761
    %764 = vset.pattern.permute.xlu0 2
    %765 = vperm.xlu0 %764, %v192
    %v766 = vpop.permute.xlu0 %765
    %768 = vset.pattern.permute.xlu0 2
    %769 = vperm.xlu0 %768, %v193
    %v770 = vpop.permute.xlu0 %769
    %772 = vset.pattern.permute.xlu0 2
    %773 = vperm.xlu0 %772, %v194
    %v774 = vpop.permute.xlu0 %773
    %776 = vset.pattern.permute.xlu0 2
    %777 = vperm.xlu0 %776, %v195
    %v778 = vpop.permute.xlu0 %777
    %780 = vset.pattern.permute.xlu0 2
    %781 = vperm.xlu0 %780, %v196
    %v782 = vpop.permute.xlu0 %781
    %784 = vset.pattern.permute.xlu0 2
    %785 = vperm.xlu0 %784, %v197
    %v786 = vpop.permute.xlu0 %785
    %788 = vset.pattern.permute.xlu0 2
    %789 = vperm.xlu0 %788, %v198
    %v790 = vpop.permute.xlu0 %789
    %792 = vset.pattern.permute.xlu0 2
    %793 = vperm.xlu0 %792, %v199
    %v794 = vpop.permute.xlu0 %793
    %796 = vset.pattern.permute.xlu0 2
    %797 = vperm.xlu0 %796, %v200
    %v798 = vpop.permute.xlu0 %797
    %800 = vset.pattern.permute.xlu0 2
    %801 = vperm.xlu0 %800, %v201
    %v802 = vpop.permute.xlu0 %801
    %804 = vset.pattern.permute.xlu0 2
    %805 = vperm.xlu0 %804, %v202
    %v806 = vpop.permute.xlu0 %805
    %808 = vset.pattern.permute.xlu0 2
    %809 = vperm.xlu0 %808, %v203
    %v810 = vpop.permute.xlu0 %809
    %812 = vset.pattern.permute.xlu0 2
    %813 = vperm.xlu0 %812, %v204
    %v814 = vpop.permute.xlu0 %813
    %816 = vset.pattern.permute.xlu0 2
    %817 = vperm.xlu0 %816, %v205
    %v818 = vpop.permute.xlu0 %817
    %820 = vset.pattern.permute.xlu0 2
    %821 = vperm.xlu0 %820, %v206
    %v822 = vpop.permute.xlu0 %821
    %824 = vset.pattern.permute.xlu0 2
    %825 = vperm.xlu0 %824, %v207
    %v826 = vpop.permute.xlu0 %825
    %828 = vset.pattern.permute.xlu0 2
    %829 = vperm.xlu0 %828, %v208
    %v830 = vpop.permute.xlu0 %829
    %832 = vset.pattern.permute.xlu0 2
    %833 = vperm.xlu0 %832, %v209
    %v834 = vpop.permute.xlu0 %833
    %836 = vset.pattern.permute.xlu0 2
    %837 = vperm.xlu0 %836, %v210
    %v838 = vpop.permute.xlu0 %837
    %840 = vset.pattern.permute.xlu0 2
    %841 = vperm.xlu0 %840, %v211
    %v842 = vpop.permute.xlu0 %841
    %844 = vset.pattern.permute.xlu0 2
    %845 = vperm.xlu0 %844, %v212
    %v846 = vpop.permute.xlu0 %845
    %848 = vset.pattern.permute.xlu0 2
    %849 = vperm.xlu0 %848, %v213
    %v850 = vpop.permute.xlu0 %849
    %852 = vset.pattern.permute.xlu0 2
    %853 = vperm.xlu0 %852, %v214
    %v854 = vpop.permute.xlu0 %853
    %856 = vset.pattern.permute.xlu0 2
    %857 = vperm.xlu0 %856, %v215
    %v858 = vpop.permute.xlu0 %857
    %860 = vset.pattern.permute.xlu0 2
    %861 = vperm.xlu0 %860, %v216
    %v862 = vpop.permute.xlu0 %861
    %v864 = vlaneseq
    %v865 = vshrl.u32 %v864, 7
    %v866 = vsub.s32 2, %v865
    %v867 = vrot.slane %v217, %v866
    %v868 = vlaneseq
    %v869 = vshrl.u32 %v868, 7
    %v870 = vsub.s32 6, %v869
    %v871 = vrot.slane %v217, %v870
    %v874 = vlaneseq
    %v875 = vshrl.u32 %v874, 7
    %v876 = vsub.s32 2, %v875
    %v877 = vrot.slane %v867, %v876
    %v878 = vlaneseq
    %v879 = vshrl.u32 %v878, 7
    %v880 = vsub.s32 2, %v879
    %v881 = vrot.slane %v871, %v880
    %v882 = vmul.f32 %v738, %v877
    %v883 = vmul.f32 %v738, %v881
    %v884 = vmul.f32 %v742, %v877
    %v885 = vmul.f32 %v742, %v881
    %v886 = vmul.f32 %v746, %v877
    %v887 = vmul.f32 %v746, %v881
    %v888 = vmul.f32 %v750, %v877
    %v889 = vmul.f32 %v750, %v881
    %v890 = vmul.f32 %v754, %v877
    %v891 = vmul.f32 %v754, %v881
    %v892 = vmul.f32 %v758, %v877
    %v893 = vmul.f32 %v758, %v881
    %v894 = vmul.f32 %v762, %v877
    %v895 = vmul.f32 %v762, %v881
    %v896 = vmul.f32 %v766, %v877
    %v897 = vmul.f32 %v766, %v881
    %v898 = vmul.f32 %v770, %v877
    %v899 = vmul.f32 %v770, %v881
    %v900 = vmul.f32 %v774, %v877
    %v901 = vmul.f32 %v774, %v881
    %v902 = vmul.f32 %v778, %v877
    %v903 = vmul.f32 %v778, %v881
    %v904 = vmul.f32 %v782, %v877
    %v905 = vmul.f32 %v782, %v881
    %v906 = vmul.f32 %v786, %v877
    %v907 = vmul.f32 %v786, %v881
    %v908 = vmul.f32 %v790, %v877
    %v909 = vmul.f32 %v790, %v881
    %v910 = vmul.f32 %v794, %v877
    %v911 = vmul.f32 %v794, %v881
    %v912 = vmul.f32 %v798, %v877
    %v913 = vmul.f32 %v798, %v881
    %v914 = vmul.f32 %v802, %v877
    %v915 = vmul.f32 %v802, %v881
    %v916 = vmul.f32 %v806, %v877
    %v917 = vmul.f32 %v806, %v881
    %v918 = vmul.f32 %v810, %v877
    %v919 = vmul.f32 %v810, %v881
    %v920 = vmul.f32 %v814, %v877
    %v921 = vmul.f32 %v814, %v881
    %v922 = vmul.f32 %v818, %v877
    %v923 = vmul.f32 %v818, %v881
    %v924 = vmul.f32 %v822, %v877
    %v925 = vmul.f32 %v822, %v881
    %v926 = vmul.f32 %v826, %v877
    %v927 = vmul.f32 %v826, %v881
    %v928 = vmul.f32 %v830, %v877
    %v929 = vmul.f32 %v830, %v881
    %v930 = vmul.f32 %v834, %v877
    %v931 = vmul.f32 %v834, %v881
    %v932 = vmul.f32 %v838, %v877
    %v933 = vmul.f32 %v838, %v881
    %v934 = vmul.f32 %v842, %v877
    %v935 = vmul.f32 %v842, %v881
    %v936 = vmul.f32 %v846, %v877
    %v937 = vmul.f32 %v846, %v881
    %v938 = vmul.f32 %v850, %v877
    %v939 = vmul.f32 %v850, %v881
    %v940 = vmul.f32 %v854, %v877
    %v941 = vmul.f32 %v854, %v881
    %v942 = vmul.f32 %v858, %v877
    %v943 = vmul.f32 %v858, %v881
    %v944 = vmul.f32 %v862, %v877
    %v945 = vmul.f32 %v862, %v881
    %v946 = vadd.f32 %v672, %v882
    %v947 = vadd.f32 %v673, %v883
    %v948 = vadd.f32 %v674, %v884
    %v949 = vadd.f32 %v675, %v885
    %v950 = vadd.f32 %v676, %v886
    %v951 = vadd.f32 %v677, %v887
    %v952 = vadd.f32 %v678, %v888
    %v953 = vadd.f32 %v679, %v889
    %v954 = vadd.f32 %v680, %v890
    %v955 = vadd.f32 %v681, %v891
    %v956 = vadd.f32 %v682, %v892
    %v957 = vadd.f32 %v683, %v893
    %v958 = vadd.f32 %v684, %v894
    %v959 = vadd.f32 %v685, %v895
    %v960 = vadd.f32 %v686, %v896
    %v961 = vadd.f32 %v687, %v897
    %v962 = vadd.f32 %v688, %v898
    %v963 = vadd.f32 %v689, %v899
    %v964 = vadd.f32 %v690, %v900
    %v965 = vadd.f32 %v691, %v901
    %v966 = vadd.f32 %v692, %v902
    %v967 = vadd.f32 %v693, %v903
    %v968 = vadd.f32 %v694, %v904
    %v969 = vadd.f32 %v695, %v905
    %v970 = vadd.f32 %v696, %v906
    %v971 = vadd.f32 %v697, %v907
    %v972 = vadd.f32 %v698, %v908
    %v973 = vadd.f32 %v699, %v909
    %v974 = vadd.f32 %v700, %v910
    %v975 = vadd.f32 %v701, %v911
    %v976 = vadd.f32 %v702, %v912
    %v977 = vadd.f32 %v703, %v913
    %v978 = vadd.f32 %v704, %v914
    %v979 = vadd.f32 %v705, %v915
    %v980 = vadd.f32 %v706, %v916
    %v981 = vadd.f32 %v707, %v917
    %v982 = vadd.f32 %v708, %v918
    %v983 = vadd.f32 %v709, %v919
    %v984 = vadd.f32 %v710, %v920
    %v985 = vadd.f32 %v711, %v921
    %v986 = vadd.f32 %v712, %v922
    %v987 = vadd.f32 %v713, %v923
    %v988 = vadd.f32 %v714, %v924
    %v989 = vadd.f32 %v715, %v925
    %v990 = vadd.f32 %v716, %v926
    %v991 = vadd.f32 %v717, %v927
    %v992 = vadd.f32 %v718, %v928
    %v993 = vadd.f32 %v719, %v929
    %v994 = vadd.f32 %v720, %v930
    %v995 = vadd.f32 %v721, %v931
    %v996 = vadd.f32 %v722, %v932
    %v997 = vadd.f32 %v723, %v933
    %v998 = vadd.f32 %v724, %v934
    %v999 = vadd.f32 %v725, %v935
    %v1000 = vadd.f32 %v726, %v936
    %v1001 = vadd.f32 %v727, %v937
    %v1002 = vadd.f32 %v728, %v938
    %v1003 = vadd.f32 %v729, %v939
    %v1004 = vadd.f32 %v730, %v940
    %v1005 = vadd.f32 %v731, %v941
    %v1006 = vadd.f32 %v732, %v942
    %v1007 = vadd.f32 %v733, %v943
    %v1008 = vadd.f32 %v734, %v944
    %v1009 = vadd.f32 %v735, %v945
    %v1011 = vlaneseq
    %v1012 = vshrl.u32 %v1011, 7
    %v1013 = vsub.s32 0, %v1012
    %v1014 = vrot.slane %v218, %v1013
    %v1015 = vlaneseq
    %v1016 = vshrl.u32 %v1015, 7
    %v1017 = vsub.s32 1, %v1016
    %v1018 = vrot.slane %v218, %v1017
    %v1021 = vadd.f32 %v946, %v1014
    %v1022 = vadd.f32 %v947, %v1018
    %v1023 = vadd.f32 %v948, %v1014
    %v1024 = vadd.f32 %v949, %v1018
    %v1025 = vadd.f32 %v950, %v1014
    %v1026 = vadd.f32 %v951, %v1018
    %v1027 = vadd.f32 %v952, %v1014
    %v1028 = vadd.f32 %v953, %v1018
    %v1029 = vadd.f32 %v954, %v1014
    %v1030 = vadd.f32 %v955, %v1018
    %v1031 = vadd.f32 %v956, %v1014
    %v1032 = vadd.f32 %v957, %v1018
    %v1033 = vadd.f32 %v958, %v1014
    %v1034 = vadd.f32 %v959, %v1018
    %v1035 = vadd.f32 %v960, %v1014
    %v1036 = vadd.f32 %v961, %v1018
    %v1037 = vadd.f32 %v962, %v1014
    %v1038 = vadd.f32 %v963, %v1018
    %v1039 = vadd.f32 %v964, %v1014
    %v1040 = vadd.f32 %v965, %v1018
    %v1041 = vadd.f32 %v966, %v1014
    %v1042 = vadd.f32 %v967, %v1018
    %v1043 = vadd.f32 %v968, %v1014
    %v1044 = vadd.f32 %v969, %v1018
    %v1045 = vadd.f32 %v970, %v1014
    %v1046 = vadd.f32 %v971, %v1018
    %v1047 = vadd.f32 %v972, %v1014
    %v1048 = vadd.f32 %v973, %v1018
    %v1049 = vadd.f32 %v974, %v1014
    %v1050 = vadd.f32 %v975, %v1018
    %v1051 = vadd.f32 %v976, %v1014
    %v1052 = vadd.f32 %v977, %v1018
    %v1053 = vadd.f32 %v978, %v1014
    %v1054 = vadd.f32 %v979, %v1018
    %v1055 = vadd.f32 %v980, %v1014
    %v1056 = vadd.f32 %v981, %v1018
    %v1057 = vadd.f32 %v982, %v1014
    %v1058 = vadd.f32 %v983, %v1018
    %v1059 = vadd.f32 %v984, %v1014
    %v1060 = vadd.f32 %v985, %v1018
    %v1061 = vadd.f32 %v986, %v1014
    %v1062 = vadd.f32 %v987, %v1018
    %v1063 = vadd.f32 %v988, %v1014
    %v1064 = vadd.f32 %v989, %v1018
    %v1065 = vadd.f32 %v990, %v1014
    %v1066 = vadd.f32 %v991, %v1018
    %v1067 = vadd.f32 %v992, %v1014
    %v1068 = vadd.f32 %v993, %v1018
    %v1069 = vadd.f32 %v994, %v1014
    %v1070 = vadd.f32 %v995, %v1018
    %v1071 = vadd.f32 %v996, %v1014
    %v1072 = vadd.f32 %v997, %v1018
    %v1073 = vadd.f32 %v998, %v1014
    %v1074 = vadd.f32 %v999, %v1018
    %v1075 = vadd.f32 %v1000, %v1014
    %v1076 = vadd.f32 %v1001, %v1018
    %v1077 = vadd.f32 %v1002, %v1014
    %v1078 = vadd.f32 %v1003, %v1018
    %v1079 = vadd.f32 %v1004, %v1014
    %v1080 = vadd.f32 %v1005, %v1018
    %v1081 = vadd.f32 %v1006, %v1014
    %v1082 = vadd.f32 %v1007, %v1018
    %v1083 = vadd.f32 %v1008, %v1014
    %v1084 = vadd.f32 %v1009, %v1018
    %v1085 = vmax.f32 %v1021, 0.0
    %v1086 = vmax.f32 %v1022, 0.0
    %v1087 = vmax.f32 %v1023, 0.0
    %v1088 = vmax.f32 %v1024, 0.0
    %v1089 = vmax.f32 %v1025, 0.0
    %v1090 = vmax.f32 %v1026, 0.0
    %v1091 = vmax.f32 %v1027, 0.0
    %v1092 = vmax.f32 %v1028, 0.0
    %v1093 = vmax.f32 %v1029, 0.0
    %v1094 = vmax.f32 %v1030, 0.0
    %v1095 = vmax.f32 %v1031, 0.0
    %v1096 = vmax.f32 %v1032, 0.0
    %v1097 = vmax.f32 %v1033, 0.0
    %v1098 = vmax.f32 %v1034, 0.0
    %v1099 = vmax.f32 %v1035, 0.0
    %v1100 = vmax.f32 %v1036, 0.0
    %v1101 = vmax.f32 %v1037, 0.0
    %v1102 = vmax.f32 %v1038, 0.0
    %v1103 = vmax.f32 %v1039, 0.0
    %v1104 = vmax.f32 %v1040, 0.0
    %v1105 = vmax.f32 %v1041, 0.0
    %v1106 = vmax.f32 %v1042, 0.0
    %v1107 = vmax.f32 %v1043, 0.0
    %v1108 = vmax.f32 %v1044, 0.0
    %v1109 = vmax.f32 %v1045, 0.0
    %v1110 = vmax.f32 %v1046, 0.0
    %v1111 = vmax.f32 %v1047, 0.0
    %v1112 = vmax.f32 %v1048, 0.0
    %v1113 = vmax.f32 %v1049, 0.0
    %v1114 = vmax.f32 %v1050, 0.0
    %v1115 = vmax.f32 %v1051, 0.0
    %v1116 = vmax.f32 %v1052, 0.0
    %v1117 = vmax.f32 %v1053, 0.0
    %v1118 = vmax.f32 %v1054, 0.0
    %v1119 = vmax.f32 %v1055, 0.0
    %v1120 = vmax.f32 %v1056, 0.0
    %v1121 = vmax.f32 %v1057, 0.0
    %v1122 = vmax.f32 %v1058, 0.0
    %v1123 = vmax.f32 %v1059, 0.0
    %v1124 = vmax.f32 %v1060, 0.0
    %v1125 = vmax.f32 %v1061, 0.0
    %v1126 = vmax.f32 %v1062, 0.0
    %v1127 = vmax.f32 %v1063, 0.0
    %v1128 = vmax.f32 %v1064, 0.0
    %v1129 = vmax.f32 %v1065, 0.0
    %v1130 = vmax.f32 %v1066, 0.0
    %v1131 = vmax.f32 %v1067, 0.0
    %v1132 = vmax.f32 %v1068, 0.0
    %v1133 = vmax.f32 %v1069, 0.0
    %v1134 = vmax.f32 %v1070, 0.0
    %v1135 = vmax.f32 %v1071, 0.0
    %v1136 = vmax.f32 %v1072, 0.0
    %v1137 = vmax.f32 %v1073, 0.0
    %v1138 = vmax.f32 %v1074, 0.0
    %v1139 = vmax.f32 %v1075, 0.0
    %v1140 = vmax.f32 %v1076, 0.0
    %v1141 = vmax.f32 %v1077, 0.0
    %v1142 = vmax.f32 %v1078, 0.0
    %v1143 = vmax.f32 %v1079, 0.0
    %v1144 = vmax.f32 %v1080, 0.0
    %v1145 = vmax.f32 %v1081, 0.0
    %v1146 = vmax.f32 %v1082, 0.0
    %v1147 = vmax.f32 %v1083, 0.0
    %v1148 = vmax.f32 %v1084, 0.0
    %v1149 = vld [vmem:[%s3] sm:$0xff]
    %v1150 = vld [vmem:[%s3 + $0x8] sm:$0xff]
    %v1151 = vld [vmem:[%s3 + $0x10] sm:$0xff]
    %v1152 = vld [vmem:[%s3 + $0x18] sm:$0xff]
    %v1153 = vld [vmem:[%s3 + $0x20] sm:$0xff]
    %v1154 = vld [vmem:[%s3 + $0x28] sm:$0xff]
    %v1155 = vld [vmem:[%s3 + $0x30] sm:$0xff]
    %v1156 = vld [vmem:[%s3 + $0x38] sm:$0xff]
    %v1157 = vld [vmem:[%s3 + $0x40] sm:$0xff]
    %v1158 = vld [vmem:[%s3 + $0x48] sm:$0xff]
    %v1159 = vld [vmem:[%s3 + $0x50] sm:$0xff]
    %v1160 = vld [vmem:[%s3 + $0x58] sm:$0xff]
    %v1161 = vld [vmem:[%s3 + $0x60] sm:$0xff]
    %v1162 = vld [vmem:[%s3 + $0x68] sm:$0xff]
    %v1163 = vld [vmem:[%s3 + $0x70] sm:$0xff]
    %v1164 = vld [vmem:[%s3 + $0x78] sm:$0xff]
    %v1165 = vld [vmem:[%s3 + $0x80] sm:$0xff]
    %v1166 = vld [vmem:[%s3 + $0x88] sm:$0xff]
    %v1167 = vld [vmem:[%s3 + $0x90] sm:$0xff]
    %v1168 = vld [vmem:[%s3 + $0x98] sm:$0xff]
    %v1169 = vld [vmem:[%s3 + $0xa0] sm:$0xff]
    %v1170 = vld [vmem:[%s3 + $0xa8] sm:$0xff]
    %v1171 = vld [vmem:[%s3 + $0xb0] sm:$0xff]
    %v1172 = vld [vmem:[%s3 + $0xb8] sm:$0xff]
    %v1173 = vld [vmem:[%s3 + $0xc0] sm:$0xff]
    %v1174 = vld [vmem:[%s3 + $0xc8] sm:$0xff]
    %v1175 = vld [vmem:[%s3 + $0xd0] sm:$0xff]
    %v1176 = vld [vmem:[%s3 + $0xd8] sm:$0xff]
    %v1177 = vld [vmem:[%s3 + $0xe0] sm:$0xff]
    %v1178 = vld [vmem:[%s3 + $0xe8] sm:$0xff]
    %v1179 = vld [vmem:[%s3 + $0xf0] sm:$0xff]
    %v1180 = vld [vmem:[%s3 + $0xf8] sm:$0xff]
    %v1181 = vld [vmem:[#allocation2] sm:$0x3]
    %v1182 = vpack.c.bf16 %v1087, %v1085
    %v1183 = vpack.c.bf16 %v1088, %v1086
    %v1184 = vpack.c.bf16 %v1091, %v1089
    %v1185 = vpack.c.bf16 %v1092, %v1090
    %v1186 = vpack.c.bf16 %v1095, %v1093
    %v1187 = vpack.c.bf16 %v1096, %v1094
    %v1188 = vpack.c.bf16 %v1099, %v1097
    %v1189 = vpack.c.bf16 %v1100, %v1098
    %v1190 = vpack.c.bf16 %v1103, %v1101
    %v1191 = vpack.c.bf16 %v1104, %v1102
    %v1192 = vpack.c.bf16 %v1107, %v1105
    %v1193 = vpack.c.bf16 %v1108, %v1106
    %v1194 = vpack.c.bf16 %v1111, %v1109
    %v1195 = vpack.c.bf16 %v1112, %v1110
    %v1196 = vpack.c.bf16 %v1115, %v1113
    %v1197 = vpack.c.bf16 %v1116, %v1114
    %v1198 = vpack.c.bf16 %v1119, %v1117
    %v1199 = vpack.c.bf16 %v1120, %v1118
    %v1200 = vpack.c.bf16 %v1123, %v1121
    %v1201 = vpack.c.bf16 %v1124, %v1122
    %v1202 = vpack.c.bf16 %v1127, %v1125
    %v1203 = vpack.c.bf16 %v1128, %v1126
    %v1204 = vpack.c.bf16 %v1131, %v1129
    %v1205 = vpack.c.bf16 %v1132, %v1130
    %v1206 = vpack.c.bf16 %v1135, %v1133
    %v1207 = vpack.c.bf16 %v1136, %v1134
    %v1208 = vpack.c.bf16 %v1139, %v1137
    %v1209 = vpack.c.bf16 %v1140, %v1138
    %v1210 = vpack.c.bf16 %v1143, %v1141
    %v1211 = vpack.c.bf16 %v1144, %v1142
    %v1212 = vpack.c.bf16 %v1147, %v1145
    %v1213 = vpack.c.bf16 %v1148, %v1146
    %v1215 = vlaneseq
    %v1216 = vshrl.u32 %v1215, 7
    %v1217 = vsub.s32 0, %v1216
    %v1218 = vrot.slane %v1181, %v1217
    %v1219 = vlaneseq
    %v1220 = vshrl.u32 %v1219, 7
    %v1221 = vsub.s32 1, %v1220
    %v1222 = vrot.slane %v1181, %v1221
    %v1257 = vunpack.c.l.b16 %v1149
    %v1258 = vunpack.c.h.b16 %v1149
    %v1259 = vunpack.c.l.b16 %v1150
    %v1260 = vunpack.c.h.b16 %v1150
    %v1261 = vunpack.c.l.b16 %v1151
    %v1262 = vunpack.c.h.b16 %v1151
    %v1263 = vunpack.c.l.b16 %v1152
    %v1264 = vunpack.c.h.b16 %v1152
    %v1265 = vunpack.c.l.b16 %v1153
    %v1266 = vunpack.c.h.b16 %v1153
    %v1267 = vunpack.c.l.b16 %v1154
    %v1268 = vunpack.c.h.b16 %v1154
    %v1269 = vunpack.c.l.b16 %v1155
    %v1270 = vunpack.c.h.b16 %v1155
    %v1271 = vunpack.c.l.b16 %v1156
    %v1272 = vunpack.c.h.b16 %v1156
    %v1273 = vunpack.c.l.b16 %v1157
    %v1274 = vunpack.c.h.b16 %v1157
    %v1275 = vunpack.c.l.b16 %v1158
    %v1276 = vunpack.c.h.b16 %v1158
    %v1277 = vunpack.c.l.b16 %v1159
    %v1278 = vunpack.c.h.b16 %v1159
    %v1279 = vunpack.c.l.b16 %v1160
    %v1280 = vunpack.c.h.b16 %v1160
    %v1281 = vunpack.c.l.b16 %v1161
    %v1282 = vunpack.c.h.b16 %v1161
    %v1283 = vunpack.c.l.b16 %v1162
    %v1284 = vunpack.c.h.b16 %v1162
    %v1285 = vunpack.c.l.b16 %v1163
    %v1286 = vunpack.c.h.b16 %v1163
    %v1287 = vunpack.c.l.b16 %v1164
    %v1288 = vunpack.c.h.b16 %v1164
    %v1289 = vunpack.c.l.b16 %v1165
    %v1290 = vunpack.c.h.b16 %v1165
    %v1291 = vunpack.c.l.b16 %v1166
    %v1292 = vunpack.c.h.b16 %v1166
    %v1293 = vunpack.c.l.b16 %v1167
    %v1294 = vunpack.c.h.b16 %v1167
    %v1295 = vunpack.c.l.b16 %v1168
    %v1296 = vunpack.c.h.b16 %v1168
    %v1297 = vunpack.c.l.b16 %v1169
    %v1298 = vunpack.c.h.b16 %v1169
    %v1299 = vunpack.c.l.b16 %v1170
    %v1300 = vunpack.c.h.b16 %v1170
    %v1301 = vunpack.c.l.b16 %v1171
    %v1302 = vunpack.c.h.b16 %v1171
    %v1303 = vunpack.c.l.b16 %v1172
    %v1304 = vunpack.c.h.b16 %v1172
    %v1305 = vunpack.c.l.b16 %v1173
    %v1306 = vunpack.c.h.b16 %v1173
    %v1307 = vunpack.c.l.b16 %v1174
    %v1308 = vunpack.c.h.b16 %v1174
    %v1309 = vunpack.c.l.b16 %v1175
    %v1310 = vunpack.c.h.b16 %v1175
    %v1311 = vunpack.c.l.b16 %v1176
    %v1312 = vunpack.c.h.b16 %v1176
    %v1313 = vunpack.c.l.b16 %v1177
    %v1314 = vunpack.c.h.b16 %v1177
    %v1315 = vunpack.c.l.b16 %v1178
    %v1316 = vunpack.c.h.b16 %v1178
    %v1317 = vunpack.c.l.b16 %v1179
    %v1318 = vunpack.c.h.b16 %v1179
    %v1319 = vunpack.c.l.b16 %v1180
    %v1320 = vunpack.c.h.b16 %v1180
    %v1321 = vpack.c.b16 %v1259, %v1257
    %v1322 = vpack.c.b16 %v1260, %v1258
    %v1323 = vpack.c.b16 %v1263, %v1261
    %v1324 = vpack.c.b16 %v1264, %v1262
    %v1325 = vpack.c.b16 %v1267, %v1265
    %v1326 = vpack.c.b16 %v1268, %v1266
    %v1327 = vpack.c.b16 %v1271, %v1269
    %v1328 = vpack.c.b16 %v1272, %v1270
    %v1329 = vpack.c.b16 %v1275, %v1273
    %v1330 = vpack.c.b16 %v1276, %v1274
    %v1331 = vpack.c.b16 %v1279, %v1277
    %v1332 = vpack.c.b16 %v1280, %v1278
    %v1333 = vpack.c.b16 %v1283, %v1281
    %v1334 = vpack.c.b16 %v1284, %v1282
    %v1335 = vpack.c.b16 %v1287, %v1285
    %v1336 = vpack.c.b16 %v1288, %v1286
    %v1337 = vpack.c.b16 %v1291, %v1289
    %v1338 = vpack.c.b16 %v1292, %v1290
    %v1339 = vpack.c.b16 %v1295, %v1293
    %v1340 = vpack.c.b16 %v1296, %v1294
    %v1341 = vpack.c.b16 %v1299, %v1297
    %v1342 = vpack.c.b16 %v1300, %v1298
    %v1343 = vpack.c.b16 %v1303, %v1301
    %v1344 = vpack.c.b16 %v1304, %v1302
    %v1345 = vpack.c.b16 %v1307, %v1305
    %v1346 = vpack.c.b16 %v1308, %v1306
    %v1347 = vpack.c.b16 %v1311, %v1309
    %v1348 = vpack.c.b16 %v1312, %v1310
    %v1349 = vpack.c.b16 %v1315, %v1313
    %v1350 = vpack.c.b16 %v1316, %v1314
    %v1351 = vpack.c.b16 %v1319, %v1317
    %v1352 = vpack.c.b16 %v1320, %v1318
    %1385 = vmatprep.subr.bf16.mxu0 %v1336
    %1386 = vmatpush1.bf16.msra.mxu0 %v1335
    %1387 = vmatprep.subr.bf16.mxu0 %v1334
    %1388 = vmatpush1.bf16.msra.mxu0 %v1333
    %1389 = vmatprep.subr.bf16.mxu0 %v1332
    %1390 = vmatpush1.bf16.msra.mxu0 %v1331
    %1391 = vmatprep.subr.bf16.mxu0 %v1330
    %1392 = vmatpush1.bf16.msra.mxu0 %v1329
    %1393 = vmatprep.subr.bf16.mxu0 %v1328
    %1394 = vmatpush1.bf16.msra.mxu0 %v1327
    %1395 = vmatprep.subr.bf16.mxu0 %v1326
    %1396 = vmatpush1.bf16.msra.mxu0 %v1325
    %1397 = vmatprep.subr.bf16.mxu0 %v1324
    %1398 = vmatpush1.bf16.msra.mxu0 %v1323
    %1399 = vmatprep.subr.bf16.mxu0 %v1322
    %1400 = vmatpush1.bf16.msra.mxu0 %v1321
    %1401 = vmatprep.subr.bf16.mxu0 %v1352
    %1402 = vmatpush2.bf16.msra.mxu0 %v1351
    %1403 = vmatprep.subr.bf16.mxu0 %v1350
    %1404 = vmatpush2.bf16.msra.mxu0 %v1349
    %1405 = vmatprep.subr.bf16.mxu0 %v1348
    %1406 = vmatpush2.bf16.msra.mxu0 %v1347
    %1407 = vmatprep.subr.bf16.mxu0 %v1346
    %1408 = vmatpush2.bf16.msra.mxu0 %v1345
    %1409 = vmatprep.subr.bf16.mxu0 %v1344
    %1410 = vmatpush2.bf16.msra.mxu0 %v1343
    %1411 = vmatprep.subr.bf16.mxu0 %v1342
    %1412 = vmatpush2.bf16.msra.mxu0 %v1341
    %1413 = vmatprep.subr.bf16.mxu0 %v1340
    %1414 = vmatpush2.bf16.msra.mxu0 %v1339
    %1415 = vmatprep.subr.bf16.mxu0 %v1338
    %1416 = vmatpush2.bf16.msra.mxu0 %v1337
    %1417 = vmatprep.mubr.bf16.mxu0 %v1183
    %1418 = vmatmul.mubr.bf16.gmra.mxu0 %v1182
    %v1419 = vpop.f32.mrf.mxu0
    %v1420 = vadd.f32 %v1218, %v1419
    %v1421 = vpop.f32.mrf.mxu0
    %v1422 = vadd.f32 %v1222, %v1421
    %v1423 = vpop.f32.mrf.mxu0
    %v1424 = vadd.f32 %v1218, %v1423
    %v1425 = vpop.f32.mrf.mxu0
    %v1426 = vadd.f32 %v1222, %v1425
    %1427 = vmatprep.mubr.bf16.mxu0 %v1185
    %1428 = vmatmul.mubr.bf16.gmra.mxu0 %v1184
    %v1429 = vpop.f32.mrf.mxu0
    %v1430 = vadd.f32 %v1218, %v1429
    %v1431 = vpop.f32.mrf.mxu0
    %v1432 = vadd.f32 %v1222, %v1431
    %v1433 = vpop.f32.mrf.mxu0
    %v1434 = vadd.f32 %v1218, %v1433
    %v1435 = vpop.f32.mrf.mxu0
    %v1436 = vadd.f32 %v1222, %v1435
    %1437 = vmatprep.mubr.bf16.mxu0 %v1187
    %1438 = vmatmul.mubr.bf16.gmra.mxu0 %v1186
    %v1439 = vpop.f32.mrf.mxu0
    %v1440 = vadd.f32 %v1218, %v1439
    %v1441 = vpop.f32.mrf.mxu0
    %v1442 = vadd.f32 %v1222, %v1441
    %v1443 = vpop.f32.mrf.mxu0
    %v1444 = vadd.f32 %v1218, %v1443
    %v1445 = vpop.f32.mrf.mxu0
    %v1446 = vadd.f32 %v1222, %v1445
    %1447 = vmatprep.mubr.bf16.mxu0 %v1189
    %1448 = vmatmul.mubr.bf16.gmra.mxu0 %v1188
    %v1449 = vpop.f32.mrf.mxu0
    %v1450 = vadd.f32 %v1218, %v1449
    %v1451 = vpop.f32.mrf.mxu0
    %v1452 = vadd.f32 %v1222, %v1451
    %v1453 = vpop.f32.mrf.mxu0
    %v1454 = vadd.f32 %v1218, %v1453
    %v1455 = vpop.f32.mrf.mxu0
    %v1456 = vadd.f32 %v1222, %v1455
    %1457 = vmatprep.mubr.bf16.mxu0 %v1191
    %1458 = vmatmul.mubr.bf16.gmra.mxu0 %v1190
    %v1459 = vpop.f32.mrf.mxu0
    %v1460 = vadd.f32 %v1218, %v1459
    %v1461 = vpop.f32.mrf.mxu0
    %v1462 = vadd.f32 %v1222, %v1461
    %v1463 = vpop.f32.mrf.mxu0
    %v1464 = vadd.f32 %v1218, %v1463
    %v1465 = vpop.f32.mrf.mxu0
    %v1466 = vadd.f32 %v1222, %v1465
    %1467 = vmatprep.mubr.bf16.mxu0 %v1193
    %1468 = vmatmul.mubr.bf16.gmra.mxu0 %v1192
    %v1469 = vpop.f32.mrf.mxu0
    %v1470 = vadd.f32 %v1218, %v1469
    %v1471 = vpop.f32.mrf.mxu0
    %v1472 = vadd.f32 %v1222, %v1471
    %v1473 = vpop.f32.mrf.mxu0
    %v1474 = vadd.f32 %v1218, %v1473
    %v1475 = vpop.f32.mrf.mxu0
    %v1476 = vadd.f32 %v1222, %v1475
    %1477 = vmatprep.mubr.bf16.mxu0 %v1195
    %1478 = vmatmul.mubr.bf16.gmra.mxu0 %v1194
    %v1479 = vpop.f32.mrf.mxu0
    %v1480 = vadd.f32 %v1218, %v1479
    %v1481 = vpop.f32.mrf.mxu0
    %v1482 = vadd.f32 %v1222, %v1481
    %v1483 = vpop.f32.mrf.mxu0
    %v1484 = vadd.f32 %v1218, %v1483
    %v1485 = vpop.f32.mrf.mxu0
    %v1486 = vadd.f32 %v1222, %v1485
    %1487 = vmatprep.mubr.bf16.mxu0 %v1197
    %1488 = vmatmul.mubr.bf16.gmra.mxu0 %v1196
    %v1489 = vpop.f32.mrf.mxu0
    %v1490 = vadd.f32 %v1218, %v1489
    %v1491 = vpop.f32.mrf.mxu0
    %v1492 = vadd.f32 %v1222, %v1491
    %v1493 = vpop.f32.mrf.mxu0
    %v1494 = vadd.f32 %v1218, %v1493
    %v1495 = vpop.f32.mrf.mxu0
    %v1496 = vadd.f32 %v1222, %v1495
    %1497 = vmatprep.mubr.bf16.mxu0 %v1199
    %1498 = vmatmul.mubr.bf16.gmra.mxu0 %v1198
    %v1499 = vpop.f32.mrf.mxu0
    %v1500 = vadd.f32 %v1218, %v1499
    %v1501 = vpop.f32.mrf.mxu0
    %v1502 = vadd.f32 %v1222, %v1501
    %v1503 = vpop.f32.mrf.mxu0
    %v1504 = vadd.f32 %v1218, %v1503
    %v1505 = vpop.f32.mrf.mxu0
    %v1506 = vadd.f32 %v1222, %v1505
    %1507 = vmatprep.mubr.bf16.mxu0 %v1201
    %1508 = vmatmul.mubr.bf16.gmra.mxu0 %v1200
    %v1509 = vpop.f32.mrf.mxu0
    %v1510 = vadd.f32 %v1218, %v1509
    %v1511 = vpop.f32.mrf.mxu0
    %v1512 = vadd.f32 %v1222, %v1511
    %v1513 = vpop.f32.mrf.mxu0
    %v1514 = vadd.f32 %v1218, %v1513
    %v1515 = vpop.f32.mrf.mxu0
    %v1516 = vadd.f32 %v1222, %v1515
    %1517 = vmatprep.mubr.bf16.mxu0 %v1203
    %1518 = vmatmul.mubr.bf16.gmra.mxu0 %v1202
    %v1519 = vpop.f32.mrf.mxu0
    %v1520 = vadd.f32 %v1218, %v1519
    %v1521 = vpop.f32.mrf.mxu0
    %v1522 = vadd.f32 %v1222, %v1521
    %v1523 = vpop.f32.mrf.mxu0
    %v1524 = vadd.f32 %v1218, %v1523
    %v1525 = vpop.f32.mrf.mxu0
    %v1526 = vadd.f32 %v1222, %v1525
    %1527 = vmatprep.mubr.bf16.mxu0 %v1205
    %1528 = vmatmul.mubr.bf16.gmra.mxu0 %v1204
    %v1529 = vpop.f32.mrf.mxu0
    %v1530 = vadd.f32 %v1218, %v1529
    %v1531 = vpop.f32.mrf.mxu0
    %v1532 = vadd.f32 %v1222, %v1531
    %v1533 = vpop.f32.mrf.mxu0
    %v1534 = vadd.f32 %v1218, %v1533
    %v1535 = vpop.f32.mrf.mxu0
    %v1536 = vadd.f32 %v1222, %v1535
    %1537 = vmatprep.mubr.bf16.mxu0 %v1207
    %1538 = vmatmul.mubr.bf16.gmra.mxu0 %v1206
    %v1539 = vpop.f32.mrf.mxu0
    %v1540 = vadd.f32 %v1218, %v1539
    %v1541 = vpop.f32.mrf.mxu0
    %v1542 = vadd.f32 %v1222, %v1541
    %v1543 = vpop.f32.mrf.mxu0
    %v1544 = vadd.f32 %v1218, %v1543
    %v1545 = vpop.f32.mrf.mxu0
    %v1546 = vadd.f32 %v1222, %v1545
    %1547 = vmatprep.mubr.bf16.mxu0 %v1209
    %1548 = vmatmul.mubr.bf16.gmra.mxu0 %v1208
    %v1549 = vpop.f32.mrf.mxu0
    %v1550 = vadd.f32 %v1218, %v1549
    %v1551 = vpop.f32.mrf.mxu0
    %v1552 = vadd.f32 %v1222, %v1551
    %v1553 = vpop.f32.mrf.mxu0
    %v1554 = vadd.f32 %v1218, %v1553
    %v1555 = vpop.f32.mrf.mxu0
    %v1556 = vadd.f32 %v1222, %v1555
    %1557 = vmatprep.mubr.bf16.mxu0 %v1211
    %1558 = vmatmul.mubr.bf16.gmra.mxu0 %v1210
    %v1559 = vpop.f32.mrf.mxu0
    %v1560 = vadd.f32 %v1218, %v1559
    %v1561 = vpop.f32.mrf.mxu0
    %v1562 = vadd.f32 %v1222, %v1561
    %v1563 = vpop.f32.mrf.mxu0
    %v1564 = vadd.f32 %v1218, %v1563
    %v1565 = vpop.f32.mrf.mxu0
    %v1566 = vadd.f32 %v1222, %v1565
    %1567 = vmatprep.mubr.bf16.mxu0 %v1213
    %1568 = vmatmul.mubr.bf16.gmra.mxu0 %v1212
    %v1569 = vpop.f32.mrf.mxu0
    %v1570 = vadd.f32 %v1218, %v1569
    %v1571 = vpop.f32.mrf.mxu0
    %v1572 = vadd.f32 %v1222, %v1571
    %v1573 = vpop.f32.mrf.mxu0
    %v1574 = vadd.f32 %v1218, %v1573
    %v1575 = vpop.f32.mrf.mxu0
    %v1576 = vadd.f32 %v1222, %v1575
    %1577 = vdwg.mxu0
    %v1578 = vmax.f32 %v1420, 0.0
    %v1579 = vmax.f32 %v1422, 0.0
    %v1580 = vmax.f32 %v1424, 0.0
    %v1581 = vmax.f32 %v1426, 0.0
    %v1582 = vmax.f32 %v1430, 0.0
    %v1583 = vmax.f32 %v1432, 0.0
    %v1584 = vmax.f32 %v1434, 0.0
    %v1585 = vmax.f32 %v1436, 0.0
    %v1586 = vmax.f32 %v1440, 0.0
    %v1587 = vmax.f32 %v1442, 0.0
    %v1588 = vmax.f32 %v1444, 0.0
    %v1589 = vmax.f32 %v1446, 0.0
    %v1590 = vmax.f32 %v1450, 0.0
    %v1591 = vmax.f32 %v1452, 0.0
    %v1592 = vmax.f32 %v1454, 0.0
    %v1593 = vmax.f32 %v1456, 0.0
    %v1594 = vmax.f32 %v1460, 0.0
    %v1595 = vmax.f32 %v1462, 0.0
    %v1596 = vmax.f32 %v1464, 0.0
    %v1597 = vmax.f32 %v1466, 0.0
    %v1598 = vmax.f32 %v1470, 0.0
    %v1599 = vmax.f32 %v1472, 0.0
    %v1600 = vmax.f32 %v1474, 0.0
    %v1601 = vmax.f32 %v1476, 0.0
    %v1602 = vmax.f32 %v1480, 0.0
    %v1603 = vmax.f32 %v1482, 0.0
    %v1604 = vmax.f32 %v1484, 0.0
    %v1605 = vmax.f32 %v1486, 0.0
    %v1606 = vmax.f32 %v1490, 0.0
    %v1607 = vmax.f32 %v1492, 0.0
    %v1608 = vmax.f32 %v1494, 0.0
    %v1609 = vmax.f32 %v1496, 0.0
    %v1610 = vmax.f32 %v1500, 0.0
    %v1611 = vmax.f32 %v1502, 0.0
    %v1612 = vmax.f32 %v1504, 0.0
    %v1613 = vmax.f32 %v1506, 0.0
    %v1614 = vmax.f32 %v1510, 0.0
    %v1615 = vmax.f32 %v1512, 0.0
    %v1616 = vmax.f32 %v1514, 0.0
    %v1617 = vmax.f32 %v1516, 0.0
    %v1618 = vmax.f32 %v1520, 0.0
    %v1619 = vmax.f32 %v1522, 0.0
    %v1620 = vmax.f32 %v1524, 0.0
    %v1621 = vmax.f32 %v1526, 0.0
    %v1622 = vmax.f32 %v1530, 0.0
    %v1623 = vmax.f32 %v1532, 0.0
    %v1624 = vmax.f32 %v1534, 0.0
    %v1625 = vmax.f32 %v1536, 0.0
    %v1626 = vmax.f32 %v1540, 0.0
    %v1627 = vmax.f32 %v1542, 0.0
    %v1628 = vmax.f32 %v1544, 0.0
    %v1629 = vmax.f32 %v1546, 0.0
    %v1630 = vmax.f32 %v1550, 0.0
    %v1631 = vmax.f32 %v1552, 0.0
    %v1632 = vmax.f32 %v1554, 0.0
    %v1633 = vmax.f32 %v1556, 0.0
    %v1634 = vmax.f32 %v1560, 0.0
    %v1635 = vmax.f32 %v1562, 0.0
    %v1636 = vmax.f32 %v1564, 0.0
    %v1637 = vmax.f32 %v1566, 0.0
    %v1638 = vmax.f32 %v1570, 0.0
    %v1639 = vmax.f32 %v1572, 0.0
    %v1640 = vmax.f32 %v1574, 0.0
    %v1641 = vmax.f32 %v1576, 0.0
    %v1642 = vld [vmem:[#allocation5] sm:$0xff]
    %v1643 = vld [vmem:[#allocation5 + $0x8] sm:$0xff]
    %v1644 = vld [vmem:[#allocation5 + $0x10] sm:$0xff]
    %v1645 = vld [vmem:[#allocation5 + $0x18] sm:$0xff]
    %v1646 = vld [vmem:[#allocation5 + $0x20] sm:$0xff]
    %v1647 = vld [vmem:[#allocation5 + $0x28] sm:$0xff]
    %v1648 = vld [vmem:[#allocation5 + $0x30] sm:$0xff]
    %v1649 = vld [vmem:[#allocation5 + $0x38] sm:$0xff]
    %v1650 = vld [vmem:[#allocation5 + $0x40] sm:$0xff]
    %v1651 = vld [vmem:[#allocation5 + $0x48] sm:$0xff]
    %v1652 = vld [vmem:[#allocation5 + $0x50] sm:$0xff]
    %v1653 = vld [vmem:[#allocation5 + $0x58] sm:$0xff]
    %v1654 = vld [vmem:[#allocation5 + $0x60] sm:$0xff]
    %v1655 = vld [vmem:[#allocation5 + $0x68] sm:$0xff]
    %v1656 = vld [vmem:[#allocation5 + $0x70] sm:$0xff]
    %v1657 = vld [vmem:[#allocation5 + $0x78] sm:$0xff]
    %v1658 = vld [vmem:[#allocation5 + $0x80] sm:$0xff]
    %v1659 = vld [vmem:[#allocation5 + $0x88] sm:$0xff]
    %v1660 = vld [vmem:[#allocation5 + $0x90] sm:$0xff]
    %v1661 = vld [vmem:[#allocation5 + $0x98] sm:$0xff]
    %v1662 = vld [vmem:[#allocation5 + $0xa0] sm:$0xff]
    %v1663 = vld [vmem:[#allocation5 + $0xa8] sm:$0xff]
    %v1664 = vld [vmem:[#allocation5 + $0xb0] sm:$0xff]
    %v1665 = vld [vmem:[#allocation5 + $0xb8] sm:$0xff]
    %v1666 = vld [vmem:[#allocation5 + $0xc0] sm:$0xff]
    %v1667 = vld [vmem:[#allocation5 + $0xc8] sm:$0xff]
    %v1668 = vld [vmem:[#allocation5 + $0xd0] sm:$0xff]
    %v1669 = vld [vmem:[#allocation5 + $0xd8] sm:$0xff]
    %v1670 = vld [vmem:[#allocation5 + $0xe0] sm:$0xff]
    %v1671 = vld [vmem:[#allocation5 + $0xe8] sm:$0xff]
    %v1672 = vld [vmem:[#allocation5 + $0xf0] sm:$0xff]
    %v1673 = vld [vmem:[#allocation5 + $0xf8] sm:$0xff]
    %v1674 = vld [vmem:[#allocation7] sm:$0x3]
    %v1675 = vpack.c.bf16 %v1580, %v1578
    %v1676 = vpack.c.bf16 %v1581, %v1579
    %v1677 = vpack.c.bf16 %v1584, %v1582
    %v1678 = vpack.c.bf16 %v1585, %v1583
    %v1679 = vpack.c.bf16 %v1588, %v1586
    %v1680 = vpack.c.bf16 %v1589, %v1587
    %v1681 = vpack.c.bf16 %v1592, %v1590
    %v1682 = vpack.c.bf16 %v1593, %v1591
    %v1683 = vpack.c.bf16 %v1596, %v1594
    %v1684 = vpack.c.bf16 %v1597, %v1595
    %v1685 = vpack.c.bf16 %v1600, %v1598
    %v1686 = vpack.c.bf16 %v1601, %v1599
    %v1687 = vpack.c.bf16 %v1604, %v1602
    %v1688 = vpack.c.bf16 %v1605, %v1603
    %v1689 = vpack.c.bf16 %v1608, %v1606
    %v1690 = vpack.c.bf16 %v1609, %v1607
    %v1691 = vpack.c.bf16 %v1612, %v1610
    %v1692 = vpack.c.bf16 %v1613, %v1611
    %v1693 = vpack.c.bf16 %v1616, %v1614
    %v1694 = vpack.c.bf16 %v1617, %v1615
    %v1695 = vpack.c.bf16 %v1620, %v1618
    %v1696 = vpack.c.bf16 %v1621, %v1619
    %v1697 = vpack.c.bf16 %v1624, %v1622
    %v1698 = vpack.c.bf16 %v1625, %v1623
    %v1699 = vpack.c.bf16 %v1628, %v1626
    %v1700 = vpack.c.bf16 %v1629, %v1627
    %v1701 = vpack.c.bf16 %v1632, %v1630
    %v1702 = vpack.c.bf16 %v1633, %v1631
    %v1703 = vpack.c.bf16 %v1636, %v1634
    %v1704 = vpack.c.bf16 %v1637, %v1635
    %v1705 = vpack.c.bf16 %v1640, %v1638
    %v1706 = vpack.c.bf16 %v1641, %v1639
    %v1708 = vlaneseq
    %v1709 = vshrl.u32 %v1708, 7
    %v1710 = vsub.s32 0, %v1709
    %v1711 = vrot.slane %v1674, %v1710
    %v1712 = vlaneseq
    %v1713 = vshrl.u32 %v1712, 7
    %v1714 = vsub.s32 1, %v1713
    %v1715 = vrot.slane %v1674, %v1714
    %v1750 = vunpack.c.l.b16 %v1642
    %v1751 = vunpack.c.h.b16 %v1642
    %v1752 = vunpack.c.l.b16 %v1643
    %v1753 = vunpack.c.h.b16 %v1643
    %v1754 = vunpack.c.l.b16 %v1644
    %v1755 = vunpack.c.h.b16 %v1644
    %v1756 = vunpack.c.l.b16 %v1645
    %v1757 = vunpack.c.h.b16 %v1645
    %v1758 = vunpack.c.l.b16 %v1646
    %v1759 = vunpack.c.h.b16 %v1646
    %v1760 = vunpack.c.l.b16 %v1647
    %v1761 = vunpack.c.h.b16 %v1647
    %v1762 = vunpack.c.l.b16 %v1648
    %v1763 = vunpack.c.h.b16 %v1648
    %v1764 = vunpack.c.l.b16 %v1649
    %v1765 = vunpack.c.h.b16 %v1649
    %v1766 = vunpack.c.l.b16 %v1650
    %v1767 = vunpack.c.h.b16 %v1650
    %v1768 = vunpack.c.l.b16 %v1651
    %v1769 = vunpack.c.h.b16 %v1651
    %v1770 = vunpack.c.l.b16 %v1652
    %v1771 = vunpack.c.h.b16 %v1652
    %v1772 = vunpack.c.l.b16 %v1653
    %v1773 = vunpack.c.h.b16 %v1653
    %v1774 = vunpack.c.l.b16 %v1654
    %v1775 = vunpack.c.h.b16 %v1654
    %v1776 = vunpack.c.l.b16 %v1655
    %v1777 = vunpack.c.h.b16 %v1655
    %v1778 = vunpack.c.l.b16 %v1656
    %v1779 = vunpack.c.h.b16 %v1656
    %v1780 = vunpack.c.l.b16 %v1657
    %v1781 = vunpack.c.h.b16 %v1657
    %v1782 = vunpack.c.l.b16 %v1658
    %v1783 = vunpack.c.h.b16 %v1658
    %v1784 = vunpack.c.l.b16 %v1659
    %v1785 = vunpack.c.h.b16 %v1659
    %v1786 = vunpack.c.l.b16 %v1660
    %v1787 = vunpack.c.h.b16 %v1660
    %v1788 = vunpack.c.l.b16 %v1661
    %v1789 = vunpack.c.h.b16 %v1661
    %v1790 = vunpack.c.l.b16 %v1662
    %v1791 = vunpack.c.h.b16 %v1662
    %v1792 = vunpack.c.l.b16 %v1663
    %v1793 = vunpack.c.h.b16 %v1663
    %v1794 = vunpack.c.l.b16 %v1664
    %v1795 = vunpack.c.h.b16 %v1664
    %v1796 = vunpack.c.l.b16 %v1665
    %v1797 = vunpack.c.h.b16 %v1665
    %v1798 = vunpack.c.l.b16 %v1666
    %v1799 = vunpack.c.h.b16 %v1666
    %v1800 = vunpack.c.l.b16 %v1667
    %v1801 = vunpack.c.h.b16 %v1667
    %v1802 = vunpack.c.l.b16 %v1668
    %v1803 = vunpack.c.h.b16 %v1668
    %v1804 = vunpack.c.l.b16 %v1669
    %v1805 = vunpack.c.h.b16 %v1669
    %v1806 = vunpack.c.l.b16 %v1670
    %v1807 = vunpack.c.h.b16 %v1670
    %v1808 = vunpack.c.l.b16 %v1671
    %v1809 = vunpack.c.h.b16 %v1671
    %v1810 = vunpack.c.l.b16 %v1672
    %v1811 = vunpack.c.h.b16 %v1672
    %v1812 = vunpack.c.l.b16 %v1673
    %v1813 = vunpack.c.h.b16 %v1673
    %v1814 = vpack.c.b16 %v1752, %v1750
    %v1815 = vpack.c.b16 %v1753, %v1751
    %v1816 = vpack.c.b16 %v1756, %v1754
    %v1817 = vpack.c.b16 %v1757, %v1755
    %v1818 = vpack.c.b16 %v1760, %v1758
    %v1819 = vpack.c.b16 %v1761, %v1759
    %v1820 = vpack.c.b16 %v1764, %v1762
    %v1821 = vpack.c.b16 %v1765, %v1763
    %v1822 = vpack.c.b16 %v1768, %v1766
    %v1823 = vpack.c.b16 %v1769, %v1767
    %v1824 = vpack.c.b16 %v1772, %v1770
    %v1825 = vpack.c.b16 %v1773, %v1771
    %v1826 = vpack.c.b16 %v1776, %v1774
    %v1827 = vpack.c.b16 %v1777, %v1775
    %v1828 = vpack.c.b16 %v1780, %v1778
    %v1829 = vpack.c.b16 %v1781, %v1779
    %v1830 = vpack.c.b16 %v1784, %v1782
    %v1831 = vpack.c.b16 %v1785, %v1783
    %v1832 = vpack.c.b16 %v1788, %v1786
    %v1833 = vpack.c.b16 %v1789, %v1787
    %v1834 = vpack.c.b16 %v1792, %v1790
    %v1835 = vpack.c.b16 %v1793, %v1791
    %v1836 = vpack.c.b16 %v1796, %v1794
    %v1837 = vpack.c.b16 %v1797, %v1795
    %v1838 = vpack.c.b16 %v1800, %v1798
    %v1839 = vpack.c.b16 %v1801, %v1799
    %v1840 = vpack.c.b16 %v1804, %v1802
    %v1841 = vpack.c.b16 %v1805, %v1803
    %v1842 = vpack.c.b16 %v1808, %v1806
    %v1843 = vpack.c.b16 %v1809, %v1807
    %v1844 = vpack.c.b16 %v1812, %v1810
    %v1845 = vpack.c.b16 %v1813, %v1811
    %1878 = vmatprep.subr.bf16.mxu0 %v1829
    %1879 = vmatpush1.bf16.msra.mxu0 %v1828
    %1880 = vmatprep.subr.bf16.mxu0 %v1827
    %1881 = vmatpush1.bf16.msra.mxu0 %v1826
    %1882 = vmatprep.subr.bf16.mxu0 %v1825
    %1883 = vmatpush1.bf16.msra.mxu0 %v1824
    %1884 = vmatprep.subr.bf16.mxu0 %v1823
    %1885 = vmatpush1.bf16.msra.mxu0 %v1822
    %1886 = vmatprep.subr.bf16.mxu0 %v1821
    %1887 = vmatpush1.bf16.msra.mxu0 %v1820
    %1888 = vmatprep.subr.bf16.mxu0 %v1819
    %1889 = vmatpush1.bf16.msra.mxu0 %v1818
    %1890 = vmatprep.subr.bf16.mxu0 %v1817
    %1891 = vmatpush1.bf16.msra.mxu0 %v1816
    %1892 = vmatprep.subr.bf16.mxu0 %v1815
    %1893 = vmatpush1.bf16.msra.mxu0 %v1814
    %1894 = vmatprep.subr.bf16.mxu0 %v1845
    %1895 = vmatpush2.bf16.msra.mxu0 %v1844
    %1896 = vmatprep.subr.bf16.mxu0 %v1843
    %1897 = vmatpush2.bf16.msra.mxu0 %v1842
    %1898 = vmatprep.subr.bf16.mxu0 %v1841
    %1899 = vmatpush2.bf16.msra.mxu0 %v1840
    %1900 = vmatprep.subr.bf16.mxu0 %v1839
    %1901 = vmatpush2.bf16.msra.mxu0 %v1838
    %1902 = vmatprep.subr.bf16.mxu0 %v1837
    %1903 = vmatpush2.bf16.msra.mxu0 %v1836
    %1904 = vmatprep.subr.bf16.mxu0 %v1835
    %1905 = vmatpush2.bf16.msra.mxu0 %v1834
    %1906 = vmatprep.subr.bf16.mxu0 %v1833
    %1907 = vmatpush2.bf16.msra.mxu0 %v1832
    %1908 = vmatprep.subr.bf16.mxu0 %v1831
    %1909 = vmatpush2.bf16.msra.mxu0 %v1830
    %1910 = vmatprep.mubr.bf16.mxu0 %v1676
    %1911 = vmatmul.mubr.bf16.gmra.mxu0 %v1675
    %v1912 = vpop.f32.mrf.mxu0
    %v1913 = vadd.f32 %v1711, %v1912
    %v1914 = vpop.f32.mrf.mxu0
    %v1915 = vadd.f32 %v1715, %v1914
    %v1916 = vpop.f32.mrf.mxu0
    %v1917 = vadd.f32 %v1711, %v1916
    %v1918 = vpop.f32.mrf.mxu0
    %v1919 = vadd.f32 %v1715, %v1918
    %1920 = vmatprep.mubr.bf16.mxu0 %v1678
    %1921 = vmatmul.mubr.bf16.gmra.mxu0 %v1677
    %v1922 = vpop.f32.mrf.mxu0
    %v1923 = vadd.f32 %v1711, %v1922
    %v1924 = vpop.f32.mrf.mxu0
    %v1925 = vadd.f32 %v1715, %v1924
    %v1926 = vpop.f32.mrf.mxu0
    %v1927 = vadd.f32 %v1711, %v1926
    %v1928 = vpop.f32.mrf.mxu0
    %v1929 = vadd.f32 %v1715, %v1928
    %1930 = vmatprep.mubr.bf16.mxu0 %v1680
    %1931 = vmatmul.mubr.bf16.gmra.mxu0 %v1679
    %v1932 = vpop.f32.mrf.mxu0
    %v1933 = vadd.f32 %v1711, %v1932
    %v1934 = vpop.f32.mrf.mxu0
    %v1935 = vadd.f32 %v1715, %v1934
    %v1936 = vpop.f32.mrf.mxu0
    %v1937 = vadd.f32 %v1711, %v1936
    %v1938 = vpop.f32.mrf.mxu0
    %v1939 = vadd.f32 %v1715, %v1938
    %1940 = vmatprep.mubr.bf16.mxu0 %v1682
    %1941 = vmatmul.mubr.bf16.gmra.mxu0 %v1681
    %v1942 = vpop.f32.mrf.mxu0
    %v1943 = vadd.f32 %v1711, %v1942
    %v1944 = vpop.f32.mrf.mxu0
    %v1945 = vadd.f32 %v1715, %v1944
    %v1946 = vpop.f32.mrf.mxu0
    %v1947 = vadd.f32 %v1711, %v1946
    %v1948 = vpop.f32.mrf.mxu0
    %v1949 = vadd.f32 %v1715, %v1948
    %1950 = vmatprep.mubr.bf16.mxu0 %v1684
    %1951 = vmatmul.mubr.bf16.gmra.mxu0 %v1683
    %v1952 = vpop.f32.mrf.mxu0
    %v1953 = vadd.f32 %v1711, %v1952
    %v1954 = vpop.f32.mrf.mxu0
    %v1955 = vadd.f32 %v1715, %v1954
    %v1956 = vpop.f32.mrf.mxu0
    %v1957 = vadd.f32 %v1711, %v1956
    %v1958 = vpop.f32.mrf.mxu0
    %v1959 = vadd.f32 %v1715, %v1958
    %1960 = vmatprep.mubr.bf16.mxu0 %v1686
    %1961 = vmatmul.mubr.bf16.gmra.mxu0 %v1685
    %v1962 = vpop.f32.mrf.mxu0
    %v1963 = vadd.f32 %v1711, %v1962
    %v1964 = vpop.f32.mrf.mxu0
    %v1965 = vadd.f32 %v1715, %v1964
    %v1966 = vpop.f32.mrf.mxu0
    %v1967 = vadd.f32 %v1711, %v1966
    %v1968 = vpop.f32.mrf.mxu0
    %v1969 = vadd.f32 %v1715, %v1968
    %1970 = vmatprep.mubr.bf16.mxu0 %v1688
    %1971 = vmatmul.mubr.bf16.gmra.mxu0 %v1687
    %v1972 = vpop.f32.mrf.mxu0
    %v1973 = vadd.f32 %v1711, %v1972
    %v1974 = vpop.f32.mrf.mxu0
    %v1975 = vadd.f32 %v1715, %v1974
    %v1976 = vpop.f32.mrf.mxu0
    %v1977 = vadd.f32 %v1711, %v1976
    %v1978 = vpop.f32.mrf.mxu0
    %v1979 = vadd.f32 %v1715, %v1978
    %1980 = vmatprep.mubr.bf16.mxu0 %v1690
    %1981 = vmatmul.mubr.bf16.gmra.mxu0 %v1689
    %v1982 = vpop.f32.mrf.mxu0
    %v1983 = vadd.f32 %v1711, %v1982
    %v1984 = vpop.f32.mrf.mxu0
    %v1985 = vadd.f32 %v1715, %v1984
    %v1986 = vpop.f32.mrf.mxu0
    %v1987 = vadd.f32 %v1711, %v1986
    %v1988 = vpop.f32.mrf.mxu0
    %v1989 = vadd.f32 %v1715, %v1988
    %1990 = vmatprep.mubr.bf16.mxu0 %v1692
    %1991 = vmatmul.mubr.bf16.gmra.mxu0 %v1691
    %v1992 = vpop.f32.mrf.mxu0
    %v1993 = vadd.f32 %v1711, %v1992
    %v1994 = vpop.f32.mrf.mxu0
    %v1995 = vadd.f32 %v1715, %v1994
    %v1996 = vpop.f32.mrf.mxu0
    %v1997 = vadd.f32 %v1711, %v1996
    %v1998 = vpop.f32.mrf.mxu0
    %v1999 = vadd.f32 %v1715, %v1998
    %2000 = vmatprep.mubr.bf16.mxu0 %v1694
    %2001 = vmatmul.mubr.bf16.gmra.mxu0 %v1693
    %v2002 = vpop.f32.mrf.mxu0
    %v2003 = vadd.f32 %v1711, %v2002
    %v2004 = vpop.f32.mrf.mxu0
    %v2005 = vadd.f32 %v1715, %v2004
    %v2006 = vpop.f32.mrf.mxu0
    %v2007 = vadd.f32 %v1711, %v2006
    %v2008 = vpop.f32.mrf.mxu0
    %v2009 = vadd.f32 %v1715, %v2008
    %2010 = vmatprep.mubr.bf16.mxu0 %v1696
    %2011 = vmatmul.mubr.bf16.gmra.mxu0 %v1695
    %v2012 = vpop.f32.mrf.mxu0
    %v2013 = vadd.f32 %v1711, %v2012
    %v2014 = vpop.f32.mrf.mxu0
    %v2015 = vadd.f32 %v1715, %v2014
    %v2016 = vpop.f32.mrf.mxu0
    %v2017 = vadd.f32 %v1711, %v2016
    %v2018 = vpop.f32.mrf.mxu0
    %v2019 = vadd.f32 %v1715, %v2018
    %2020 = vmatprep.mubr.bf16.mxu0 %v1698
    %2021 = vmatmul.mubr.bf16.gmra.mxu0 %v1697
    %v2022 = vpop.f32.mrf.mxu0
    %v2023 = vadd.f32 %v1711, %v2022
    %v2024 = vpop.f32.mrf.mxu0
    %v2025 = vadd.f32 %v1715, %v2024
    %v2026 = vpop.f32.mrf.mxu0
    %v2027 = vadd.f32 %v1711, %v2026
    %v2028 = vpop.f32.mrf.mxu0
    %v2029 = vadd.f32 %v1715, %v2028
    %2030 = vmatprep.mubr.bf16.mxu0 %v1700
    %2031 = vmatmul.mubr.bf16.gmra.mxu0 %v1699
    %v2032 = vpop.f32.mrf.mxu0
    %v2033 = vadd.f32 %v1711, %v2032
    %v2034 = vpop.f32.mrf.mxu0
    %v2035 = vadd.f32 %v1715, %v2034
    %v2036 = vpop.f32.mrf.mxu0
    %v2037 = vadd.f32 %v1711, %v2036
    %v2038 = vpop.f32.mrf.mxu0
    %v2039 = vadd.f32 %v1715, %v2038
    %2040 = vmatprep.mubr.bf16.mxu0 %v1702
    %2041 = vmatmul.mubr.bf16.gmra.mxu0 %v1701
    %v2042 = vpop.f32.mrf.mxu0
    %v2043 = vadd.f32 %v1711, %v2042
    %v2044 = vpop.f32.mrf.mxu0
    %v2045 = vadd.f32 %v1715, %v2044
    %v2046 = vpop.f32.mrf.mxu0
    %v2047 = vadd.f32 %v1711, %v2046
    %v2048 = vpop.f32.mrf.mxu0
    %v2049 = vadd.f32 %v1715, %v2048
    %2050 = vmatprep.mubr.bf16.mxu0 %v1704
    %2051 = vmatmul.mubr.bf16.gmra.mxu0 %v1703
    %v2052 = vpop.f32.mrf.mxu0
    %v2053 = vadd.f32 %v1711, %v2052
    %v2054 = vpop.f32.mrf.mxu0
    %v2055 = vadd.f32 %v1715, %v2054
    %v2056 = vpop.f32.mrf.mxu0
    %v2057 = vadd.f32 %v1711, %v2056
    %v2058 = vpop.f32.mrf.mxu0
    %v2059 = vadd.f32 %v1715, %v2058
    %2060 = vmatprep.mubr.bf16.mxu0 %v1706
    %2061 = vmatmul.mubr.bf16.gmra.mxu0 %v1705
    %v2062 = vpop.f32.mrf.mxu0
    %v2063 = vadd.f32 %v1711, %v2062
    %v2064 = vpop.f32.mrf.mxu0
    %v2065 = vadd.f32 %v1715, %v2064
    %v2066 = vpop.f32.mrf.mxu0
    %v2067 = vadd.f32 %v1711, %v2066
    %v2068 = vpop.f32.mrf.mxu0
    %v2069 = vadd.f32 %v1715, %v2068
    %2070 = vdwg.mxu0
    %v2071 = vmax.f32 %v1913, 0.0
    %v2072 = vmax.f32 %v1915, 0.0
    %v2073 = vmax.f32 %v1917, 0.0
    %v2074 = vmax.f32 %v1919, 0.0
    %v2075 = vmax.f32 %v1923, 0.0
    %v2076 = vmax.f32 %v1925, 0.0
    %v2077 = vmax.f32 %v1927, 0.0
    %v2078 = vmax.f32 %v1929, 0.0
    %v2079 = vmax.f32 %v1933, 0.0
    %v2080 = vmax.f32 %v1935, 0.0
    %v2081 = vmax.f32 %v1937, 0.0
    %v2082 = vmax.f32 %v1939, 0.0
    %v2083 = vmax.f32 %v1943, 0.0
    %v2084 = vmax.f32 %v1945, 0.0
    %v2085 = vmax.f32 %v1947, 0.0
    %v2086 = vmax.f32 %v1949, 0.0
    %v2087 = vmax.f32 %v1953, 0.0
    %v2088 = vmax.f32 %v1955, 0.0
    %v2089 = vmax.f32 %v1957, 0.0
    %v2090 = vmax.f32 %v1959, 0.0
    %v2091 = vmax.f32 %v1963, 0.0
    %v2092 = vmax.f32 %v1965, 0.0
    %v2093 = vmax.f32 %v1967, 0.0
    %v2094 = vmax.f32 %v1969, 0.0
    %v2095 = vmax.f32 %v1973, 0.0
    %v2096 = vmax.f32 %v1975, 0.0
    %v2097 = vmax.f32 %v1977, 0.0
    %v2098 = vmax.f32 %v1979, 0.0
    %v2099 = vmax.f32 %v1983, 0.0
    %v2100 = vmax.f32 %v1985, 0.0
    %v2101 = vmax.f32 %v1987, 0.0
    %v2102 = vmax.f32 %v1989, 0.0
    %v2103 = vmax.f32 %v1993, 0.0
    %v2104 = vmax.f32 %v1995, 0.0
    %v2105 = vmax.f32 %v1997, 0.0
    %v2106 = vmax.f32 %v1999, 0.0
    %v2107 = vmax.f32 %v2003, 0.0
    %v2108 = vmax.f32 %v2005, 0.0
    %v2109 = vmax.f32 %v2007, 0.0
    %v2110 = vmax.f32 %v2009, 0.0
    %v2111 = vmax.f32 %v2013, 0.0
    %v2112 = vmax.f32 %v2015, 0.0
    %v2113 = vmax.f32 %v2017, 0.0
    %v2114 = vmax.f32 %v2019, 0.0
    %v2115 = vmax.f32 %v2023, 0.0
    %v2116 = vmax.f32 %v2025, 0.0
    %v2117 = vmax.f32 %v2027, 0.0
    %v2118 = vmax.f32 %v2029, 0.0
    %v2119 = vmax.f32 %v2033, 0.0
    %v2120 = vmax.f32 %v2035, 0.0
    %v2121 = vmax.f32 %v2037, 0.0
    %v2122 = vmax.f32 %v2039, 0.0
    %v2123 = vmax.f32 %v2043, 0.0
    %v2124 = vmax.f32 %v2045, 0.0
    %v2125 = vmax.f32 %v2047, 0.0
    %v2126 = vmax.f32 %v2049, 0.0
    %v2127 = vmax.f32 %v2053, 0.0
    %v2128 = vmax.f32 %v2055, 0.0
    %v2129 = vmax.f32 %v2057, 0.0
    %v2130 = vmax.f32 %v2059, 0.0
    %v2131 = vmax.f32 %v2063, 0.0
    %v2132 = vmax.f32 %v2065, 0.0
    %v2133 = vmax.f32 %v2067, 0.0
    %v2134 = vmax.f32 %v2069, 0.0
    %v2135 = vld [vmem:[#allocation8] sm:$0xff]
    %v2136 = vld [vmem:[#allocation8 + $0x8] sm:$0xff]
    %v2137 = vld [vmem:[#allocation8 + $0x10] sm:$0xff]
    %v2138 = vld [vmem:[#allocation8 + $0x18] sm:$0xff]
    %v2139 = vld [vmem:[#allocation8 + $0x20] sm:$0xff]
    %v2140 = vld [vmem:[#allocation8 + $0x28] sm:$0xff]
    %v2141 = vld [vmem:[#allocation8 + $0x30] sm:$0xff]
    %v2142 = vld [vmem:[#allocation8 + $0x38] sm:$0xff]
    %v2143 = vld [vmem:[#allocation8 + $0x40] sm:$0xff]
    %v2144 = vld [vmem:[#allocation8 + $0x48] sm:$0xff]
    %v2145 = vld [vmem:[#allocation8 + $0x50] sm:$0xff]
    %v2146 = vld [vmem:[#allocation8 + $0x58] sm:$0xff]
    %v2147 = vld [vmem:[#allocation8 + $0x60] sm:$0xff]
    %v2148 = vld [vmem:[#allocation8 + $0x68] sm:$0xff]
    %v2149 = vld [vmem:[#allocation8 + $0x70] sm:$0xff]
    %v2150 = vld [vmem:[#allocation8 + $0x78] sm:$0xff]
    %v2151 = vld [vmem:[#allocation8 + $0x80] sm:$0xff]
    %v2152 = vld [vmem:[#allocation8 + $0x88] sm:$0xff]
    %v2153 = vld [vmem:[#allocation8 + $0x90] sm:$0xff]
    %v2154 = vld [vmem:[#allocation8 + $0x98] sm:$0xff]
    %v2155 = vld [vmem:[#allocation8 + $0xa0] sm:$0xff]
    %v2156 = vld [vmem:[#allocation8 + $0xa8] sm:$0xff]
    %v2157 = vld [vmem:[#allocation8 + $0xb0] sm:$0xff]
    %v2158 = vld [vmem:[#allocation8 + $0xb8] sm:$0xff]
    %v2159 = vld [vmem:[#allocation8 + $0xc0] sm:$0xff]
    %v2160 = vld [vmem:[#allocation8 + $0xc8] sm:$0xff]
    %v2161 = vld [vmem:[#allocation8 + $0xd0] sm:$0xff]
    %v2162 = vld [vmem:[#allocation8 + $0xd8] sm:$0xff]
    %v2163 = vld [vmem:[#allocation8 + $0xe0] sm:$0xff]
    %v2164 = vld [vmem:[#allocation8 + $0xe8] sm:$0xff]
    %v2165 = vld [vmem:[#allocation8 + $0xf0] sm:$0xff]
    %v2166 = vld [vmem:[#allocation8 + $0xf8] sm:$0xff]
    %v2167 = vld [vmem:[%s8] sm:$0x3]
    %v2168 = vpack.c.bf16 %v2073, %v2071
    %v2169 = vpack.c.bf16 %v2074, %v2072
    %v2170 = vpack.c.bf16 %v2077, %v2075
    %v2171 = vpack.c.bf16 %v2078, %v2076
    %v2172 = vpack.c.bf16 %v2081, %v2079
    %v2173 = vpack.c.bf16 %v2082, %v2080
    %v2174 = vpack.c.bf16 %v2085, %v2083
    %v2175 = vpack.c.bf16 %v2086, %v2084
    %v2176 = vpack.c.bf16 %v2089, %v2087
    %v2177 = vpack.c.bf16 %v2090, %v2088
    %v2178 = vpack.c.bf16 %v2093, %v2091
    %v2179 = vpack.c.bf16 %v2094, %v2092
    %v2180 = vpack.c.bf16 %v2097, %v2095
    %v2181 = vpack.c.bf16 %v2098, %v2096
    %v2182 = vpack.c.bf16 %v2101, %v2099
    %v2183 = vpack.c.bf16 %v2102, %v2100
    %v2184 = vpack.c.bf16 %v2105, %v2103
    %v2185 = vpack.c.bf16 %v2106, %v2104
    %v2186 = vpack.c.bf16 %v2109, %v2107
    %v2187 = vpack.c.bf16 %v2110, %v2108
    %v2188 = vpack.c.bf16 %v2113, %v2111
    %v2189 = vpack.c.bf16 %v2114, %v2112
    %v2190 = vpack.c.bf16 %v2117, %v2115
    %v2191 = vpack.c.bf16 %v2118, %v2116
    %v2192 = vpack.c.bf16 %v2121, %v2119
    %v2193 = vpack.c.bf16 %v2122, %v2120
    %v2194 = vpack.c.bf16 %v2125, %v2123
    %v2195 = vpack.c.bf16 %v2126, %v2124
    %v2196 = vpack.c.bf16 %v2129, %v2127
    %v2197 = vpack.c.bf16 %v2130, %v2128
    %v2198 = vpack.c.bf16 %v2133, %v2131
    %v2199 = vpack.c.bf16 %v2134, %v2132
    %v2201 = vlaneseq
    %v2202 = vshrl.u32 %v2201, 7
    %v2203 = vsub.s32 0, %v2202
    %v2204 = vrot.slane %v2167, %v2203
    %v2205 = vlaneseq
    %v2206 = vshrl.u32 %v2205, 7
    %v2207 = vsub.s32 1, %v2206
    %v2208 = vrot.slane %v2167, %v2207
    %v2243 = vunpack.c.l.b16 %v2135
    %v2244 = vunpack.c.h.b16 %v2135
    %v2245 = vunpack.c.l.b16 %v2136
    %v2246 = vunpack.c.h.b16 %v2136
    %v2247 = vunpack.c.l.b16 %v2137
    %v2248 = vunpack.c.h.b16 %v2137
    %v2249 = vunpack.c.l.b16 %v2138
    %v2250 = vunpack.c.h.b16 %v2138
    %v2251 = vunpack.c.l.b16 %v2139
    %v2252 = vunpack.c.h.b16 %v2139
    %v2253 = vunpack.c.l.b16 %v2140
    %v2254 = vunpack.c.h.b16 %v2140
    %v2255 = vunpack.c.l.b16 %v2141
    %v2256 = vunpack.c.h.b16 %v2141
    %v2257 = vunpack.c.l.b16 %v2142
    %v2258 = vunpack.c.h.b16 %v2142
    %v2259 = vunpack.c.l.b16 %v2143
    %v2260 = vunpack.c.h.b16 %v2143
    %v2261 = vunpack.c.l.b16 %v2144
    %v2262 = vunpack.c.h.b16 %v2144
    %v2263 = vunpack.c.l.b16 %v2145
    %v2264 = vunpack.c.h.b16 %v2145
    %v2265 = vunpack.c.l.b16 %v2146
    %v2266 = vunpack.c.h.b16 %v2146
    %v2267 = vunpack.c.l.b16 %v2147
    %v2268 = vunpack.c.h.b16 %v2147
    %v2269 = vunpack.c.l.b16 %v2148
    %v2270 = vunpack.c.h.b16 %v2148
    %v2271 = vunpack.c.l.b16 %v2149
    %v2272 = vunpack.c.h.b16 %v2149
    %v2273 = vunpack.c.l.b16 %v2150
    %v2274 = vunpack.c.h.b16 %v2150
    %v2275 = vunpack.c.l.b16 %v2151
    %v2276 = vunpack.c.h.b16 %v2151
    %v2277 = vunpack.c.l.b16 %v2152
    %v2278 = vunpack.c.h.b16 %v2152
    %v2279 = vunpack.c.l.b16 %v2153
    %v2280 = vunpack.c.h.b16 %v2153
    %v2281 = vunpack.c.l.b16 %v2154
    %v2282 = vunpack.c.h.b16 %v2154
    %v2283 = vunpack.c.l.b16 %v2155
    %v2284 = vunpack.c.h.b16 %v2155
    %v2285 = vunpack.c.l.b16 %v2156
    %v2286 = vunpack.c.h.b16 %v2156
    %v2287 = vunpack.c.l.b16 %v2157
    %v2288 = vunpack.c.h.b16 %v2157
    %v2289 = vunpack.c.l.b16 %v2158
    %v2290 = vunpack.c.h.b16 %v2158
    %v2291 = vunpack.c.l.b16 %v2159
    %v2292 = vunpack.c.h.b16 %v2159
    %v2293 = vunpack.c.l.b16 %v2160
    %v2294 = vunpack.c.h.b16 %v2160
    %v2295 = vunpack.c.l.b16 %v2161
    %v2296 = vunpack.c.h.b16 %v2161
    %v2297 = vunpack.c.l.b16 %v2162
    %v2298 = vunpack.c.h.b16 %v2162
    %v2299 = vunpack.c.l.b16 %v2163
    %v2300 = vunpack.c.h.b16 %v2163
    %v2301 = vunpack.c.l.b16 %v2164
    %v2302 = vunpack.c.h.b16 %v2164
    %v2303 = vunpack.c.l.b16 %v2165
    %v2304 = vunpack.c.h.b16 %v2165
    %v2305 = vunpack.c.l.b16 %v2166
    %v2306 = vunpack.c.h.b16 %v2166
    %v2307 = vpack.c.b16 %v2245, %v2243
    %v2308 = vpack.c.b16 %v2246, %v2244
    %v2309 = vpack.c.b16 %v2249, %v2247
    %v2310 = vpack.c.b16 %v2250, %v2248
    %v2311 = vpack.c.b16 %v2253, %v2251
    %v2312 = vpack.c.b16 %v2254, %v2252
    %v2313 = vpack.c.b16 %v2257, %v2255
    %v2314 = vpack.c.b16 %v2258, %v2256
    %v2315 = vpack.c.b16 %v2261, %v2259
    %v2316 = vpack.c.b16 %v2262, %v2260
    %v2317 = vpack.c.b16 %v2265, %v2263
    %v2318 = vpack.c.b16 %v2266, %v2264
    %v2319 = vpack.c.b16 %v2269, %v2267
    %v2320 = vpack.c.b16 %v2270, %v2268
    %v2321 = vpack.c.b16 %v2273, %v2271
    %v2322 = vpack.c.b16 %v2274, %v2272
    %v2323 = vpack.c.b16 %v2277, %v2275
    %v2324 = vpack.c.b16 %v2278, %v2276
    %v2325 = vpack.c.b16 %v2281, %v2279
    %v2326 = vpack.c.b16 %v2282, %v2280
    %v2327 = vpack.c.b16 %v2285, %v2283
    %v2328 = vpack.c.b16 %v2286, %v2284
    %v2329 = vpack.c.b16 %v2289, %v2287
    %v2330 = vpack.c.b16 %v2290, %v2288
    %v2331 = vpack.c.b16 %v2293, %v2291
    %v2332 = vpack.c.b16 %v2294, %v2292
    %v2333 = vpack.c.b16 %v2297, %v2295
    %v2334 = vpack.c.b16 %v2298, %v2296
    %v2335 = vpack.c.b16 %v2301, %v2299
    %v2336 = vpack.c.b16 %v2302, %v2300
    %v2337 = vpack.c.b16 %v2305, %v2303
    %v2338 = vpack.c.b16 %v2306, %v2304
    %2371 = vmatprep.subr.bf16.mxu0 %v2322
    %2372 = vmatpush1.bf16.msra.mxu0 %v2321
    %2373 = vmatprep.subr.bf16.mxu0 %v2320
    %2374 = vmatpush1.bf16.msra.mxu0 %v2319
    %2375 = vmatprep.subr.bf16.mxu0 %v2318
    %2376 = vmatpush1.bf16.msra.mxu0 %v2317
    %2377 = vmatprep.subr.bf16.mxu0 %v2316
    %2378 = vmatpush1.bf16.msra.mxu0 %v2315
    %2379 = vmatprep.subr.bf16.mxu0 %v2314
    %2380 = vmatpush1.bf16.msra.mxu0 %v2313
    %2381 = vmatprep.subr.bf16.mxu0 %v2312
    %2382 = vmatpush1.bf16.msra.mxu0 %v2311
    %2383 = vmatprep.subr.bf16.mxu0 %v2310
    %2384 = vmatpush1.bf16.msra.mxu0 %v2309
    %2385 = vmatprep.subr.bf16.mxu0 %v2308
    %2386 = vmatpush1.bf16.msra.mxu0 %v2307
    %2387 = vmatprep.subr.bf16.mxu0 %v2338
    %2388 = vmatpush2.bf16.msra.mxu0 %v2337
    %2389 = vmatprep.subr.bf16.mxu0 %v2336
    %2390 = vmatpush2.bf16.msra.mxu0 %v2335
    %2391 = vmatprep.subr.bf16.mxu0 %v2334
    %2392 = vmatpush2.bf16.msra.mxu0 %v2333
    %2393 = vmatprep.subr.bf16.mxu0 %v2332
    %2394 = vmatpush2.bf16.msra.mxu0 %v2331
    %2395 = vmatprep.subr.bf16.mxu0 %v2330
    %2396 = vmatpush2.bf16.msra.mxu0 %v2329
    %2397 = vmatprep.subr.bf16.mxu0 %v2328
    %2398 = vmatpush2.bf16.msra.mxu0 %v2327
    %2399 = vmatprep.subr.bf16.mxu0 %v2326
    %2400 = vmatpush2.bf16.msra.mxu0 %v2325
    %2401 = vmatprep.subr.bf16.mxu0 %v2324
    %2402 = vmatpush2.bf16.msra.mxu0 %v2323
    %2403 = vmatprep.mubr.bf16.mxu0 %v2169
    %2404 = vmatmul.mubr.bf16.gmra.mxu0 %v2168
    %v2405 = vpop.f32.mrf.mxu0
    %v2406 = vadd.f32 %v2204, %v2405
    %v2407 = vpop.f32.mrf.mxu0
    %v2408 = vadd.f32 %v2208, %v2407
    %v2409 = vpop.f32.mrf.mxu0
    %v2410 = vadd.f32 %v2204, %v2409
    %v2411 = vpop.f32.mrf.mxu0
    %v2412 = vadd.f32 %v2208, %v2411
    %2413 = vmatprep.mubr.bf16.mxu0 %v2171
    %2414 = vmatmul.mubr.bf16.gmra.mxu0 %v2170
    %v2415 = vpop.f32.mrf.mxu0
    %v2416 = vadd.f32 %v2204, %v2415
    %v2417 = vpop.f32.mrf.mxu0
    %v2418 = vadd.f32 %v2208, %v2417
    %v2419 = vpop.f32.mrf.mxu0
    %v2420 = vadd.f32 %v2204, %v2419
    %v2421 = vpop.f32.mrf.mxu0
    %v2422 = vadd.f32 %v2208, %v2421
    %2423 = vmatprep.mubr.bf16.mxu0 %v2173
    %2424 = vmatmul.mubr.bf16.gmra.mxu0 %v2172
    %v2425 = vpop.f32.mrf.mxu0
    %v2426 = vadd.f32 %v2204, %v2425
    %v2427 = vpop.f32.mrf.mxu0
    %v2428 = vadd.f32 %v2208, %v2427
    %v2429 = vpop.f32.mrf.mxu0
    %v2430 = vadd.f32 %v2204, %v2429
    %v2431 = vpop.f32.mrf.mxu0
    %v2432 = vadd.f32 %v2208, %v2431
    %2433 = vmatprep.mubr.bf16.mxu0 %v2175
    %2434 = vmatmul.mubr.bf16.gmra.mxu0 %v2174
    %v2435 = vpop.f32.mrf.mxu0
    %v2436 = vadd.f32 %v2204, %v2435
    %v2437 = vpop.f32.mrf.mxu0
    %v2438 = vadd.f32 %v2208, %v2437
    %v2439 = vpop.f32.mrf.mxu0
    %v2440 = vadd.f32 %v2204, %v2439
    %v2441 = vpop.f32.mrf.mxu0
    %v2442 = vadd.f32 %v2208, %v2441
    %2443 = vmatprep.mubr.bf16.mxu0 %v2177
    %2444 = vmatmul.mubr.bf16.gmra.mxu0 %v2176
    %v2445 = vpop.f32.mrf.mxu0
    %v2446 = vadd.f32 %v2204, %v2445
    %v2447 = vpop.f32.mrf.mxu0
    %v2448 = vadd.f32 %v2208, %v2447
    %v2449 = vpop.f32.mrf.mxu0
    %v2450 = vadd.f32 %v2204, %v2449
    %v2451 = vpop.f32.mrf.mxu0
    %v2452 = vadd.f32 %v2208, %v2451
    %2453 = vmatprep.mubr.bf16.mxu0 %v2179
    %2454 = vmatmul.mubr.bf16.gmra.mxu0 %v2178
    %v2455 = vpop.f32.mrf.mxu0
    %v2456 = vadd.f32 %v2204, %v2455
    %v2457 = vpop.f32.mrf.mxu0
    %v2458 = vadd.f32 %v2208, %v2457
    %v2459 = vpop.f32.mrf.mxu0
    %v2460 = vadd.f32 %v2204, %v2459
    %v2461 = vpop.f32.mrf.mxu0
    %v2462 = vadd.f32 %v2208, %v2461
    %2463 = vmatprep.mubr.bf16.mxu0 %v2181
    %2464 = vmatmul.mubr.bf16.gmra.mxu0 %v2180
    %v2465 = vpop.f32.mrf.mxu0
    %v2466 = vadd.f32 %v2204, %v2465
    %v2467 = vpop.f32.mrf.mxu0
    %v2468 = vadd.f32 %v2208, %v2467
    %v2469 = vpop.f32.mrf.mxu0
    %v2470 = vadd.f32 %v2204, %v2469
    %v2471 = vpop.f32.mrf.mxu0
    %v2472 = vadd.f32 %v2208, %v2471
    %2473 = vmatprep.mubr.bf16.mxu0 %v2183
    %2474 = vmatmul.mubr.bf16.gmra.mxu0 %v2182
    %v2475 = vpop.f32.mrf.mxu0
    %v2476 = vadd.f32 %v2204, %v2475
    %v2477 = vpop.f32.mrf.mxu0
    %v2478 = vadd.f32 %v2208, %v2477
    %v2479 = vpop.f32.mrf.mxu0
    %v2480 = vadd.f32 %v2204, %v2479
    %v2481 = vpop.f32.mrf.mxu0
    %v2482 = vadd.f32 %v2208, %v2481
    %2483 = vmatprep.mubr.bf16.mxu0 %v2185
    %2484 = vmatmul.mubr.bf16.gmra.mxu0 %v2184
    %v2485 = vpop.f32.mrf.mxu0
    %v2486 = vadd.f32 %v2204, %v2485
    %v2487 = vpop.f32.mrf.mxu0
    %v2488 = vadd.f32 %v2208, %v2487
    %v2489 = vpop.f32.mrf.mxu0
    %v2490 = vadd.f32 %v2204, %v2489
    %v2491 = vpop.f32.mrf.mxu0
    %v2492 = vadd.f32 %v2208, %v2491
    %2493 = vmatprep.mubr.bf16.mxu0 %v2187
    %2494 = vmatmul.mubr.bf16.gmra.mxu0 %v2186
    %v2495 = vpop.f32.mrf.mxu0
    %v2496 = vadd.f32 %v2204, %v2495
    %v2497 = vpop.f32.mrf.mxu0
    %v2498 = vadd.f32 %v2208, %v2497
    %v2499 = vpop.f32.mrf.mxu0
    %v2500 = vadd.f32 %v2204, %v2499
    %v2501 = vpop.f32.mrf.mxu0
    %v2502 = vadd.f32 %v2208, %v2501
    %2503 = vmatprep.mubr.bf16.mxu0 %v2189
    %2504 = vmatmul.mubr.bf16.gmra.mxu0 %v2188
    %v2505 = vpop.f32.mrf.mxu0
    %v2506 = vadd.f32 %v2204, %v2505
    %v2507 = vpop.f32.mrf.mxu0
    %v2508 = vadd.f32 %v2208, %v2507
    %v2509 = vpop.f32.mrf.mxu0
    %v2510 = vadd.f32 %v2204, %v2509
    %v2511 = vpop.f32.mrf.mxu0
    %v2512 = vadd.f32 %v2208, %v2511
    %2513 = vmatprep.mubr.bf16.mxu0 %v2191
    %2514 = vmatmul.mubr.bf16.gmra.mxu0 %v2190
    %v2515 = vpop.f32.mrf.mxu0
    %v2516 = vadd.f32 %v2204, %v2515
    %v2517 = vpop.f32.mrf.mxu0
    %v2518 = vadd.f32 %v2208, %v2517
    %v2519 = vpop.f32.mrf.mxu0
    %v2520 = vadd.f32 %v2204, %v2519
    %v2521 = vpop.f32.mrf.mxu0
    %v2522 = vadd.f32 %v2208, %v2521
    %2523 = vmatprep.mubr.bf16.mxu0 %v2193
    %2524 = vmatmul.mubr.bf16.gmra.mxu0 %v2192
    %v2525 = vpop.f32.mrf.mxu0
    %v2526 = vadd.f32 %v2204, %v2525
    %v2527 = vpop.f32.mrf.mxu0
    %v2528 = vadd.f32 %v2208, %v2527
    %v2529 = vpop.f32.mrf.mxu0
    %v2530 = vadd.f32 %v2204, %v2529
    %v2531 = vpop.f32.mrf.mxu0
    %v2532 = vadd.f32 %v2208, %v2531
    %2533 = vmatprep.mubr.bf16.mxu0 %v2195
    %2534 = vmatmul.mubr.bf16.gmra.mxu0 %v2194
    %v2535 = vpop.f32.mrf.mxu0
    %v2536 = vadd.f32 %v2204, %v2535
    %v2537 = vpop.f32.mrf.mxu0
    %v2538 = vadd.f32 %v2208, %v2537
    %v2539 = vpop.f32.mrf.mxu0
    %v2540 = vadd.f32 %v2204, %v2539
    %v2541 = vpop.f32.mrf.mxu0
    %v2542 = vadd.f32 %v2208, %v2541
    %2543 = vmatprep.mubr.bf16.mxu0 %v2197
    %2544 = vmatmul.mubr.bf16.gmra.mxu0 %v2196
    %v2545 = vpop.f32.mrf.mxu0
    %v2546 = vadd.f32 %v2204, %v2545
    %v2547 = vpop.f32.mrf.mxu0
    %v2548 = vadd.f32 %v2208, %v2547
    %v2549 = vpop.f32.mrf.mxu0
    %v2550 = vadd.f32 %v2204, %v2549
    %v2551 = vpop.f32.mrf.mxu0
    %v2552 = vadd.f32 %v2208, %v2551
    %2553 = vmatprep.mubr.bf16.mxu0 %v2199
    %2554 = vmatmul.mubr.bf16.gmra.mxu0 %v2198
    %v2555 = vpop.f32.mrf.mxu0
    %v2556 = vadd.f32 %v2204, %v2555
    %v2557 = vpop.f32.mrf.mxu0
    %v2558 = vadd.f32 %v2208, %v2557
    %v2559 = vpop.f32.mrf.mxu0
    %v2560 = vadd.f32 %v2204, %v2559
    %v2561 = vpop.f32.mrf.mxu0
    %v2562 = vadd.f32 %v2208, %v2561
    %2563 = vdwg.mxu0
    %v2564 = vmax.f32 %v2406, 0.0
    %v2565 = vmax.f32 %v2408, 0.0
    %v2566 = vmax.f32 %v2410, 0.0
    %v2567 = vmax.f32 %v2412, 0.0
    %v2568 = vmax.f32 %v2416, 0.0
    %v2569 = vmax.f32 %v2418, 0.0
    %v2570 = vmax.f32 %v2420, 0.0
    %v2571 = vmax.f32 %v2422, 0.0
    %v2572 = vmax.f32 %v2426, 0.0
    %v2573 = vmax.f32 %v2428, 0.0
    %v2574 = vmax.f32 %v2430, 0.0
    %v2575 = vmax.f32 %v2432, 0.0
    %v2576 = vmax.f32 %v2436, 0.0
    %v2577 = vmax.f32 %v2438, 0.0
    %v2578 = vmax.f32 %v2440, 0.0
    %v2579 = vmax.f32 %v2442, 0.0
    %v2580 = vmax.f32 %v2446, 0.0
    %v2581 = vmax.f32 %v2448, 0.0
    %v2582 = vmax.f32 %v2450, 0.0
    %v2583 = vmax.f32 %v2452, 0.0
    %v2584 = vmax.f32 %v2456, 0.0
    %v2585 = vmax.f32 %v2458, 0.0
    %v2586 = vmax.f32 %v2460, 0.0
    %v2587 = vmax.f32 %v2462, 0.0
    %v2588 = vmax.f32 %v2466, 0.0
    %v2589 = vmax.f32 %v2468, 0.0
    %v2590 = vmax.f32 %v2470, 0.0
    %v2591 = vmax.f32 %v2472, 0.0
    %v2592 = vmax.f32 %v2476, 0.0
    %v2593 = vmax.f32 %v2478, 0.0
    %v2594 = vmax.f32 %v2480, 0.0
    %v2595 = vmax.f32 %v2482, 0.0
    %v2596 = vmax.f32 %v2486, 0.0
    %v2597 = vmax.f32 %v2488, 0.0
    %v2598 = vmax.f32 %v2490, 0.0
    %v2599 = vmax.f32 %v2492, 0.0
    %v2600 = vmax.f32 %v2496, 0.0
    %v2601 = vmax.f32 %v2498, 0.0
    %v2602 = vmax.f32 %v2500, 0.0
    %v2603 = vmax.f32 %v2502, 0.0
    %v2604 = vmax.f32 %v2506, 0.0
    %v2605 = vmax.f32 %v2508, 0.0
    %v2606 = vmax.f32 %v2510, 0.0
    %v2607 = vmax.f32 %v2512, 0.0
    %v2608 = vmax.f32 %v2516, 0.0
    %v2609 = vmax.f32 %v2518, 0.0
    %v2610 = vmax.f32 %v2520, 0.0
    %v2611 = vmax.f32 %v2522, 0.0
    %v2612 = vmax.f32 %v2526, 0.0
    %v2613 = vmax.f32 %v2528, 0.0
    %v2614 = vmax.f32 %v2530, 0.0
    %v2615 = vmax.f32 %v2532, 0.0
    %v2616 = vmax.f32 %v2536, 0.0
    %v2617 = vmax.f32 %v2538, 0.0
    %v2618 = vmax.f32 %v2540, 0.0
    %v2619 = vmax.f32 %v2542, 0.0
    %v2620 = vmax.f32 %v2546, 0.0
    %v2621 = vmax.f32 %v2548, 0.0
    %v2622 = vmax.f32 %v2550, 0.0
    %v2623 = vmax.f32 %v2552, 0.0
    %v2624 = vmax.f32 %v2556, 0.0
    %v2625 = vmax.f32 %v2558, 0.0
    %v2626 = vmax.f32 %v2560, 0.0
    %v2627 = vmax.f32 %v2562, 0.0
    %v2628 = vld [vmem:[#allocation10] sm:$0xff]
    %v2629 = vld [vmem:[#allocation10 + $0x8] sm:$0xff]
    %v2630 = vld [vmem:[#allocation10 + $0x10] sm:$0xff]
    %v2631 = vld [vmem:[#allocation10 + $0x18] sm:$0xff]
    %v2632 = vld [vmem:[#allocation10 + $0x20] sm:$0xff]
    %v2633 = vld [vmem:[#allocation10 + $0x28] sm:$0xff]
    %v2634 = vld [vmem:[#allocation10 + $0x30] sm:$0xff]
    %v2635 = vld [vmem:[#allocation10 + $0x38] sm:$0xff]
    %v2636 = vld [vmem:[#allocation10 + $0x40] sm:$0xff]
    %v2637 = vld [vmem:[#allocation10 + $0x48] sm:$0xff]
    %v2638 = vld [vmem:[#allocation10 + $0x50] sm:$0xff]
    %v2639 = vld [vmem:[#allocation10 + $0x58] sm:$0xff]
    %v2640 = vld [vmem:[#allocation10 + $0x60] sm:$0xff]
    %v2641 = vld [vmem:[#allocation10 + $0x68] sm:$0xff]
    %v2642 = vld [vmem:[#allocation10 + $0x70] sm:$0xff]
    %v2643 = vld [vmem:[#allocation10 + $0x78] sm:$0xff]
    %v2644 = vld [vmem:[#allocation10 + $0x80] sm:$0xff]
    %v2645 = vld [vmem:[#allocation10 + $0x88] sm:$0xff]
    %v2646 = vld [vmem:[#allocation10 + $0x90] sm:$0xff]
    %v2647 = vld [vmem:[#allocation10 + $0x98] sm:$0xff]
    %v2648 = vld [vmem:[#allocation10 + $0xa0] sm:$0xff]
    %v2649 = vld [vmem:[#allocation10 + $0xa8] sm:$0xff]
    %v2650 = vld [vmem:[#allocation10 + $0xb0] sm:$0xff]
    %v2651 = vld [vmem:[#allocation10 + $0xb8] sm:$0xff]
    %v2652 = vld [vmem:[#allocation10 + $0xc0] sm:$0xff]
    %v2653 = vld [vmem:[#allocation10 + $0xc8] sm:$0xff]
    %v2654 = vld [vmem:[#allocation10 + $0xd0] sm:$0xff]
    %v2655 = vld [vmem:[#allocation10 + $0xd8] sm:$0xff]
    %v2656 = vld [vmem:[#allocation10 + $0xe0] sm:$0xff]
    %v2657 = vld [vmem:[#allocation10 + $0xe8] sm:$0xff]
    %v2658 = vld [vmem:[#allocation10 + $0xf0] sm:$0xff]
    %v2659 = vld [vmem:[#allocation10 + $0xf8] sm:$0xff]
    %v2660 = vld [vmem:[%s10] sm:$0x3]
    %v2661 = vpack.c.bf16 %v2566, %v2564
    %v2662 = vpack.c.bf16 %v2567, %v2565
    %v2663 = vpack.c.bf16 %v2570, %v2568
    %v2664 = vpack.c.bf16 %v2571, %v2569
    %v2665 = vpack.c.bf16 %v2574, %v2572
    %v2666 = vpack.c.bf16 %v2575, %v2573
    %v2667 = vpack.c.bf16 %v2578, %v2576
    %v2668 = vpack.c.bf16 %v2579, %v2577
    %v2669 = vpack.c.bf16 %v2582, %v2580
    %v2670 = vpack.c.bf16 %v2583, %v2581
    %v2671 = vpack.c.bf16 %v2586, %v2584
    %v2672 = vpack.c.bf16 %v2587, %v2585
    %v2673 = vpack.c.bf16 %v2590, %v2588
    %v2674 = vpack.c.bf16 %v2591, %v2589
    %v2675 = vpack.c.bf16 %v2594, %v2592
    %v2676 = vpack.c.bf16 %v2595, %v2593
    %v2677 = vpack.c.bf16 %v2598, %v2596
    %v2678 = vpack.c.bf16 %v2599, %v2597
    %v2679 = vpack.c.bf16 %v2602, %v2600
    %v2680 = vpack.c.bf16 %v2603, %v2601
    %v2681 = vpack.c.bf16 %v2606, %v2604
    %v2682 = vpack.c.bf16 %v2607, %v2605
    %v2683 = vpack.c.bf16 %v2610, %v2608
    %v2684 = vpack.c.bf16 %v2611, %v2609
    %v2685 = vpack.c.bf16 %v2614, %v2612
    %v2686 = vpack.c.bf16 %v2615, %v2613
    %v2687 = vpack.c.bf16 %v2618, %v2616
    %v2688 = vpack.c.bf16 %v2619, %v2617
    %v2689 = vpack.c.bf16 %v2622, %v2620
    %v2690 = vpack.c.bf16 %v2623, %v2621
    %v2691 = vpack.c.bf16 %v2626, %v2624
    %v2692 = vpack.c.bf16 %v2627, %v2625
    %v2694 = vlaneseq
    %v2695 = vshrl.u32 %v2694, 7
    %v2696 = vsub.s32 0, %v2695
    %v2697 = vrot.slane %v2660, %v2696
    %v2698 = vlaneseq
    %v2699 = vshrl.u32 %v2698, 7
    %v2700 = vsub.s32 1, %v2699
    %v2701 = vrot.slane %v2660, %v2700
    %v2736 = vunpack.c.l.b16 %v2628
    %v2737 = vunpack.c.h.b16 %v2628
    %v2738 = vunpack.c.l.b16 %v2629
    %v2739 = vunpack.c.h.b16 %v2629
    %v2740 = vunpack.c.l.b16 %v2630
    %v2741 = vunpack.c.h.b16 %v2630
    %v2742 = vunpack.c.l.b16 %v2631
    %v2743 = vunpack.c.h.b16 %v2631
    %v2744 = vunpack.c.l.b16 %v2632
    %v2745 = vunpack.c.h.b16 %v2632
    %v2746 = vunpack.c.l.b16 %v2633
    %v2747 = vunpack.c.h.b16 %v2633
    %v2748 = vunpack.c.l.b16 %v2634
    %v2749 = vunpack.c.h.b16 %v2634
    %v2750 = vunpack.c.l.b16 %v2635
    %v2751 = vunpack.c.h.b16 %v2635
    %v2752 = vunpack.c.l.b16 %v2636
    %v2753 = vunpack.c.h.b16 %v2636
    %v2754 = vunpack.c.l.b16 %v2637
    %v2755 = vunpack.c.h.b16 %v2637
    %v2756 = vunpack.c.l.b16 %v2638
    %v2757 = vunpack.c.h.b16 %v2638
    %v2758 = vunpack.c.l.b16 %v2639
    %v2759 = vunpack.c.h.b16 %v2639
    %v2760 = vunpack.c.l.b16 %v2640
    %v2761 = vunpack.c.h.b16 %v2640
    %v2762 = vunpack.c.l.b16 %v2641
    %v2763 = vunpack.c.h.b16 %v2641
    %v2764 = vunpack.c.l.b16 %v2642
    %v2765 = vunpack.c.h.b16 %v2642
    %v2766 = vunpack.c.l.b16 %v2643
    %v2767 = vunpack.c.h.b16 %v2643
    %v2768 = vunpack.c.l.b16 %v2644
    %v2769 = vunpack.c.h.b16 %v2644
    %v2770 = vunpack.c.l.b16 %v2645
    %v2771 = vunpack.c.h.b16 %v2645
    %v2772 = vunpack.c.l.b16 %v2646
    %v2773 = vunpack.c.h.b16 %v2646
    %v2774 = vunpack.c.l.b16 %v2647
    %v2775 = vunpack.c.h.b16 %v2647
    %v2776 = vunpack.c.l.b16 %v2648
    %v2777 = vunpack.c.h.b16 %v2648
    %v2778 = vunpack.c.l.b16 %v2649
    %v2779 = vunpack.c.h.b16 %v2649
    %v2780 = vunpack.c.l.b16 %v2650
    %v2781 = vunpack.c.h.b16 %v2650
    %v2782 = vunpack.c.l.b16 %v2651
    %v2783 = vunpack.c.h.b16 %v2651
    %v2784 = vunpack.c.l.b16 %v2652
    %v2785 = vunpack.c.h.b16 %v2652
    %v2786 = vunpack.c.l.b16 %v2653
    %v2787 = vunpack.c.h.b16 %v2653
    %v2788 = vunpack.c.l.b16 %v2654
    %v2789 = vunpack.c.h.b16 %v2654
    %v2790 = vunpack.c.l.b16 %v2655
    %v2791 = vunpack.c.h.b16 %v2655
    %v2792 = vunpack.c.l.b16 %v2656
    %v2793 = vunpack.c.h.b16 %v2656
    %v2794 = vunpack.c.l.b16 %v2657
    %v2795 = vunpack.c.h.b16 %v2657
    %v2796 = vunpack.c.l.b16 %v2658
    %v2797 = vunpack.c.h.b16 %v2658
    %v2798 = vunpack.c.l.b16 %v2659
    %v2799 = vunpack.c.h.b16 %v2659
    %v2800 = vpack.c.b16 %v2738, %v2736
    %v2801 = vpack.c.b16 %v2739, %v2737
    %v2802 = vpack.c.b16 %v2742, %v2740
    %v2803 = vpack.c.b16 %v2743, %v2741
    %v2804 = vpack.c.b16 %v2746, %v2744
    %v2805 = vpack.c.b16 %v2747, %v2745
    %v2806 = vpack.c.b16 %v2750, %v2748
    %v2807 = vpack.c.b16 %v2751, %v2749
    %v2808 = vpack.c.b16 %v2754, %v2752
    %v2809 = vpack.c.b16 %v2755, %v2753
    %v2810 = vpack.c.b16 %v2758, %v2756
    %v2811 = vpack.c.b16 %v2759, %v2757
    %v2812 = vpack.c.b16 %v2762, %v2760
    %v2813 = vpack.c.b16 %v2763, %v2761
    %v2814 = vpack.c.b16 %v2766, %v2764
    %v2815 = vpack.c.b16 %v2767, %v2765
    %v2816 = vpack.c.b16 %v2770, %v2768
    %v2817 = vpack.c.b16 %v2771, %v2769
    %v2818 = vpack.c.b16 %v2774, %v2772
    %v2819 = vpack.c.b16 %v2775, %v2773
    %v2820 = vpack.c.b16 %v2778, %v2776
    %v2821 = vpack.c.b16 %v2779, %v2777
    %v2822 = vpack.c.b16 %v2782, %v2780
    %v2823 = vpack.c.b16 %v2783, %v2781
    %v2824 = vpack.c.b16 %v2786, %v2784
    %v2825 = vpack.c.b16 %v2787, %v2785
    %v2826 = vpack.c.b16 %v2790, %v2788
    %v2827 = vpack.c.b16 %v2791, %v2789
    %v2828 = vpack.c.b16 %v2794, %v2792
    %v2829 = vpack.c.b16 %v2795, %v2793
    %v2830 = vpack.c.b16 %v2798, %v2796
    %v2831 = vpack.c.b16 %v2799, %v2797
    %2864 = vmatprep.subr.bf16.mxu0 %v2815
    %2865 = vmatpush1.bf16.msra.mxu0 %v2814
    %2866 = vmatprep.subr.bf16.mxu0 %v2813
    %2867 = vmatpush1.bf16.msra.mxu0 %v2812
    %2868 = vmatprep.subr.bf16.mxu0 %v2811
    %2869 = vmatpush1.bf16.msra.mxu0 %v2810
    %2870 = vmatprep.subr.bf16.mxu0 %v2809
    %2871 = vmatpush1.bf16.msra.mxu0 %v2808
    %2872 = vmatprep.subr.bf16.mxu0 %v2807
    %2873 = vmatpush1.bf16.msra.mxu0 %v2806
    %2874 = vmatprep.subr.bf16.mxu0 %v2805
    %2875 = vmatpush1.bf16.msra.mxu0 %v2804
    %2876 = vmatprep.subr.bf16.mxu0 %v2803
    %2877 = vmatpush1.bf16.msra.mxu0 %v2802
    %2878 = vmatprep.subr.bf16.mxu0 %v2801
    %2879 = vmatpush1.bf16.msra.mxu0 %v2800
    %2880 = vmatprep.subr.bf16.mxu0 %v2831
    %2881 = vmatpush2.bf16.msra.mxu0 %v2830
    %2882 = vmatprep.subr.bf16.mxu0 %v2829
    %2883 = vmatpush2.bf16.msra.mxu0 %v2828
    %2884 = vmatprep.subr.bf16.mxu0 %v2827
    %2885 = vmatpush2.bf16.msra.mxu0 %v2826
    %2886 = vmatprep.subr.bf16.mxu0 %v2825
    %2887 = vmatpush2.bf16.msra.mxu0 %v2824
    %2888 = vmatprep.subr.bf16.mxu0 %v2823
    %2889 = vmatpush2.bf16.msra.mxu0 %v2822
    %2890 = vmatprep.subr.bf16.mxu0 %v2821
    %2891 = vmatpush2.bf16.msra.mxu0 %v2820
    %2892 = vmatprep.subr.bf16.mxu0 %v2819
    %2893 = vmatpush2.bf16.msra.mxu0 %v2818
    %2894 = vmatprep.subr.bf16.mxu0 %v2817
    %2895 = vmatpush2.bf16.msra.mxu0 %v2816
    %2896 = vmatprep.mubr.bf16.mxu0 %v2662
    %2897 = vmatmul.mubr.bf16.gmra.mxu0 %v2661
    %v2898 = vpop.f32.mrf.mxu0
    %v2899 = vadd.f32 %v2697, %v2898
    %v2900 = vpop.f32.mrf.mxu0
    %v2901 = vadd.f32 %v2701, %v2900
    %v2902 = vpop.f32.mrf.mxu0
    %v2903 = vadd.f32 %v2697, %v2902
    %v2904 = vpop.f32.mrf.mxu0
    %v2905 = vadd.f32 %v2701, %v2904
    %2906 = vmatprep.mubr.bf16.mxu0 %v2664
    %2907 = vmatmul.mubr.bf16.gmra.mxu0 %v2663
    %v2908 = vpop.f32.mrf.mxu0
    %v2909 = vadd.f32 %v2697, %v2908
    %v2910 = vpop.f32.mrf.mxu0
    %v2911 = vadd.f32 %v2701, %v2910
    %v2912 = vpop.f32.mrf.mxu0
    %v2913 = vadd.f32 %v2697, %v2912
    %v2914 = vpop.f32.mrf.mxu0
    %v2915 = vadd.f32 %v2701, %v2914
    %2916 = vmatprep.mubr.bf16.mxu0 %v2666
    %2917 = vmatmul.mubr.bf16.gmra.mxu0 %v2665
    %v2918 = vpop.f32.mrf.mxu0
    %v2919 = vadd.f32 %v2697, %v2918
    %v2920 = vpop.f32.mrf.mxu0
    %v2921 = vadd.f32 %v2701, %v2920
    %v2922 = vpop.f32.mrf.mxu0
    %v2923 = vadd.f32 %v2697, %v2922
    %v2924 = vpop.f32.mrf.mxu0
    %v2925 = vadd.f32 %v2701, %v2924
    %2926 = vmatprep.mubr.bf16.mxu0 %v2668
    %2927 = vmatmul.mubr.bf16.gmra.mxu0 %v2667
    %v2928 = vpop.f32.mrf.mxu0
    %v2929 = vadd.f32 %v2697, %v2928
    %v2930 = vpop.f32.mrf.mxu0
    %v2931 = vadd.f32 %v2701, %v2930
    %v2932 = vpop.f32.mrf.mxu0
    %v2933 = vadd.f32 %v2697, %v2932
    %v2934 = vpop.f32.mrf.mxu0
    %v2935 = vadd.f32 %v2701, %v2934
    %2936 = vmatprep.mubr.bf16.mxu0 %v2670
    %2937 = vmatmul.mubr.bf16.gmra.mxu0 %v2669
    %v2938 = vpop.f32.mrf.mxu0
    %v2939 = vadd.f32 %v2697, %v2938
    %v2940 = vpop.f32.mrf.mxu0
    %v2941 = vadd.f32 %v2701, %v2940
    %v2942 = vpop.f32.mrf.mxu0
    %v2943 = vadd.f32 %v2697, %v2942
    %v2944 = vpop.f32.mrf.mxu0
    %v2945 = vadd.f32 %v2701, %v2944
    %2946 = vmatprep.mubr.bf16.mxu0 %v2672
    %2947 = vmatmul.mubr.bf16.gmra.mxu0 %v2671
    %v2948 = vpop.f32.mrf.mxu0
    %v2949 = vadd.f32 %v2697, %v2948
    %v2950 = vpop.f32.mrf.mxu0
    %v2951 = vadd.f32 %v2701, %v2950
    %v2952 = vpop.f32.mrf.mxu0
    %v2953 = vadd.f32 %v2697, %v2952
    %v2954 = vpop.f32.mrf.mxu0
    %v2955 = vadd.f32 %v2701, %v2954
    %2956 = vmatprep.mubr.bf16.mxu0 %v2674
    %2957 = vmatmul.mubr.bf16.gmra.mxu0 %v2673
    %v2958 = vpop.f32.mrf.mxu0
    %v2959 = vadd.f32 %v2697, %v2958
    %v2960 = vpop.f32.mrf.mxu0
    %v2961 = vadd.f32 %v2701, %v2960
    %v2962 = vpop.f32.mrf.mxu0
    %v2963 = vadd.f32 %v2697, %v2962
    %v2964 = vpop.f32.mrf.mxu0
    %v2965 = vadd.f32 %v2701, %v2964
    %2966 = vmatprep.mubr.bf16.mxu0 %v2676
    %2967 = vmatmul.mubr.bf16.gmra.mxu0 %v2675
    %v2968 = vpop.f32.mrf.mxu0
    %v2969 = vadd.f32 %v2697, %v2968
    %v2970 = vpop.f32.mrf.mxu0
    %v2971 = vadd.f32 %v2701, %v2970
    %v2972 = vpop.f32.mrf.mxu0
    %v2973 = vadd.f32 %v2697, %v2972
    %v2974 = vpop.f32.mrf.mxu0
    %v2975 = vadd.f32 %v2701, %v2974
    %2976 = vmatprep.mubr.bf16.mxu0 %v2678
    %2977 = vmatmul.mubr.bf16.gmra.mxu0 %v2677
    %v2978 = vpop.f32.mrf.mxu0
    %v2979 = vadd.f32 %v2697, %v2978
    %v2980 = vpop.f32.mrf.mxu0
    %v2981 = vadd.f32 %v2701, %v2980
    %v2982 = vpop.f32.mrf.mxu0
    %v2983 = vadd.f32 %v2697, %v2982
    %v2984 = vpop.f32.mrf.mxu0
    %v2985 = vadd.f32 %v2701, %v2984
    %2986 = vmatprep.mubr.bf16.mxu0 %v2680
    %2987 = vmatmul.mubr.bf16.gmra.mxu0 %v2679
    %v2988 = vpop.f32.mrf.mxu0
    %v2989 = vadd.f32 %v2697, %v2988
    %v2990 = vpop.f32.mrf.mxu0
    %v2991 = vadd.f32 %v2701, %v2990
    %v2992 = vpop.f32.mrf.mxu0
    %v2993 = vadd.f32 %v2697, %v2992
    %v2994 = vpop.f32.mrf.mxu0
    %v2995 = vadd.f32 %v2701, %v2994
    %2996 = vmatprep.mubr.bf16.mxu0 %v2682
    %2997 = vmatmul.mubr.bf16.gmra.mxu0 %v2681
    %v2998 = vpop.f32.mrf.mxu0
    %v2999 = vadd.f32 %v2697, %v2998
    %v3000 = vpop.f32.mrf.mxu0
    %v3001 = vadd.f32 %v2701, %v3000
    %v3002 = vpop.f32.mrf.mxu0
    %v3003 = vadd.f32 %v2697, %v3002
    %v3004 = vpop.f32.mrf.mxu0
    %v3005 = vadd.f32 %v2701, %v3004
    %3006 = vmatprep.mubr.bf16.mxu0 %v2684
    %3007 = vmatmul.mubr.bf16.gmra.mxu0 %v2683
    %v3008 = vpop.f32.mrf.mxu0
    %v3009 = vadd.f32 %v2697, %v3008
    %v3010 = vpop.f32.mrf.mxu0
    %v3011 = vadd.f32 %v2701, %v3010
    %v3012 = vpop.f32.mrf.mxu0
    %v3013 = vadd.f32 %v2697, %v3012
    %v3014 = vpop.f32.mrf.mxu0
    %v3015 = vadd.f32 %v2701, %v3014
    %3016 = vmatprep.mubr.bf16.mxu0 %v2686
    %3017 = vmatmul.mubr.bf16.gmra.mxu0 %v2685
    %v3018 = vpop.f32.mrf.mxu0
    %v3019 = vadd.f32 %v2697, %v3018
    %v3020 = vpop.f32.mrf.mxu0
    %v3021 = vadd.f32 %v2701, %v3020
    %v3022 = vpop.f32.mrf.mxu0
    %v3023 = vadd.f32 %v2697, %v3022
    %v3024 = vpop.f32.mrf.mxu0
    %v3025 = vadd.f32 %v2701, %v3024
    %3026 = vmatprep.mubr.bf16.mxu0 %v2688
    %3027 = vmatmul.mubr.bf16.gmra.mxu0 %v2687
    %v3028 = vpop.f32.mrf.mxu0
    %v3029 = vadd.f32 %v2697, %v3028
    %v3030 = vpop.f32.mrf.mxu0
    %v3031 = vadd.f32 %v2701, %v3030
    %v3032 = vpop.f32.mrf.mxu0
    %v3033 = vadd.f32 %v2697, %v3032
    %v3034 = vpop.f32.mrf.mxu0
    %v3035 = vadd.f32 %v2701, %v3034
    %3036 = vmatprep.mubr.bf16.mxu0 %v2690
    %3037 = vmatmul.mubr.bf16.gmra.mxu0 %v2689
    %v3038 = vpop.f32.mrf.mxu0
    %v3039 = vadd.f32 %v2697, %v3038
    %v3040 = vpop.f32.mrf.mxu0
    %v3041 = vadd.f32 %v2701, %v3040
    %v3042 = vpop.f32.mrf.mxu0
    %v3043 = vadd.f32 %v2697, %v3042
    %v3044 = vpop.f32.mrf.mxu0
    %v3045 = vadd.f32 %v2701, %v3044
    %3046 = vmatprep.mubr.bf16.mxu0 %v2692
    %3047 = vmatmul.mubr.bf16.gmra.mxu0 %v2691
    %v3048 = vpop.f32.mrf.mxu0
    %v3049 = vadd.f32 %v2697, %v3048
    %v3050 = vpop.f32.mrf.mxu0
    %v3051 = vadd.f32 %v2701, %v3050
    %v3052 = vpop.f32.mrf.mxu0
    %v3053 = vadd.f32 %v2697, %v3052
    %v3054 = vpop.f32.mrf.mxu0
    %v3055 = vadd.f32 %v2701, %v3054
    %3056 = vdwg.mxu0
    %v3057 = vmax.f32 %v2899, 0.0
    %v3058 = vmax.f32 %v2901, 0.0
    %v3059 = vmax.f32 %v2903, 0.0
    %v3060 = vmax.f32 %v2905, 0.0
    %v3061 = vmax.f32 %v2909, 0.0
    %v3062 = vmax.f32 %v2911, 0.0
    %v3063 = vmax.f32 %v2913, 0.0
    %v3064 = vmax.f32 %v2915, 0.0
    %v3065 = vmax.f32 %v2919, 0.0
    %v3066 = vmax.f32 %v2921, 0.0
    %v3067 = vmax.f32 %v2923, 0.0
    %v3068 = vmax.f32 %v2925, 0.0
    %v3069 = vmax.f32 %v2929, 0.0
    %v3070 = vmax.f32 %v2931, 0.0
    %v3071 = vmax.f32 %v2933, 0.0
    %v3072 = vmax.f32 %v2935, 0.0
    %v3073 = vmax.f32 %v2939, 0.0
    %v3074 = vmax.f32 %v2941, 0.0
    %v3075 = vmax.f32 %v2943, 0.0
    %v3076 = vmax.f32 %v2945, 0.0
    %v3077 = vmax.f32 %v2949, 0.0
    %v3078 = vmax.f32 %v2951, 0.0
    %v3079 = vmax.f32 %v2953, 0.0
    %v3080 = vmax.f32 %v2955, 0.0
    %v3081 = vmax.f32 %v2959, 0.0
    %v3082 = vmax.f32 %v2961, 0.0
    %v3083 = vmax.f32 %v2963, 0.0
    %v3084 = vmax.f32 %v2965, 0.0
    %v3085 = vmax.f32 %v2969, 0.0
    %v3086 = vmax.f32 %v2971, 0.0
    %v3087 = vmax.f32 %v2973, 0.0
    %v3088 = vmax.f32 %v2975, 0.0
    %v3089 = vmax.f32 %v2979, 0.0
    %v3090 = vmax.f32 %v2981, 0.0
    %v3091 = vmax.f32 %v2983, 0.0
    %v3092 = vmax.f32 %v2985, 0.0
    %v3093 = vmax.f32 %v2989, 0.0
    %v3094 = vmax.f32 %v2991, 0.0
    %v3095 = vmax.f32 %v2993, 0.0
    %v3096 = vmax.f32 %v2995, 0.0
    %v3097 = vmax.f32 %v2999, 0.0
    %v3098 = vmax.f32 %v3001, 0.0
    %v3099 = vmax.f32 %v3003, 0.0
    %v3100 = vmax.f32 %v3005, 0.0
    %v3101 = vmax.f32 %v3009, 0.0
    %v3102 = vmax.f32 %v3011, 0.0
    %v3103 = vmax.f32 %v3013, 0.0
    %v3104 = vmax.f32 %v3015, 0.0
    %v3105 = vmax.f32 %v3019, 0.0
    %v3106 = vmax.f32 %v3021, 0.0
    %v3107 = vmax.f32 %v3023, 0.0
    %v3108 = vmax.f32 %v3025, 0.0
    %v3109 = vmax.f32 %v3029, 0.0
    %v3110 = vmax.f32 %v3031, 0.0
    %v3111 = vmax.f32 %v3033, 0.0
    %v3112 = vmax.f32 %v3035, 0.0
    %v3113 = vmax.f32 %v3039, 0.0
    %v3114 = vmax.f32 %v3041, 0.0
    %v3115 = vmax.f32 %v3043, 0.0
    %v3116 = vmax.f32 %v3045, 0.0
    %v3117 = vmax.f32 %v3049, 0.0
    %v3118 = vmax.f32 %v3051, 0.0
    %v3119 = vmax.f32 %v3053, 0.0
    %v3120 = vmax.f32 %v3055, 0.0
    %v3121 = vld [vmem:[%s11] sm:$0x77]
    %v3122 = vld [vmem:[#allocation11] sm:$0xff]
    %v3123 = vld [vmem:[#allocation11 + $0x8] sm:$0xff]
    %v3124 = vld [vmem:[#allocation11 + $0x10] sm:$0xff]
    %v3125 = vld [vmem:[#allocation11 + $0x18] sm:$0xff]
    %v3126 = vld [vmem:[#allocation11 + $0x20] sm:$0xff]
    %v3127 = vld [vmem:[#allocation11 + $0x28] sm:$0xff]
    %v3128 = vld [vmem:[#allocation11 + $0x30] sm:$0xff]
    %v3129 = vld [vmem:[#allocation11 + $0x38] sm:$0xff]
    %v3130 = vld [vmem:[#allocation11 + $0x40] sm:$0xff]
    %v3131 = vld [vmem:[#allocation11 + $0x48] sm:$0xff]
    %v3132 = vld [vmem:[#allocation11 + $0x50] sm:$0xff]
    %v3133 = vld [vmem:[#allocation11 + $0x58] sm:$0xff]
    %v3134 = vld [vmem:[#allocation11 + $0x60] sm:$0xff]
    %v3135 = vld [vmem:[#allocation11 + $0x68] sm:$0xff]
    %v3136 = vld [vmem:[#allocation11 + $0x70] sm:$0xff]
    %v3137 = vld [vmem:[#allocation11 + $0x78] sm:$0xff]
    %v3138 = vld [vmem:[#allocation11 + $0x80] sm:$0xff]
    %v3139 = vld [vmem:[#allocation11 + $0x88] sm:$0xff]
    %v3140 = vld [vmem:[#allocation11 + $0x90] sm:$0xff]
    %v3141 = vld [vmem:[#allocation11 + $0x98] sm:$0xff]
    %v3142 = vld [vmem:[#allocation11 + $0xa0] sm:$0xff]
    %v3143 = vld [vmem:[#allocation11 + $0xa8] sm:$0xff]
    %v3144 = vld [vmem:[#allocation11 + $0xb0] sm:$0xff]
    %v3145 = vld [vmem:[#allocation11 + $0xb8] sm:$0xff]
    %v3146 = vld [vmem:[#allocation11 + $0xc0] sm:$0xff]
    %v3147 = vld [vmem:[#allocation11 + $0xc8] sm:$0xff]
    %v3148 = vld [vmem:[#allocation11 + $0xd0] sm:$0xff]
    %v3149 = vld [vmem:[#allocation11 + $0xd8] sm:$0xff]
    %v3150 = vld [vmem:[#allocation11 + $0xe0] sm:$0xff]
    %v3151 = vld [vmem:[#allocation11 + $0xe8] sm:$0xff]
    %v3152 = vld [vmem:[#allocation11 + $0xf0] sm:$0xff]
    %v3153 = vld [vmem:[#allocation11 + $0xf8] sm:$0xff]
    %v3154 = vld [vmem:[%s13] sm:$0x3]
    %v3155 = vpack.c.bf16 %v3059, %v3057
    %v3156 = vpack.c.bf16 %v3060, %v3058
    %v3157 = vpack.c.bf16 %v3063, %v3061
    %v3158 = vpack.c.bf16 %v3064, %v3062
    %v3159 = vpack.c.bf16 %v3067, %v3065
    %v3160 = vpack.c.bf16 %v3068, %v3066
    %v3161 = vpack.c.bf16 %v3071, %v3069
    %v3162 = vpack.c.bf16 %v3072, %v3070
    %v3163 = vpack.c.bf16 %v3075, %v3073
    %v3164 = vpack.c.bf16 %v3076, %v3074
    %v3165 = vpack.c.bf16 %v3079, %v3077
    %v3166 = vpack.c.bf16 %v3080, %v3078
    %v3167 = vpack.c.bf16 %v3083, %v3081
    %v3168 = vpack.c.bf16 %v3084, %v3082
    %v3169 = vpack.c.bf16 %v3087, %v3085
    %v3170 = vpack.c.bf16 %v3088, %v3086
    %v3171 = vpack.c.bf16 %v3091, %v3089
    %v3172 = vpack.c.bf16 %v3092, %v3090
    %v3173 = vpack.c.bf16 %v3095, %v3093
    %v3174 = vpack.c.bf16 %v3096, %v3094
    %v3175 = vpack.c.bf16 %v3099, %v3097
    %v3176 = vpack.c.bf16 %v3100, %v3098
    %v3177 = vpack.c.bf16 %v3103, %v3101
    %v3178 = vpack.c.bf16 %v3104, %v3102
    %v3179 = vpack.c.bf16 %v3107, %v3105
    %v3180 = vpack.c.bf16 %v3108, %v3106
    %v3181 = vpack.c.bf16 %v3111, %v3109
    %v3182 = vpack.c.bf16 %v3112, %v3110
    %v3183 = vpack.c.bf16 %v3115, %v3113
    %v3184 = vpack.c.bf16 %v3116, %v3114
    %v3185 = vpack.c.bf16 %v3119, %v3117
    %v3186 = vpack.c.bf16 %v3120, %v3118
    %v3188 = vlaneseq
    %v3189 = vshrl.u32 %v3188, 7
    %v3190 = vsub.s32 0, %v3189
    %v3191 = vrot.slane %v3121, %v3190
    %v3192 = vlaneseq
    %v3193 = vshrl.u32 %v3192, 7
    %v3194 = vsub.s32 4, %v3193
    %v3195 = vrot.slane %v3121, %v3194
    %v3198 = vlaneseq
    %v3199 = vshrl.u32 %v3198, 7
    %v3200 = vsub.s32 0, %v3199
    %v3201 = vrot.slane %v3191, %v3200
    %v3202 = vlaneseq
    %v3203 = vshrl.u32 %v3202, 7
    %v3204 = vsub.s32 0, %v3203
    %v3205 = vrot.slane %v3195, %v3204
    %v3206 = vmul.f32 %v222, %v3201
    %v3207 = vmul.f32 %v222, %v3205
    %v3208 = vmul.f32 %v227, %v3201
    %v3209 = vmul.f32 %v227, %v3205
    %v3210 = vmul.f32 %v232, %v3201
    %v3211 = vmul.f32 %v232, %v3205
    %v3212 = vmul.f32 %v237, %v3201
    %v3213 = vmul.f32 %v237, %v3205
    %v3214 = vmul.f32 %v242, %v3201
    %v3215 = vmul.f32 %v242, %v3205
    %v3216 = vmul.f32 %v247, %v3201
    %v3217 = vmul.f32 %v247, %v3205
    %v3218 = vmul.f32 %v252, %v3201
    %v3219 = vmul.f32 %v252, %v3205
    %v3220 = vmul.f32 %v257, %v3201
    %v3221 = vmul.f32 %v257, %v3205
    %v3222 = vmul.f32 %v262, %v3201
    %v3223 = vmul.f32 %v262, %v3205
    %v3224 = vmul.f32 %v267, %v3201
    %v3225 = vmul.f32 %v267, %v3205
    %v3226 = vmul.f32 %v272, %v3201
    %v3227 = vmul.f32 %v272, %v3205
    %v3228 = vmul.f32 %v277, %v3201
    %v3229 = vmul.f32 %v277, %v3205
    %v3230 = vmul.f32 %v282, %v3201
    %v3231 = vmul.f32 %v282, %v3205
    %v3232 = vmul.f32 %v287, %v3201
    %v3233 = vmul.f32 %v287, %v3205
    %v3234 = vmul.f32 %v292, %v3201
    %v3235 = vmul.f32 %v292, %v3205
    %v3236 = vmul.f32 %v297, %v3201
    %v3237 = vmul.f32 %v297, %v3205
    %v3238 = vmul.f32 %v302, %v3201
    %v3239 = vmul.f32 %v302, %v3205
    %v3240 = vmul.f32 %v307, %v3201
    %v3241 = vmul.f32 %v307, %v3205
    %v3242 = vmul.f32 %v312, %v3201
    %v3243 = vmul.f32 %v312, %v3205
    %v3244 = vmul.f32 %v317, %v3201
    %v3245 = vmul.f32 %v317, %v3205
    %v3246 = vmul.f32 %v322, %v3201
    %v3247 = vmul.f32 %v322, %v3205
    %v3248 = vmul.f32 %v327, %v3201
    %v3249 = vmul.f32 %v327, %v3205
    %v3250 = vmul.f32 %v332, %v3201
    %v3251 = vmul.f32 %v332, %v3205
    %v3252 = vmul.f32 %v337, %v3201
    %v3253 = vmul.f32 %v337, %v3205
    %v3254 = vmul.f32 %v342, %v3201
    %v3255 = vmul.f32 %v342, %v3205
    %v3256 = vmul.f32 %v347, %v3201
    %v3257 = vmul.f32 %v347, %v3205
    %v3258 = vmul.f32 %v352, %v3201
    %v3259 = vmul.f32 %v352, %v3205
    %v3260 = vmul.f32 %v357, %v3201
    %v3261 = vmul.f32 %v357, %v3205
    %v3262 = vmul.f32 %v362, %v3201
    %v3263 = vmul.f32 %v362, %v3205
    %v3264 = vmul.f32 %v367, %v3201
    %v3265 = vmul.f32 %v367, %v3205
    %v3266 = vmul.f32 %v372, %v3201
    %v3267 = vmul.f32 %v372, %v3205
    %v3268 = vmul.f32 %v377, %v3201
    %v3269 = vmul.f32 %v377, %v3205
    %v3270 = vlaneseq
    %v3271 = vshrl.u32 %v3270, 7
    %v3272 = vsub.s32 1, %v3271
    %v3273 = vrot.slane %v3121, %v3272
    %v3274 = vlaneseq
    %v3275 = vshrl.u32 %v3274, 7
    %v3276 = vsub.s32 5, %v3275
    %v3277 = vrot.slane %v3121, %v3276
    %v3280 = vlaneseq
    %v3281 = vshrl.u32 %v3280, 7
    %v3282 = vsub.s32 1, %v3281
    %v3283 = vrot.slane %v3273, %v3282
    %v3284 = vlaneseq
    %v3285 = vshrl.u32 %v3284, 7
    %v3286 = vsub.s32 1, %v3285
    %v3287 = vrot.slane %v3277, %v3286
    %v3288 = vmul.f32 %v464, %v3283
    %v3289 = vmul.f32 %v464, %v3287
    %v3290 = vmul.f32 %v468, %v3283
    %v3291 = vmul.f32 %v468, %v3287
    %v3292 = vmul.f32 %v472, %v3283
    %v3293 = vmul.f32 %v472, %v3287
    %v3294 = vmul.f32 %v476, %v3283
    %v3295 = vmul.f32 %v476, %v3287
    %v3296 = vmul.f32 %v480, %v3283
    %v3297 = vmul.f32 %v480, %v3287
    %v3298 = vmul.f32 %v484, %v3283
    %v3299 = vmul.f32 %v484, %v3287
    %v3300 = vmul.f32 %v488, %v3283
    %v3301 = vmul.f32 %v488, %v3287
    %v3302 = vmul.f32 %v492, %v3283
    %v3303 = vmul.f32 %v492, %v3287
    %v3304 = vmul.f32 %v496, %v3283
    %v3305 = vmul.f32 %v496, %v3287
    %v3306 = vmul.f32 %v500, %v3283
    %v3307 = vmul.f32 %v500, %v3287
    %v3308 = vmul.f32 %v504, %v3283
    %v3309 = vmul.f32 %v504, %v3287
    %v3310 = vmul.f32 %v508, %v3283
    %v3311 = vmul.f32 %v508, %v3287
    %v3312 = vmul.f32 %v512, %v3283
    %v3313 = vmul.f32 %v512, %v3287
    %v3314 = vmul.f32 %v516, %v3283
    %v3315 = vmul.f32 %v516, %v3287
    %v3316 = vmul.f32 %v520, %v3283
    %v3317 = vmul.f32 %v520, %v3287
    %v3318 = vmul.f32 %v524, %v3283
    %v3319 = vmul.f32 %v524, %v3287
    %v3320 = vmul.f32 %v528, %v3283
    %v3321 = vmul.f32 %v528, %v3287
    %v3322 = vmul.f32 %v532, %v3283
    %v3323 = vmul.f32 %v532, %v3287
    %v3324 = vmul.f32 %v536, %v3283
    %v3325 = vmul.f32 %v536, %v3287
    %v3326 = vmul.f32 %v540, %v3283
    %v3327 = vmul.f32 %v540, %v3287
    %v3328 = vmul.f32 %v544, %v3283
    %v3329 = vmul.f32 %v544, %v3287
    %v3330 = vmul.f32 %v548, %v3283
    %v3331 = vmul.f32 %v548, %v3287
    %v3332 = vmul.f32 %v552, %v3283
    %v3333 = vmul.f32 %v552, %v3287
    %v3334 = vmul.f32 %v556, %v3283
    %v3335 = vmul.f32 %v556, %v3287
    %v3336 = vmul.f32 %v560, %v3283
    %v3337 = vmul.f32 %v560, %v3287
    %v3338 = vmul.f32 %v564, %v3283
    %v3339 = vmul.f32 %v564, %v3287
    %v3340 = vmul.f32 %v568, %v3283
    %v3341 = vmul.f32 %v568, %v3287
    %v3342 = vmul.f32 %v572, %v3283
    %v3343 = vmul.f32 %v572, %v3287
    %v3344 = vmul.f32 %v576, %v3283
    %v3345 = vmul.f32 %v576, %v3287
    %v3346 = vmul.f32 %v580, %v3283
    %v3347 = vmul.f32 %v580, %v3287
    %v3348 = vmul.f32 %v584, %v3283
    %v3349 = vmul.f32 %v584, %v3287
    %v3350 = vmul.f32 %v588, %v3283
    %v3351 = vmul.f32 %v588, %v3287
    %v3352 = vadd.f32 %v3206, %v3288
    %v3353 = vadd.f32 %v3207, %v3289
    %v3354 = vadd.f32 %v3208, %v3290
    %v3355 = vadd.f32 %v3209, %v3291
    %v3356 = vadd.f32 %v3210, %v3292
    %v3357 = vadd.f32 %v3211, %v3293
    %v3358 = vadd.f32 %v3212, %v3294
    %v3359 = vadd.f32 %v3213, %v3295
    %v3360 = vadd.f32 %v3214, %v3296
    %v3361 = vadd.f32 %v3215, %v3297
    %v3362 = vadd.f32 %v3216, %v3298
    %v3363 = vadd.f32 %v3217, %v3299
    %v3364 = vadd.f32 %v3218, %v3300
    %v3365 = vadd.f32 %v3219, %v3301
    %v3366 = vadd.f32 %v3220, %v3302
    %v3367 = vadd.f32 %v3221, %v3303
    %v3368 = vadd.f32 %v3222, %v3304
    %v3369 = vadd.f32 %v3223, %v3305
    %v3370 = vadd.f32 %v3224, %v3306
    %v3371 = vadd.f32 %v3225, %v3307
    %v3372 = vadd.f32 %v3226, %v3308
    %v3373 = vadd.f32 %v3227, %v3309
    %v3374 = vadd.f32 %v3228, %v3310
    %v3375 = vadd.f32 %v3229, %v3311
    %v3376 = vadd.f32 %v3230, %v3312
    %v3377 = vadd.f32 %v3231, %v3313
    %v3378 = vadd.f32 %v3232, %v3314
    %v3379 = vadd.f32 %v3233, %v3315
    %v3380 = vadd.f32 %v3234, %v3316
    %v3381 = vadd.f32 %v3235, %v3317
    %v3382 = vadd.f32 %v3236, %v3318
    %v3383 = vadd.f32 %v3237, %v3319
    %v3384 = vadd.f32 %v3238, %v3320
    %v3385 = vadd.f32 %v3239, %v3321
    %v3386 = vadd.f32 %v3240, %v3322
    %v3387 = vadd.f32 %v3241, %v3323
    %v3388 = vadd.f32 %v3242, %v3324
    %v3389 = vadd.f32 %v3243, %v3325
    %v3390 = vadd.f32 %v3244, %v3326
    %v3391 = vadd.f32 %v3245, %v3327
    %v3392 = vadd.f32 %v3246, %v3328
    %v3393 = vadd.f32 %v3247, %v3329
    %v3394 = vadd.f32 %v3248, %v3330
    %v3395 = vadd.f32 %v3249, %v3331
    %v3396 = vadd.f32 %v3250, %v3332
    %v3397 = vadd.f32 %v3251, %v3333
    %v3398 = vadd.f32 %v3252, %v3334
    %v3399 = vadd.f32 %v3253, %v3335
    %v3400 = vadd.f32 %v3254, %v3336
    %v3401 = vadd.f32 %v3255, %v3337
    %v3402 = vadd.f32 %v3256, %v3338
    %v3403 = vadd.f32 %v3257, %v3339
    %v3404 = vadd.f32 %v3258, %v3340
    %v3405 = vadd.f32 %v3259, %v3341
    %v3406 = vadd.f32 %v3260, %v3342
    %v3407 = vadd.f32 %v3261, %v3343
    %v3408 = vadd.f32 %v3262, %v3344
    %v3409 = vadd.f32 %v3263, %v3345
    %v3410 = vadd.f32 %v3264, %v3346
    %v3411 = vadd.f32 %v3265, %v3347
    %v3412 = vadd.f32 %v3266, %v3348
    %v3413 = vadd.f32 %v3267, %v3349
    %v3414 = vadd.f32 %v3268, %v3350
    %v3415 = vadd.f32 %v3269, %v3351
    %v3416 = vlaneseq
    %v3417 = vshrl.u32 %v3416, 7
    %v3418 = vsub.s32 2, %v3417
    %v3419 = vrot.slane %v3121, %v3418
    %v3420 = vlaneseq
    %v3421 = vshrl.u32 %v3420, 7
    %v3422 = vsub.s32 6, %v3421
    %v3423 = vrot.slane %v3121, %v3422
    %v3426 = vlaneseq
    %v3427 = vshrl.u32 %v3426, 7
    %v3428 = vsub.s32 2, %v3427
    %v3429 = vrot.slane %v3419, %v3428
    %v3430 = vlaneseq
    %v3431 = vshrl.u32 %v3430, 7
    %v3432 = vsub.s32 2, %v3431
    %v3433 = vrot.slane %v3423, %v3432
    %v3434 = vmul.f32 %v738, %v3429
    %v3435 = vmul.f32 %v738, %v3433
    %v3436 = vmul.f32 %v742, %v3429
    %v3437 = vmul.f32 %v742, %v3433
    %v3438 = vmul.f32 %v746, %v3429
    %v3439 = vmul.f32 %v746, %v3433
    %v3440 = vmul.f32 %v750, %v3429
    %v3441 = vmul.f32 %v750, %v3433
    %v3442 = vmul.f32 %v754, %v3429
    %v3443 = vmul.f32 %v754, %v3433
    %v3444 = vmul.f32 %v758, %v3429
    %v3445 = vmul.f32 %v758, %v3433
    %v3446 = vmul.f32 %v762, %v3429
    %v3447 = vmul.f32 %v762, %v3433
    %v3448 = vmul.f32 %v766, %v3429
    %v3449 = vmul.f32 %v766, %v3433
    %v3450 = vmul.f32 %v770, %v3429
    %v3451 = vmul.f32 %v770, %v3433
    %v3452 = vmul.f32 %v774, %v3429
    %v3453 = vmul.f32 %v774, %v3433
    %v3454 = vmul.f32 %v778, %v3429
    %v3455 = vmul.f32 %v778, %v3433
    %v3456 = vmul.f32 %v782, %v3429
    %v3457 = vmul.f32 %v782, %v3433
    %v3458 = vmul.f32 %v786, %v3429
    %v3459 = vmul.f32 %v786, %v3433
    %v3460 = vmul.f32 %v790, %v3429
    %v3461 = vmul.f32 %v790, %v3433
    %v3462 = vmul.f32 %v794, %v3429
    %v3463 = vmul.f32 %v794, %v3433
    %v3464 = vmul.f32 %v798, %v3429
    %v3465 = vmul.f32 %v798, %v3433
    %v3466 = vmul.f32 %v802, %v3429
    %v3467 = vmul.f32 %v802, %v3433
    %v3468 = vmul.f32 %v806, %v3429
    %v3469 = vmul.f32 %v806, %v3433
    %v3470 = vmul.f32 %v810, %v3429
    %v3471 = vmul.f32 %v810, %v3433
    %v3472 = vmul.f32 %v814, %v3429
    %v3473 = vmul.f32 %v814, %v3433
    %v3474 = vmul.f32 %v818, %v3429
    %v3475 = vmul.f32 %v818, %v3433
    %v3476 = vmul.f32 %v822, %v3429
    %v3477 = vmul.f32 %v822, %v3433
    %v3478 = vmul.f32 %v826, %v3429
    %v3479 = vmul.f32 %v826, %v3433
    %v3480 = vmul.f32 %v830, %v3429
    %v3481 = vmul.f32 %v830, %v3433
    %v3482 = vmul.f32 %v834, %v3429
    %v3483 = vmul.f32 %v834, %v3433
    %v3484 = vmul.f32 %v838, %v3429
    %v3485 = vmul.f32 %v838, %v3433
    %v3486 = vmul.f32 %v842, %v3429
    %v3487 = vmul.f32 %v842, %v3433
    %v3488 = vmul.f32 %v846, %v3429
    %v3489 = vmul.f32 %v846, %v3433
    %v3490 = vmul.f32 %v850, %v3429
    %v3491 = vmul.f32 %v850, %v3433
    %v3492 = vmul.f32 %v854, %v3429
    %v3493 = vmul.f32 %v854, %v3433
    %v3494 = vmul.f32 %v858, %v3429
    %v3495 = vmul.f32 %v858, %v3433
    %v3496 = vmul.f32 %v862, %v3429
    %v3497 = vmul.f32 %v862, %v3433
    %v3498 = vadd.f32 %v3352, %v3434
    %v3499 = vadd.f32 %v3353, %v3435
    %v3500 = vadd.f32 %v3354, %v3436
    %v3501 = vadd.f32 %v3355, %v3437
    %v3502 = vadd.f32 %v3356, %v3438
    %v3503 = vadd.f32 %v3357, %v3439
    %v3504 = vadd.f32 %v3358, %v3440
    %v3505 = vadd.f32 %v3359, %v3441
    %v3506 = vadd.f32 %v3360, %v3442
    %v3507 = vadd.f32 %v3361, %v3443
    %v3508 = vadd.f32 %v3362, %v3444
    %v3509 = vadd.f32 %v3363, %v3445
    %v3510 = vadd.f32 %v3364, %v3446
    %v3511 = vadd.f32 %v3365, %v3447
    %v3512 = vadd.f32 %v3366, %v3448
    %v3513 = vadd.f32 %v3367, %v3449
    %v3514 = vadd.f32 %v3368, %v3450
    %v3515 = vadd.f32 %v3369, %v3451
    %v3516 = vadd.f32 %v3370, %v3452
    %v3517 = vadd.f32 %v3371, %v3453
    %v3518 = vadd.f32 %v3372, %v3454
    %v3519 = vadd.f32 %v3373, %v3455
    %v3520 = vadd.f32 %v3374, %v3456
    %v3521 = vadd.f32 %v3375, %v3457
    %v3522 = vadd.f32 %v3376, %v3458
    %v3523 = vadd.f32 %v3377, %v3459
    %v3524 = vadd.f32 %v3378, %v3460
    %v3525 = vadd.f32 %v3379, %v3461
    %v3526 = vadd.f32 %v3380, %v3462
    %v3527 = vadd.f32 %v3381, %v3463
    %v3528 = vadd.f32 %v3382, %v3464
    %v3529 = vadd.f32 %v3383, %v3465
    %v3530 = vadd.f32 %v3384, %v3466
    %v3531 = vadd.f32 %v3385, %v3467
    %v3532 = vadd.f32 %v3386, %v3468
    %v3533 = vadd.f32 %v3387, %v3469
    %v3534 = vadd.f32 %v3388, %v3470
    %v3535 = vadd.f32 %v3389, %v3471
    %v3536 = vadd.f32 %v3390, %v3472
    %v3537 = vadd.f32 %v3391, %v3473
    %v3538 = vadd.f32 %v3392, %v3474
    %v3539 = vadd.f32 %v3393, %v3475
    %v3540 = vadd.f32 %v3394, %v3476
    %v3541 = vadd.f32 %v3395, %v3477
    %v3542 = vadd.f32 %v3396, %v3478
    %v3543 = vadd.f32 %v3397, %v3479
    %v3544 = vadd.f32 %v3398, %v3480
    %v3545 = vadd.f32 %v3399, %v3481
    %v3546 = vadd.f32 %v3400, %v3482
    %v3547 = vadd.f32 %v3401, %v3483
    %v3548 = vadd.f32 %v3402, %v3484
    %v3549 = vadd.f32 %v3403, %v3485
    %v3550 = vadd.f32 %v3404, %v3486
    %v3551 = vadd.f32 %v3405, %v3487
    %v3552 = vadd.f32 %v3406, %v3488
    %v3553 = vadd.f32 %v3407, %v3489
    %v3554 = vadd.f32 %v3408, %v3490
    %v3555 = vadd.f32 %v3409, %v3491
    %v3556 = vadd.f32 %v3410, %v3492
    %v3557 = vadd.f32 %v3411, %v3493
    %v3558 = vadd.f32 %v3412, %v3494
    %v3559 = vadd.f32 %v3413, %v3495
    %v3560 = vadd.f32 %v3414, %v3496
    %v3561 = vadd.f32 %v3415, %v3497
    %v3594 = vunpack.c.l.b16 %v3122
    %v3595 = vunpack.c.h.b16 %v3122
    %v3596 = vunpack.c.l.b16 %v3123
    %v3597 = vunpack.c.h.b16 %v3123
    %v3598 = vunpack.c.l.b16 %v3124
    %v3599 = vunpack.c.h.b16 %v3124
    %v3600 = vunpack.c.l.b16 %v3125
    %v3601 = vunpack.c.h.b16 %v3125
    %v3602 = vunpack.c.l.b16 %v3126
    %v3603 = vunpack.c.h.b16 %v3126
    %v3604 = vunpack.c.l.b16 %v3127
    %v3605 = vunpack.c.h.b16 %v3127
    %v3606 = vunpack.c.l.b16 %v3128
    %v3607 = vunpack.c.h.b16 %v3128
    %v3608 = vunpack.c.l.b16 %v3129
    %v3609 = vunpack.c.h.b16 %v3129
    %v3610 = vunpack.c.l.b16 %v3130
    %v3611 = vunpack.c.h.b16 %v3130
    %v3612 = vunpack.c.l.b16 %v3131
    %v3613 = vunpack.c.h.b16 %v3131
    %v3614 = vunpack.c.l.b16 %v3132
    %v3615 = vunpack.c.h.b16 %v3132
    %v3616 = vunpack.c.l.b16 %v3133
    %v3617 = vunpack.c.h.b16 %v3133
    %v3618 = vunpack.c.l.b16 %v3134
    %v3619 = vunpack.c.h.b16 %v3134
    %v3620 = vunpack.c.l.b16 %v3135
    %v3621 = vunpack.c.h.b16 %v3135
    %v3622 = vunpack.c.l.b16 %v3136
    %v3623 = vunpack.c.h.b16 %v3136
    %v3624 = vunpack.c.l.b16 %v3137
    %v3625 = vunpack.c.h.b16 %v3137
    %v3626 = vunpack.c.l.b16 %v3138
    %v3627 = vunpack.c.h.b16 %v3138
    %v3628 = vunpack.c.l.b16 %v3139
    %v3629 = vunpack.c.h.b16 %v3139
    %v3630 = vunpack.c.l.b16 %v3140
    %v3631 = vunpack.c.h.b16 %v3140
    %v3632 = vunpack.c.l.b16 %v3141
    %v3633 = vunpack.c.h.b16 %v3141
    %v3634 = vunpack.c.l.b16 %v3142
    %v3635 = vunpack.c.h.b16 %v3142
    %v3636 = vunpack.c.l.b16 %v3143
    %v3637 = vunpack.c.h.b16 %v3143
    %v3638 = vunpack.c.l.b16 %v3144
    %v3639 = vunpack.c.h.b16 %v3144
    %v3640 = vunpack.c.l.b16 %v3145
    %v3641 = vunpack.c.h.b16 %v3145
    %v3642 = vunpack.c.l.b16 %v3146
    %v3643 = vunpack.c.h.b16 %v3146
    %v3644 = vunpack.c.l.b16 %v3147
    %v3645 = vunpack.c.h.b16 %v3147
    %v3646 = vunpack.c.l.b16 %v3148
    %v3647 = vunpack.c.h.b16 %v3148
    %v3648 = vunpack.c.l.b16 %v3149
    %v3649 = vunpack.c.h.b16 %v3149
    %v3650 = vunpack.c.l.b16 %v3150
    %v3651 = vunpack.c.h.b16 %v3150
    %v3652 = vunpack.c.l.b16 %v3151
    %v3653 = vunpack.c.h.b16 %v3151
    %v3654 = vunpack.c.l.b16 %v3152
    %v3655 = vunpack.c.h.b16 %v3152
    %v3656 = vunpack.c.l.b16 %v3153
    %v3657 = vunpack.c.h.b16 %v3153
    %v3658 = vpack.c.b16 %v3596, %v3594
    %v3659 = vpack.c.b16 %v3597, %v3595
    %v3660 = vpack.c.b16 %v3600, %v3598
    %v3661 = vpack.c.b16 %v3601, %v3599
    %v3662 = vpack.c.b16 %v3604, %v3602
    %v3663 = vpack.c.b16 %v3605, %v3603
    %v3664 = vpack.c.b16 %v3608, %v3606
    %v3665 = vpack.c.b16 %v3609, %v3607
    %v3666 = vpack.c.b16 %v3612, %v3610
    %v3667 = vpack.c.b16 %v3613, %v3611
    %v3668 = vpack.c.b16 %v3616, %v3614
    %v3669 = vpack.c.b16 %v3617, %v3615
    %v3670 = vpack.c.b16 %v3620, %v3618
    %v3671 = vpack.c.b16 %v3621, %v3619
    %v3672 = vpack.c.b16 %v3624, %v3622
    %v3673 = vpack.c.b16 %v3625, %v3623
    %v3674 = vpack.c.b16 %v3628, %v3626
    %v3675 = vpack.c.b16 %v3629, %v3627
    %v3676 = vpack.c.b16 %v3632, %v3630
    %v3677 = vpack.c.b16 %v3633, %v3631
    %v3678 = vpack.c.b16 %v3636, %v3634
    %v3679 = vpack.c.b16 %v3637, %v3635
    %v3680 = vpack.c.b16 %v3640, %v3638
    %v3681 = vpack.c.b16 %v3641, %v3639
    %v3682 = vpack.c.b16 %v3644, %v3642
    %v3683 = vpack.c.b16 %v3645, %v3643
    %v3684 = vpack.c.b16 %v3648, %v3646
    %v3685 = vpack.c.b16 %v3649, %v3647
    %v3686 = vpack.c.b16 %v3652, %v3650
    %v3687 = vpack.c.b16 %v3653, %v3651
    %v3688 = vpack.c.b16 %v3656, %v3654
    %v3689 = vpack.c.b16 %v3657, %v3655
    %3722 = vmatprep.subr.bf16.mxu0 %v3673
    %3723 = vmatpush1.bf16.msra.mxu0 %v3672
    %3724 = vmatprep.subr.bf16.mxu0 %v3671
    %3725 = vmatpush1.bf16.msra.mxu0 %v3670
    %3726 = vmatprep.subr.bf16.mxu0 %v3669
    %3727 = vmatpush1.bf16.msra.mxu0 %v3668
    %3728 = vmatprep.subr.bf16.mxu0 %v3667
    %3729 = vmatpush1.bf16.msra.mxu0 %v3666
    %3730 = vmatprep.subr.bf16.mxu0 %v3665
    %3731 = vmatpush1.bf16.msra.mxu0 %v3664
    %3732 = vmatprep.subr.bf16.mxu0 %v3663
    %3733 = vmatpush1.bf16.msra.mxu0 %v3662
    %3734 = vmatprep.subr.bf16.mxu0 %v3661
    %3735 = vmatpush1.bf16.msra.mxu0 %v3660
    %3736 = vmatprep.subr.bf16.mxu0 %v3659
    %3737 = vmatpush1.bf16.msra.mxu0 %v3658
    %3738 = vmatprep.subr.bf16.mxu0 %v3689
    %3739 = vmatpush2.bf16.msra.mxu0 %v3688
    %3740 = vmatprep.subr.bf16.mxu0 %v3687
    %3741 = vmatpush2.bf16.msra.mxu0 %v3686
    %3742 = vmatprep.subr.bf16.mxu0 %v3685
    %3743 = vmatpush2.bf16.msra.mxu0 %v3684
    %3744 = vmatprep.subr.bf16.mxu0 %v3683
    %3745 = vmatpush2.bf16.msra.mxu0 %v3682
    %3746 = vmatprep.subr.bf16.mxu0 %v3681
    %3747 = vmatpush2.bf16.msra.mxu0 %v3680
    %3748 = vmatprep.subr.bf16.mxu0 %v3679
    %3749 = vmatpush2.bf16.msra.mxu0 %v3678
    %3750 = vmatprep.subr.bf16.mxu0 %v3677
    %3751 = vmatpush2.bf16.msra.mxu0 %v3676
    %3752 = vmatprep.subr.bf16.mxu0 %v3675
    %3753 = vmatpush2.bf16.msra.mxu0 %v3674
    %3754 = vmatprep.mubr.bf16.mxu0 %v3156
    %3755 = vmatmul.mubr.bf16.gmra.mxu0 %v3155
    %v3756 = vpop.f32.mrf.mxu0
    %v3757 = vadd.f32 %v3498, %v3756
    %v3758 = vpop.f32.mrf.mxu0
    %v3759 = vadd.f32 %v3499, %v3758
    %v3760 = vpop.f32.mrf.mxu0
    %v3761 = vadd.f32 %v3500, %v3760
    %v3762 = vpop.f32.mrf.mxu0
    %v3763 = vadd.f32 %v3501, %v3762
    %3764 = vmatprep.mubr.bf16.mxu0 %v3158
    %3765 = vmatmul.mubr.bf16.gmra.mxu0 %v3157
    %v3766 = vpop.f32.mrf.mxu0
    %v3767 = vadd.f32 %v3502, %v3766
    %v3768 = vpop.f32.mrf.mxu0
    %v3769 = vadd.f32 %v3503, %v3768
    %v3770 = vpop.f32.mrf.mxu0
    %v3771 = vadd.f32 %v3504, %v3770
    %v3772 = vpop.f32.mrf.mxu0
    %v3773 = vadd.f32 %v3505, %v3772
    %3774 = vmatprep.mubr.bf16.mxu0 %v3160
    %3775 = vmatmul.mubr.bf16.gmra.mxu0 %v3159
    %v3776 = vpop.f32.mrf.mxu0
    %v3777 = vadd.f32 %v3506, %v3776
    %v3778 = vpop.f32.mrf.mxu0
    %v3779 = vadd.f32 %v3507, %v3778
    %v3780 = vpop.f32.mrf.mxu0
    %v3781 = vadd.f32 %v3508, %v3780
    %v3782 = vpop.f32.mrf.mxu0
    %v3783 = vadd.f32 %v3509, %v3782
    %3784 = vmatprep.mubr.bf16.mxu0 %v3162
    %3785 = vmatmul.mubr.bf16.gmra.mxu0 %v3161
    %v3786 = vpop.f32.mrf.mxu0
    %v3787 = vadd.f32 %v3510, %v3786
    %v3788 = vpop.f32.mrf.mxu0
    %v3789 = vadd.f32 %v3511, %v3788
    %v3790 = vpop.f32.mrf.mxu0
    %v3791 = vadd.f32 %v3512, %v3790
    %v3792 = vpop.f32.mrf.mxu0
    %v3793 = vadd.f32 %v3513, %v3792
    %3794 = vmatprep.mubr.bf16.mxu0 %v3164
    %3795 = vmatmul.mubr.bf16.gmra.mxu0 %v3163
    %v3796 = vpop.f32.mrf.mxu0
    %v3797 = vadd.f32 %v3514, %v3796
    %v3798 = vpop.f32.mrf.mxu0
    %v3799 = vadd.f32 %v3515, %v3798
    %v3800 = vpop.f32.mrf.mxu0
    %v3801 = vadd.f32 %v3516, %v3800
    %v3802 = vpop.f32.mrf.mxu0
    %v3803 = vadd.f32 %v3517, %v3802
    %3804 = vmatprep.mubr.bf16.mxu0 %v3166
    %3805 = vmatmul.mubr.bf16.gmra.mxu0 %v3165
    %v3806 = vpop.f32.mrf.mxu0
    %v3807 = vadd.f32 %v3518, %v3806
    %v3808 = vpop.f32.mrf.mxu0
    %v3809 = vadd.f32 %v3519, %v3808
    %v3810 = vpop.f32.mrf.mxu0
    %v3811 = vadd.f32 %v3520, %v3810
    %v3812 = vpop.f32.mrf.mxu0
    %v3813 = vadd.f32 %v3521, %v3812
    %3814 = vmatprep.mubr.bf16.mxu0 %v3168
    %3815 = vmatmul.mubr.bf16.gmra.mxu0 %v3167
    %v3816 = vpop.f32.mrf.mxu0
    %v3817 = vadd.f32 %v3522, %v3816
    %v3818 = vpop.f32.mrf.mxu0
    %v3819 = vadd.f32 %v3523, %v3818
    %v3820 = vpop.f32.mrf.mxu0
    %v3821 = vadd.f32 %v3524, %v3820
    %v3822 = vpop.f32.mrf.mxu0
    %v3823 = vadd.f32 %v3525, %v3822
    %3824 = vmatprep.mubr.bf16.mxu0 %v3170
    %3825 = vmatmul.mubr.bf16.gmra.mxu0 %v3169
    %v3826 = vpop.f32.mrf.mxu0
    %v3827 = vadd.f32 %v3526, %v3826
    %v3828 = vpop.f32.mrf.mxu0
    %v3829 = vadd.f32 %v3527, %v3828
    %v3830 = vpop.f32.mrf.mxu0
    %v3831 = vadd.f32 %v3528, %v3830
    %v3832 = vpop.f32.mrf.mxu0
    %v3833 = vadd.f32 %v3529, %v3832
    %3834 = vmatprep.mubr.bf16.mxu0 %v3172
    %3835 = vmatmul.mubr.bf16.gmra.mxu0 %v3171
    %v3836 = vpop.f32.mrf.mxu0
    %v3837 = vadd.f32 %v3530, %v3836
    %v3838 = vpop.f32.mrf.mxu0
    %v3839 = vadd.f32 %v3531, %v3838
    %v3840 = vpop.f32.mrf.mxu0
    %v3841 = vadd.f32 %v3532, %v3840
    %v3842 = vpop.f32.mrf.mxu0
    %v3843 = vadd.f32 %v3533, %v3842
    %3844 = vmatprep.mubr.bf16.mxu0 %v3174
    %3845 = vmatmul.mubr.bf16.gmra.mxu0 %v3173
    %v3846 = vpop.f32.mrf.mxu0
    %v3847 = vadd.f32 %v3534, %v3846
    %v3848 = vpop.f32.mrf.mxu0
    %v3849 = vadd.f32 %v3535, %v3848
    %v3850 = vpop.f32.mrf.mxu0
    %v3851 = vadd.f32 %v3536, %v3850
    %v3852 = vpop.f32.mrf.mxu0
    %v3853 = vadd.f32 %v3537, %v3852
    %3854 = vmatprep.mubr.bf16.mxu0 %v3176
    %3855 = vmatmul.mubr.bf16.gmra.mxu0 %v3175
    %v3856 = vpop.f32.mrf.mxu0
    %v3857 = vadd.f32 %v3538, %v3856
    %v3858 = vpop.f32.mrf.mxu0
    %v3859 = vadd.f32 %v3539, %v3858
    %v3860 = vpop.f32.mrf.mxu0
    %v3861 = vadd.f32 %v3540, %v3860
    %v3862 = vpop.f32.mrf.mxu0
    %v3863 = vadd.f32 %v3541, %v3862
    %3864 = vmatprep.mubr.bf16.mxu0 %v3178
    %3865 = vmatmul.mubr.bf16.gmra.mxu0 %v3177
    %v3866 = vpop.f32.mrf.mxu0
    %v3867 = vadd.f32 %v3542, %v3866
    %v3868 = vpop.f32.mrf.mxu0
    %v3869 = vadd.f32 %v3543, %v3868
    %v3870 = vpop.f32.mrf.mxu0
    %v3871 = vadd.f32 %v3544, %v3870
    %v3872 = vpop.f32.mrf.mxu0
    %v3873 = vadd.f32 %v3545, %v3872
    %3874 = vmatprep.mubr.bf16.mxu0 %v3180
    %3875 = vmatmul.mubr.bf16.gmra.mxu0 %v3179
    %v3876 = vpop.f32.mrf.mxu0
    %v3877 = vadd.f32 %v3546, %v3876
    %v3878 = vpop.f32.mrf.mxu0
    %v3879 = vadd.f32 %v3547, %v3878
    %v3880 = vpop.f32.mrf.mxu0
    %v3881 = vadd.f32 %v3548, %v3880
    %v3882 = vpop.f32.mrf.mxu0
    %v3883 = vadd.f32 %v3549, %v3882
    %3884 = vmatprep.mubr.bf16.mxu0 %v3182
    %3885 = vmatmul.mubr.bf16.gmra.mxu0 %v3181
    %v3886 = vpop.f32.mrf.mxu0
    %v3887 = vadd.f32 %v3550, %v3886
    %v3888 = vpop.f32.mrf.mxu0
    %v3889 = vadd.f32 %v3551, %v3888
    %v3890 = vpop.f32.mrf.mxu0
    %v3891 = vadd.f32 %v3552, %v3890
    %v3892 = vpop.f32.mrf.mxu0
    %v3893 = vadd.f32 %v3553, %v3892
    %3894 = vmatprep.mubr.bf16.mxu0 %v3184
    %3895 = vmatmul.mubr.bf16.gmra.mxu0 %v3183
    %v3896 = vpop.f32.mrf.mxu0
    %v3897 = vadd.f32 %v3554, %v3896
    %v3898 = vpop.f32.mrf.mxu0
    %v3899 = vadd.f32 %v3555, %v3898
    %v3900 = vpop.f32.mrf.mxu0
    %v3901 = vadd.f32 %v3556, %v3900
    %v3902 = vpop.f32.mrf.mxu0
    %v3903 = vadd.f32 %v3557, %v3902
    %3904 = vmatprep.mubr.bf16.mxu0 %v3186
    %3905 = vmatmul.mubr.bf16.gmra.mxu0 %v3185
    %v3906 = vpop.f32.mrf.mxu0
    %v3907 = vadd.f32 %v3558, %v3906
    %v3908 = vpop.f32.mrf.mxu0
    %v3909 = vadd.f32 %v3559, %v3908
    %v3910 = vpop.f32.mrf.mxu0
    %v3911 = vadd.f32 %v3560, %v3910
    %v3912 = vpop.f32.mrf.mxu0
    %v3913 = vadd.f32 %v3561, %v3912
    %3914 = vdwg.mxu0
    %v3916 = vlaneseq
    %v3917 = vshrl.u32 %v3916, 7
    %v3918 = vsub.s32 0, %v3917
    %v3919 = vrot.slane %v3154, %v3918
    %v3920 = vlaneseq
    %v3921 = vshrl.u32 %v3920, 7
    %v3922 = vsub.s32 1, %v3921
    %v3923 = vrot.slane %v3154, %v3922
    %v3926 = vadd.f32 %v3757, %v3919
    %v3927 = vadd.f32 %v3759, %v3923
    %v3928 = vadd.f32 %v3761, %v3919
    %v3929 = vadd.f32 %v3763, %v3923
    %v3930 = vadd.f32 %v3767, %v3919
    %v3931 = vadd.f32 %v3769, %v3923
    %v3932 = vadd.f32 %v3771, %v3919
    %v3933 = vadd.f32 %v3773, %v3923
    %v3934 = vadd.f32 %v3777, %v3919
    %v3935 = vadd.f32 %v3779, %v3923
    %v3936 = vadd.f32 %v3781, %v3919
    %v3937 = vadd.f32 %v3783, %v3923
    %v3938 = vadd.f32 %v3787, %v3919
    %v3939 = vadd.f32 %v3789, %v3923
    %v3940 = vadd.f32 %v3791, %v3919
    %v3941 = vadd.f32 %v3793, %v3923
    %v3942 = vadd.f32 %v3797, %v3919
    %v3943 = vadd.f32 %v3799, %v3923
    %v3944 = vadd.f32 %v3801, %v3919
    %v3945 = vadd.f32 %v3803, %v3923
    %v3946 = vadd.f32 %v3807, %v3919
    %v3947 = vadd.f32 %v3809, %v3923
    %v3948 = vadd.f32 %v3811, %v3919
    %v3949 = vadd.f32 %v3813, %v3923
    %v3950 = vadd.f32 %v3817, %v3919
    %v3951 = vadd.f32 %v3819, %v3923
    %v3952 = vadd.f32 %v3821, %v3919
    %v3953 = vadd.f32 %v3823, %v3923
    %v3954 = vadd.f32 %v3827, %v3919
    %v3955 = vadd.f32 %v3829, %v3923
    %v3956 = vadd.f32 %v3831, %v3919
    %v3957 = vadd.f32 %v3833, %v3923
    %v3958 = vadd.f32 %v3837, %v3919
    %v3959 = vadd.f32 %v3839, %v3923
    %v3960 = vadd.f32 %v3841, %v3919
    %v3961 = vadd.f32 %v3843, %v3923
    %v3962 = vadd.f32 %v3847, %v3919
    %v3963 = vadd.f32 %v3849, %v3923
    %v3964 = vadd.f32 %v3851, %v3919
    %v3965 = vadd.f32 %v3853, %v3923
    %v3966 = vadd.f32 %v3857, %v3919
    %v3967 = vadd.f32 %v3859, %v3923
    %v3968 = vadd.f32 %v3861, %v3919
    %v3969 = vadd.f32 %v3863, %v3923
    %v3970 = vadd.f32 %v3867, %v3919
    %v3971 = vadd.f32 %v3869, %v3923
    %v3972 = vadd.f32 %v3871, %v3919
    %v3973 = vadd.f32 %v3873, %v3923
    %v3974 = vadd.f32 %v3877, %v3919
    %v3975 = vadd.f32 %v3879, %v3923
    %v3976 = vadd.f32 %v3881, %v3919
    %v3977 = vadd.f32 %v3883, %v3923
    %v3978 = vadd.f32 %v3887, %v3919
    %v3979 = vadd.f32 %v3889, %v3923
    %v3980 = vadd.f32 %v3891, %v3919
    %v3981 = vadd.f32 %v3893, %v3923
    %v3982 = vadd.f32 %v3897, %v3919
    %v3983 = vadd.f32 %v3899, %v3923
    %v3984 = vadd.f32 %v3901, %v3919
    %v3985 = vadd.f32 %v3903, %v3923
    %v3986 = vadd.f32 %v3907, %v3919
    %v3987 = vadd.f32 %v3909, %v3923
    %v3988 = vadd.f32 %v3911, %v3919
    %v3989 = vadd.f32 %v3913, %v3923
    %v3990 = vmax.f32 %v3926, 0.0
    %v3991 = vmax.f32 %v3927, 0.0
    %v3992 = vmax.f32 %v3928, 0.0
    %v3993 = vmax.f32 %v3929, 0.0
    %v3994 = vmax.f32 %v3930, 0.0
    %v3995 = vmax.f32 %v3931, 0.0
    %v3996 = vmax.f32 %v3932, 0.0
    %v3997 = vmax.f32 %v3933, 0.0
    %v3998 = vmax.f32 %v3934, 0.0
    %v3999 = vmax.f32 %v3935, 0.0
    %v4000 = vmax.f32 %v3936, 0.0
    %v4001 = vmax.f32 %v3937, 0.0
    %v4002 = vmax.f32 %v3938, 0.0
    %v4003 = vmax.f32 %v3939, 0.0
    %v4004 = vmax.f32 %v3940, 0.0
    %v4005 = vmax.f32 %v3941, 0.0
    %v4006 = vmax.f32 %v3942, 0.0
    %v4007 = vmax.f32 %v3943, 0.0
    %v4008 = vmax.f32 %v3944, 0.0
    %v4009 = vmax.f32 %v3945, 0.0
    %v4010 = vmax.f32 %v3946, 0.0
    %v4011 = vmax.f32 %v3947, 0.0
    %v4012 = vmax.f32 %v3948, 0.0
    %v4013 = vmax.f32 %v3949, 0.0
    %v4014 = vmax.f32 %v3950, 0.0
    %v4015 = vmax.f32 %v3951, 0.0
    %v4016 = vmax.f32 %v3952, 0.0
    %v4017 = vmax.f32 %v3953, 0.0
    %v4018 = vmax.f32 %v3954, 0.0
    %v4019 = vmax.f32 %v3955, 0.0
    %v4020 = vmax.f32 %v3956, 0.0
    %v4021 = vmax.f32 %v3957, 0.0
    %v4022 = vmax.f32 %v3958, 0.0
    %v4023 = vmax.f32 %v3959, 0.0
    %v4024 = vmax.f32 %v3960, 0.0
    %v4025 = vmax.f32 %v3961, 0.0
    %v4026 = vmax.f32 %v3962, 0.0
    %v4027 = vmax.f32 %v3963, 0.0
    %v4028 = vmax.f32 %v3964, 0.0
    %v4029 = vmax.f32 %v3965, 0.0
    %v4030 = vmax.f32 %v3966, 0.0
    %v4031 = vmax.f32 %v3967, 0.0
    %v4032 = vmax.f32 %v3968, 0.0
    %v4033 = vmax.f32 %v3969, 0.0
    %v4034 = vmax.f32 %v3970, 0.0
    %v4035 = vmax.f32 %v3971, 0.0
    %v4036 = vmax.f32 %v3972, 0.0
    %v4037 = vmax.f32 %v3973, 0.0
    %v4038 = vmax.f32 %v3974, 0.0
    %v4039 = vmax.f32 %v3975, 0.0
    %v4040 = vmax.f32 %v3976, 0.0
    %v4041 = vmax.f32 %v3977, 0.0
    %v4042 = vmax.f32 %v3978, 0.0
    %v4043 = vmax.f32 %v3979, 0.0
    %v4044 = vmax.f32 %v3980, 0.0
    %v4045 = vmax.f32 %v3981, 0.0
    %v4046 = vmax.f32 %v3982, 0.0
    %v4047 = vmax.f32 %v3983, 0.0
    %v4048 = vmax.f32 %v3984, 0.0
    %v4049 = vmax.f32 %v3985, 0.0
    %v4050 = vmax.f32 %v3986, 0.0
    %v4051 = vmax.f32 %v3987, 0.0
    %v4052 = vmax.f32 %v3988, 0.0
    %v4053 = vmax.f32 %v3989, 0.0
    %v4054 = vld [vmem:[#allocation13] sm:$0xff]
    %v4055 = vld [vmem:[#allocation13 + $0x8] sm:$0xff]
    %v4056 = vld [vmem:[#allocation13 + $0x10] sm:$0xff]
    %v4057 = vld [vmem:[#allocation13 + $0x18] sm:$0xff]
    %v4058 = vld [vmem:[#allocation13 + $0x20] sm:$0xff]
    %v4059 = vld [vmem:[#allocation13 + $0x28] sm:$0xff]
    %v4060 = vld [vmem:[#allocation13 + $0x30] sm:$0xff]
    %v4061 = vld [vmem:[#allocation13 + $0x38] sm:$0xff]
    %v4062 = vld [vmem:[#allocation13 + $0x40] sm:$0xff]
    %v4063 = vld [vmem:[#allocation13 + $0x48] sm:$0xff]
    %v4064 = vld [vmem:[#allocation13 + $0x50] sm:$0xff]
    %v4065 = vld [vmem:[#allocation13 + $0x58] sm:$0xff]
    %v4066 = vld [vmem:[#allocation13 + $0x60] sm:$0xff]
    %v4067 = vld [vmem:[#allocation13 + $0x68] sm:$0xff]
    %v4068 = vld [vmem:[#allocation13 + $0x70] sm:$0xff]
    %v4069 = vld [vmem:[#allocation13 + $0x78] sm:$0xff]
    %v4070 = vld [vmem:[#allocation13 + $0x80] sm:$0xff]
    %v4071 = vld [vmem:[#allocation13 + $0x88] sm:$0xff]
    %v4072 = vld [vmem:[#allocation13 + $0x90] sm:$0xff]
    %v4073 = vld [vmem:[#allocation13 + $0x98] sm:$0xff]
    %v4074 = vld [vmem:[#allocation13 + $0xa0] sm:$0xff]
    %v4075 = vld [vmem:[#allocation13 + $0xa8] sm:$0xff]
    %v4076 = vld [vmem:[#allocation13 + $0xb0] sm:$0xff]
    %v4077 = vld [vmem:[#allocation13 + $0xb8] sm:$0xff]
    %v4078 = vld [vmem:[#allocation13 + $0xc0] sm:$0xff]
    %v4079 = vld [vmem:[#allocation13 + $0xc8] sm:$0xff]
    %v4080 = vld [vmem:[#allocation13 + $0xd0] sm:$0xff]
    %v4081 = vld [vmem:[#allocation13 + $0xd8] sm:$0xff]
    %v4082 = vld [vmem:[#allocation13 + $0xe0] sm:$0xff]
    %v4083 = vld [vmem:[#allocation13 + $0xe8] sm:$0xff]
    %v4084 = vld [vmem:[#allocation13 + $0xf0] sm:$0xff]
    %v4085 = vld [vmem:[#allocation13 + $0xf8] sm:$0xff]
    %v4086 = vld [vmem:[%s15] sm:$0x3]
    %v4087 = vpack.c.bf16 %v3992, %v3990
    %v4088 = vpack.c.bf16 %v3993, %v3991
    %v4089 = vpack.c.bf16 %v3996, %v3994
    %v4090 = vpack.c.bf16 %v3997, %v3995
    %v4091 = vpack.c.bf16 %v4000, %v3998
    %v4092 = vpack.c.bf16 %v4001, %v3999
    %v4093 = vpack.c.bf16 %v4004, %v4002
    %v4094 = vpack.c.bf16 %v4005, %v4003
    %v4095 = vpack.c.bf16 %v4008, %v4006
    %v4096 = vpack.c.bf16 %v4009, %v4007
    %v4097 = vpack.c.bf16 %v4012, %v4010
    %v4098 = vpack.c.bf16 %v4013, %v4011
    %v4099 = vpack.c.bf16 %v4016, %v4014
    %v4100 = vpack.c.bf16 %v4017, %v4015
    %v4101 = vpack.c.bf16 %v4020, %v4018
    %v4102 = vpack.c.bf16 %v4021, %v4019
    %v4103 = vpack.c.bf16 %v4024, %v4022
    %v4104 = vpack.c.bf16 %v4025, %v4023
    %v4105 = vpack.c.bf16 %v4028, %v4026
    %v4106 = vpack.c.bf16 %v4029, %v4027
    %v4107 = vpack.c.bf16 %v4032, %v4030
    %v4108 = vpack.c.bf16 %v4033, %v4031
    %v4109 = vpack.c.bf16 %v4036, %v4034
    %v4110 = vpack.c.bf16 %v4037, %v4035
    %v4111 = vpack.c.bf16 %v4040, %v4038
    %v4112 = vpack.c.bf16 %v4041, %v4039
    %v4113 = vpack.c.bf16 %v4044, %v4042
    %v4114 = vpack.c.bf16 %v4045, %v4043
    %v4115 = vpack.c.bf16 %v4048, %v4046
    %v4116 = vpack.c.bf16 %v4049, %v4047
    %v4117 = vpack.c.bf16 %v4052, %v4050
    %v4118 = vpack.c.bf16 %v4053, %v4051
    %v4120 = vlaneseq
    %v4121 = vshrl.u32 %v4120, 7
    %v4122 = vsub.s32 0, %v4121
    %v4123 = vrot.slane %v4086, %v4122
    %v4124 = vlaneseq
    %v4125 = vshrl.u32 %v4124, 7
    %v4126 = vsub.s32 1, %v4125
    %v4127 = vrot.slane %v4086, %v4126
    %v4162 = vunpack.c.l.b16 %v4054
    %v4163 = vunpack.c.h.b16 %v4054
    %v4164 = vunpack.c.l.b16 %v4055
    %v4165 = vunpack.c.h.b16 %v4055
    %v4166 = vunpack.c.l.b16 %v4056
    %v4167 = vunpack.c.h.b16 %v4056
    %v4168 = vunpack.c.l.b16 %v4057
    %v4169 = vunpack.c.h.b16 %v4057
    %v4170 = vunpack.c.l.b16 %v4058
    %v4171 = vunpack.c.h.b16 %v4058
    %v4172 = vunpack.c.l.b16 %v4059
    %v4173 = vunpack.c.h.b16 %v4059
    %v4174 = vunpack.c.l.b16 %v4060
    %v4175 = vunpack.c.h.b16 %v4060
    %v4176 = vunpack.c.l.b16 %v4061
    %v4177 = vunpack.c.h.b16 %v4061
    %v4178 = vunpack.c.l.b16 %v4062
    %v4179 = vunpack.c.h.b16 %v4062
    %v4180 = vunpack.c.l.b16 %v4063
    %v4181 = vunpack.c.h.b16 %v4063
    %v4182 = vunpack.c.l.b16 %v4064
    %v4183 = vunpack.c.h.b16 %v4064
    %v4184 = vunpack.c.l.b16 %v4065
    %v4185 = vunpack.c.h.b16 %v4065
    %v4186 = vunpack.c.l.b16 %v4066
    %v4187 = vunpack.c.h.b16 %v4066
    %v4188 = vunpack.c.l.b16 %v4067
    %v4189 = vunpack.c.h.b16 %v4067
    %v4190 = vunpack.c.l.b16 %v4068
    %v4191 = vunpack.c.h.b16 %v4068
    %v4192 = vunpack.c.l.b16 %v4069
    %v4193 = vunpack.c.h.b16 %v4069
    %v4194 = vunpack.c.l.b16 %v4070
    %v4195 = vunpack.c.h.b16 %v4070
    %v4196 = vunpack.c.l.b16 %v4071
    %v4197 = vunpack.c.h.b16 %v4071
    %v4198 = vunpack.c.l.b16 %v4072
    %v4199 = vunpack.c.h.b16 %v4072
    %v4200 = vunpack.c.l.b16 %v4073
    %v4201 = vunpack.c.h.b16 %v4073
    %v4202 = vunpack.c.l.b16 %v4074
    %v4203 = vunpack.c.h.b16 %v4074
    %v4204 = vunpack.c.l.b16 %v4075
    %v4205 = vunpack.c.h.b16 %v4075
    %v4206 = vunpack.c.l.b16 %v4076
    %v4207 = vunpack.c.h.b16 %v4076
    %v4208 = vunpack.c.l.b16 %v4077
    %v4209 = vunpack.c.h.b16 %v4077
    %v4210 = vunpack.c.l.b16 %v4078
    %v4211 = vunpack.c.h.b16 %v4078
    %v4212 = vunpack.c.l.b16 %v4079
    %v4213 = vunpack.c.h.b16 %v4079
    %v4214 = vunpack.c.l.b16 %v4080
    %v4215 = vunpack.c.h.b16 %v4080
    %v4216 = vunpack.c.l.b16 %v4081
    %v4217 = vunpack.c.h.b16 %v4081
    %v4218 = vunpack.c.l.b16 %v4082
    %v4219 = vunpack.c.h.b16 %v4082
    %v4220 = vunpack.c.l.b16 %v4083
    %v4221 = vunpack.c.h.b16 %v4083
    %v4222 = vunpack.c.l.b16 %v4084
    %v4223 = vunpack.c.h.b16 %v4084
    %v4224 = vunpack.c.l.b16 %v4085
    %v4225 = vunpack.c.h.b16 %v4085
    %v4226 = vpack.c.b16 %v4164, %v4162
    %v4227 = vpack.c.b16 %v4165, %v4163
    %v4228 = vpack.c.b16 %v4168, %v4166
    %v4229 = vpack.c.b16 %v4169, %v4167
    %v4230 = vpack.c.b16 %v4172, %v4170
    %v4231 = vpack.c.b16 %v4173, %v4171
    %v4232 = vpack.c.b16 %v4176, %v4174
    %v4233 = vpack.c.b16 %v4177, %v4175
    %v4234 = vpack.c.b16 %v4180, %v4178
    %v4235 = vpack.c.b16 %v4181, %v4179
    %v4236 = vpack.c.b16 %v4184, %v4182
    %v4237 = vpack.c.b16 %v4185, %v4183
    %v4238 = vpack.c.b16 %v4188, %v4186
    %v4239 = vpack.c.b16 %v4189, %v4187
    %v4240 = vpack.c.b16 %v4192, %v4190
    %v4241 = vpack.c.b16 %v4193, %v4191
    %v4242 = vpack.c.b16 %v4196, %v4194
    %v4243 = vpack.c.b16 %v4197, %v4195
    %v4244 = vpack.c.b16 %v4200, %v4198
    %v4245 = vpack.c.b16 %v4201, %v4199
    %v4246 = vpack.c.b16 %v4204, %v4202
    %v4247 = vpack.c.b16 %v4205, %v4203
    %v4248 = vpack.c.b16 %v4208, %v4206
    %v4249 = vpack.c.b16 %v4209, %v4207
    %v4250 = vpack.c.b16 %v4212, %v4210
    %v4251 = vpack.c.b16 %v4213, %v4211
    %v4252 = vpack.c.b16 %v4216, %v4214
    %v4253 = vpack.c.b16 %v4217, %v4215
    %v4254 = vpack.c.b16 %v4220, %v4218
    %v4255 = vpack.c.b16 %v4221, %v4219
    %v4256 = vpack.c.b16 %v4224, %v4222
    %v4257 = vpack.c.b16 %v4225, %v4223
    %4290 = vmatprep.subr.bf16.mxu0 %v4241
    %4291 = vmatpush1.bf16.msra.mxu0 %v4240
    %4292 = vmatprep.subr.bf16.mxu0 %v4239
    %4293 = vmatpush1.bf16.msra.mxu0 %v4238
    %4294 = vmatprep.subr.bf16.mxu0 %v4237
    %4295 = vmatpush1.bf16.msra.mxu0 %v4236
    %4296 = vmatprep.subr.bf16.mxu0 %v4235
    %4297 = vmatpush1.bf16.msra.mxu0 %v4234
    %4298 = vmatprep.subr.bf16.mxu0 %v4233
    %4299 = vmatpush1.bf16.msra.mxu0 %v4232
    %4300 = vmatprep.subr.bf16.mxu0 %v4231
    %4301 = vmatpush1.bf16.msra.mxu0 %v4230
    %4302 = vmatprep.subr.bf16.mxu0 %v4229
    %4303 = vmatpush1.bf16.msra.mxu0 %v4228
    %4304 = vmatprep.subr.bf16.mxu0 %v4227
    %4305 = vmatpush1.bf16.msra.mxu0 %v4226
    %4306 = vmatprep.subr.bf16.mxu0 %v4257
    %4307 = vmatpush2.bf16.msra.mxu0 %v4256
    %4308 = vmatprep.subr.bf16.mxu0 %v4255
    %4309 = vmatpush2.bf16.msra.mxu0 %v4254
    %4310 = vmatprep.subr.bf16.mxu0 %v4253
    %4311 = vmatpush2.bf16.msra.mxu0 %v4252
    %4312 = vmatprep.subr.bf16.mxu0 %v4251
    %4313 = vmatpush2.bf16.msra.mxu0 %v4250
    %4314 = vmatprep.subr.bf16.mxu0 %v4249
    %4315 = vmatpush2.bf16.msra.mxu0 %v4248
    %4316 = vmatprep.subr.bf16.mxu0 %v4247
    %4317 = vmatpush2.bf16.msra.mxu0 %v4246
    %4318 = vmatprep.subr.bf16.mxu0 %v4245
    %4319 = vmatpush2.bf16.msra.mxu0 %v4244
    %4320 = vmatprep.subr.bf16.mxu0 %v4243
    %4321 = vmatpush2.bf16.msra.mxu0 %v4242
    %4322 = vmatprep.mubr.bf16.mxu0 %v4088
    %4323 = vmatmul.mubr.bf16.gmra.mxu0 %v4087
    %v4324 = vpop.f32.mrf.mxu0
    %v4325 = vadd.f32 %v4123, %v4324
    %v4326 = vpop.f32.mrf.mxu0
    %v4327 = vadd.f32 %v4127, %v4326
    %v4328 = vpop.f32.mrf.mxu0
    %v4329 = vadd.f32 %v4123, %v4328
    %v4330 = vpop.f32.mrf.mxu0
    %v4331 = vadd.f32 %v4127, %v4330
    %4332 = vmatprep.mubr.bf16.mxu0 %v4090
    %4333 = vmatmul.mubr.bf16.gmra.mxu0 %v4089
    %v4334 = vpop.f32.mrf.mxu0
    %v4335 = vadd.f32 %v4123, %v4334
    %v4336 = vpop.f32.mrf.mxu0
    %v4337 = vadd.f32 %v4127, %v4336
    %v4338 = vpop.f32.mrf.mxu0
    %v4339 = vadd.f32 %v4123, %v4338
    %v4340 = vpop.f32.mrf.mxu0
    %v4341 = vadd.f32 %v4127, %v4340
    %4342 = vmatprep.mubr.bf16.mxu0 %v4092
    %4343 = vmatmul.mubr.bf16.gmra.mxu0 %v4091
    %v4344 = vpop.f32.mrf.mxu0
    %v4345 = vadd.f32 %v4123, %v4344
    %v4346 = vpop.f32.mrf.mxu0
    %v4347 = vadd.f32 %v4127, %v4346
    %v4348 = vpop.f32.mrf.mxu0
    %v4349 = vadd.f32 %v4123, %v4348
    %v4350 = vpop.f32.mrf.mxu0
    %v4351 = vadd.f32 %v4127, %v4350
    %4352 = vmatprep.mubr.bf16.mxu0 %v4094
    %4353 = vmatmul.mubr.bf16.gmra.mxu0 %v4093
    %v4354 = vpop.f32.mrf.mxu0
    %v4355 = vadd.f32 %v4123, %v4354
    %v4356 = vpop.f32.mrf.mxu0
    %v4357 = vadd.f32 %v4127, %v4356
    %v4358 = vpop.f32.mrf.mxu0
    %v4359 = vadd.f32 %v4123, %v4358
    %v4360 = vpop.f32.mrf.mxu0
    %v4361 = vadd.f32 %v4127, %v4360
    %4362 = vmatprep.mubr.bf16.mxu0 %v4096
    %4363 = vmatmul.mubr.bf16.gmra.mxu0 %v4095
    %v4364 = vpop.f32.mrf.mxu0
    %v4365 = vadd.f32 %v4123, %v4364
    %v4366 = vpop.f32.mrf.mxu0
    %v4367 = vadd.f32 %v4127, %v4366
    %v4368 = vpop.f32.mrf.mxu0
    %v4369 = vadd.f32 %v4123, %v4368
    %v4370 = vpop.f32.mrf.mxu0
    %v4371 = vadd.f32 %v4127, %v4370
    %4372 = vmatprep.mubr.bf16.mxu0 %v4098
    %4373 = vmatmul.mubr.bf16.gmra.mxu0 %v4097
    %v4374 = vpop.f32.mrf.mxu0
    %v4375 = vadd.f32 %v4123, %v4374
    %v4376 = vpop.f32.mrf.mxu0
    %v4377 = vadd.f32 %v4127, %v4376
    %v4378 = vpop.f32.mrf.mxu0
    %v4379 = vadd.f32 %v4123, %v4378
    %v4380 = vpop.f32.mrf.mxu0
    %v4381 = vadd.f32 %v4127, %v4380
    %4382 = vmatprep.mubr.bf16.mxu0 %v4100
    %4383 = vmatmul.mubr.bf16.gmra.mxu0 %v4099
    %v4384 = vpop.f32.mrf.mxu0
    %v4385 = vadd.f32 %v4123, %v4384
    %v4386 = vpop.f32.mrf.mxu0
    %v4387 = vadd.f32 %v4127, %v4386
    %v4388 = vpop.f32.mrf.mxu0
    %v4389 = vadd.f32 %v4123, %v4388
    %v4390 = vpop.f32.mrf.mxu0
    %v4391 = vadd.f32 %v4127, %v4390
    %4392 = vmatprep.mubr.bf16.mxu0 %v4102
    %4393 = vmatmul.mubr.bf16.gmra.mxu0 %v4101
    %v4394 = vpop.f32.mrf.mxu0
    %v4395 = vadd.f32 %v4123, %v4394
    %v4396 = vpop.f32.mrf.mxu0
    %v4397 = vadd.f32 %v4127, %v4396
    %v4398 = vpop.f32.mrf.mxu0
    %v4399 = vadd.f32 %v4123, %v4398
    %v4400 = vpop.f32.mrf.mxu0
    %v4401 = vadd.f32 %v4127, %v4400
    %4402 = vmatprep.mubr.bf16.mxu0 %v4104
    %4403 = vmatmul.mubr.bf16.gmra.mxu0 %v4103
    %v4404 = vpop.f32.mrf.mxu0
    %v4405 = vadd.f32 %v4123, %v4404
    %v4406 = vpop.f32.mrf.mxu0
    %v4407 = vadd.f32 %v4127, %v4406
    %v4408 = vpop.f32.mrf.mxu0
    %v4409 = vadd.f32 %v4123, %v4408
    %v4410 = vpop.f32.mrf.mxu0
    %v4411 = vadd.f32 %v4127, %v4410
    %4412 = vmatprep.mubr.bf16.mxu0 %v4106
    %4413 = vmatmul.mubr.bf16.gmra.mxu0 %v4105
    %v4414 = vpop.f32.mrf.mxu0
    %v4415 = vadd.f32 %v4123, %v4414
    %v4416 = vpop.f32.mrf.mxu0
    %v4417 = vadd.f32 %v4127, %v4416
    %v4418 = vpop.f32.mrf.mxu0
    %v4419 = vadd.f32 %v4123, %v4418
    %v4420 = vpop.f32.mrf.mxu0
    %v4421 = vadd.f32 %v4127, %v4420
    %4422 = vmatprep.mubr.bf16.mxu0 %v4108
    %4423 = vmatmul.mubr.bf16.gmra.mxu0 %v4107
    %v4424 = vpop.f32.mrf.mxu0
    %v4425 = vadd.f32 %v4123, %v4424
    %v4426 = vpop.f32.mrf.mxu0
    %v4427 = vadd.f32 %v4127, %v4426
    %v4428 = vpop.f32.mrf.mxu0
    %v4429 = vadd.f32 %v4123, %v4428
    %v4430 = vpop.f32.mrf.mxu0
    %v4431 = vadd.f32 %v4127, %v4430
    %4432 = vmatprep.mubr.bf16.mxu0 %v4110
    %4433 = vmatmul.mubr.bf16.gmra.mxu0 %v4109
    %v4434 = vpop.f32.mrf.mxu0
    %v4435 = vadd.f32 %v4123, %v4434
    %v4436 = vpop.f32.mrf.mxu0
    %v4437 = vadd.f32 %v4127, %v4436
    %v4438 = vpop.f32.mrf.mxu0
    %v4439 = vadd.f32 %v4123, %v4438
    %v4440 = vpop.f32.mrf.mxu0
    %v4441 = vadd.f32 %v4127, %v4440
    %4442 = vmatprep.mubr.bf16.mxu0 %v4112
    %4443 = vmatmul.mubr.bf16.gmra.mxu0 %v4111
    %v4444 = vpop.f32.mrf.mxu0
    %v4445 = vadd.f32 %v4123, %v4444
    %v4446 = vpop.f32.mrf.mxu0
    %v4447 = vadd.f32 %v4127, %v4446
    %v4448 = vpop.f32.mrf.mxu0
    %v4449 = vadd.f32 %v4123, %v4448
    %v4450 = vpop.f32.mrf.mxu0
    %v4451 = vadd.f32 %v4127, %v4450
    %4452 = vmatprep.mubr.bf16.mxu0 %v4114
    %4453 = vmatmul.mubr.bf16.gmra.mxu0 %v4113
    %v4454 = vpop.f32.mrf.mxu0
    %v4455 = vadd.f32 %v4123, %v4454
    %v4456 = vpop.f32.mrf.mxu0
    %v4457 = vadd.f32 %v4127, %v4456
    %v4458 = vpop.f32.mrf.mxu0
    %v4459 = vadd.f32 %v4123, %v4458
    %v4460 = vpop.f32.mrf.mxu0
    %v4461 = vadd.f32 %v4127, %v4460
    %4462 = vmatprep.mubr.bf16.mxu0 %v4116
    %4463 = vmatmul.mubr.bf16.gmra.mxu0 %v4115
    %v4464 = vpop.f32.mrf.mxu0
    %v4465 = vadd.f32 %v4123, %v4464
    %v4466 = vpop.f32.mrf.mxu0
    %v4467 = vadd.f32 %v4127, %v4466
    %v4468 = vpop.f32.mrf.mxu0
    %v4469 = vadd.f32 %v4123, %v4468
    %v4470 = vpop.f32.mrf.mxu0
    %v4471 = vadd.f32 %v4127, %v4470
    %4472 = vmatprep.mubr.bf16.mxu0 %v4118
    %4473 = vmatmul.mubr.bf16.gmra.mxu0 %v4117
    %v4474 = vpop.f32.mrf.mxu0
    %v4475 = vadd.f32 %v4123, %v4474
    %v4476 = vpop.f32.mrf.mxu0
    %v4477 = vadd.f32 %v4127, %v4476
    %v4478 = vpop.f32.mrf.mxu0
    %v4479 = vadd.f32 %v4123, %v4478
    %v4480 = vpop.f32.mrf.mxu0
    %v4481 = vadd.f32 %v4127, %v4480
    %4482 = vdwg.mxu0
    %v4483 = vmax.f32 %v4325, 0.0
    %v4484 = vmax.f32 %v4327, 0.0
    %v4485 = vmax.f32 %v4329, 0.0
    %v4486 = vmax.f32 %v4331, 0.0
    %v4487 = vmax.f32 %v4335, 0.0
    %v4488 = vmax.f32 %v4337, 0.0
    %v4489 = vmax.f32 %v4339, 0.0
    %v4490 = vmax.f32 %v4341, 0.0
    %v4491 = vmax.f32 %v4345, 0.0
    %v4492 = vmax.f32 %v4347, 0.0
    %v4493 = vmax.f32 %v4349, 0.0
    %v4494 = vmax.f32 %v4351, 0.0
    %v4495 = vmax.f32 %v4355, 0.0
    %v4496 = vmax.f32 %v4357, 0.0
    %v4497 = vmax.f32 %v4359, 0.0
    %v4498 = vmax.f32 %v4361, 0.0
    %v4499 = vmax.f32 %v4365, 0.0
    %v4500 = vmax.f32 %v4367, 0.0
    %v4501 = vmax.f32 %v4369, 0.0
    %v4502 = vmax.f32 %v4371, 0.0
    %v4503 = vmax.f32 %v4375, 0.0
    %v4504 = vmax.f32 %v4377, 0.0
    %v4505 = vmax.f32 %v4379, 0.0
    %v4506 = vmax.f32 %v4381, 0.0
    %v4507 = vmax.f32 %v4385, 0.0
    %v4508 = vmax.f32 %v4387, 0.0
    %v4509 = vmax.f32 %v4389, 0.0
    %v4510 = vmax.f32 %v4391, 0.0
    %v4511 = vmax.f32 %v4395, 0.0
    %v4512 = vmax.f32 %v4397, 0.0
    %v4513 = vmax.f32 %v4399, 0.0
    %v4514 = vmax.f32 %v4401, 0.0
    %v4515 = vmax.f32 %v4405, 0.0
    %v4516 = vmax.f32 %v4407, 0.0
    %v4517 = vmax.f32 %v4409, 0.0
    %v4518 = vmax.f32 %v4411, 0.0
    %v4519 = vmax.f32 %v4415, 0.0
    %v4520 = vmax.f32 %v4417, 0.0
    %v4521 = vmax.f32 %v4419, 0.0
    %v4522 = vmax.f32 %v4421, 0.0
    %v4523 = vmax.f32 %v4425, 0.0
    %v4524 = vmax.f32 %v4427, 0.0
    %v4525 = vmax.f32 %v4429, 0.0
    %v4526 = vmax.f32 %v4431, 0.0
    %v4527 = vmax.f32 %v4435, 0.0
    %v4528 = vmax.f32 %v4437, 0.0
    %v4529 = vmax.f32 %v4439, 0.0
    %v4530 = vmax.f32 %v4441, 0.0
    %v4531 = vmax.f32 %v4445, 0.0
    %v4532 = vmax.f32 %v4447, 0.0
    %v4533 = vmax.f32 %v4449, 0.0
    %v4534 = vmax.f32 %v4451, 0.0
    %v4535 = vmax.f32 %v4455, 0.0
    %v4536 = vmax.f32 %v4457, 0.0
    %v4537 = vmax.f32 %v4459, 0.0
    %v4538 = vmax.f32 %v4461, 0.0
    %v4539 = vmax.f32 %v4465, 0.0
    %v4540 = vmax.f32 %v4467, 0.0
    %v4541 = vmax.f32 %v4469, 0.0
    %v4542 = vmax.f32 %v4471, 0.0
    %v4543 = vmax.f32 %v4475, 0.0
    %v4544 = vmax.f32 %v4477, 0.0
    %v4545 = vmax.f32 %v4479, 0.0
    %v4546 = vmax.f32 %v4481, 0.0
    %v4547 = vld [vmem:[#allocation14] sm:$0xff]
    %v4548 = vld [vmem:[#allocation14 + $0x8] sm:$0xff]
    %v4549 = vld [vmem:[#allocation14 + $0x10] sm:$0xff]
    %v4550 = vld [vmem:[#allocation14 + $0x18] sm:$0xff]
    %v4551 = vld [vmem:[#allocation14 + $0x20] sm:$0xff]
    %v4552 = vld [vmem:[#allocation14 + $0x28] sm:$0xff]
    %v4553 = vld [vmem:[#allocation14 + $0x30] sm:$0xff]
    %v4554 = vld [vmem:[#allocation14 + $0x38] sm:$0xff]
    %v4555 = vld [vmem:[#allocation14 + $0x40] sm:$0xff]
    %v4556 = vld [vmem:[#allocation14 + $0x48] sm:$0xff]
    %v4557 = vld [vmem:[#allocation14 + $0x50] sm:$0xff]
    %v4558 = vld [vmem:[#allocation14 + $0x58] sm:$0xff]
    %v4559 = vld [vmem:[#allocation14 + $0x60] sm:$0xff]
    %v4560 = vld [vmem:[#allocation14 + $0x68] sm:$0xff]
    %v4561 = vld [vmem:[#allocation14 + $0x70] sm:$0xff]
    %v4562 = vld [vmem:[#allocation14 + $0x78] sm:$0xff]
    %v4563 = vld [vmem:[#allocation14 + $0x80] sm:$0xff]
    %v4564 = vld [vmem:[#allocation14 + $0x88] sm:$0xff]
    %v4565 = vld [vmem:[#allocation14 + $0x90] sm:$0xff]
    %v4566 = vld [vmem:[#allocation14 + $0x98] sm:$0xff]
    %v4567 = vld [vmem:[#allocation14 + $0xa0] sm:$0xff]
    %v4568 = vld [vmem:[#allocation14 + $0xa8] sm:$0xff]
    %v4569 = vld [vmem:[#allocation14 + $0xb0] sm:$0xff]
    %v4570 = vld [vmem:[#allocation14 + $0xb8] sm:$0xff]
    %v4571 = vld [vmem:[#allocation14 + $0xc0] sm:$0xff]
    %v4572 = vld [vmem:[#allocation14 + $0xc8] sm:$0xff]
    %v4573 = vld [vmem:[#allocation14 + $0xd0] sm:$0xff]
    %v4574 = vld [vmem:[#allocation14 + $0xd8] sm:$0xff]
    %v4575 = vld [vmem:[#allocation14 + $0xe0] sm:$0xff]
    %v4576 = vld [vmem:[#allocation14 + $0xe8] sm:$0xff]
    %v4577 = vld [vmem:[#allocation14 + $0xf0] sm:$0xff]
    %v4578 = vld [vmem:[#allocation14 + $0xf8] sm:$0xff]
    %v4579 = vld [vmem:[%s17] sm:$0x3]
    %v4580 = vpack.c.bf16 %v4485, %v4483
    %v4581 = vpack.c.bf16 %v4486, %v4484
    %v4582 = vpack.c.bf16 %v4489, %v4487
    %v4583 = vpack.c.bf16 %v4490, %v4488
    %v4584 = vpack.c.bf16 %v4493, %v4491
    %v4585 = vpack.c.bf16 %v4494, %v4492
    %v4586 = vpack.c.bf16 %v4497, %v4495
    %v4587 = vpack.c.bf16 %v4498, %v4496
    %v4588 = vpack.c.bf16 %v4501, %v4499
    %v4589 = vpack.c.bf16 %v4502, %v4500
    %v4590 = vpack.c.bf16 %v4505, %v4503
    %v4591 = vpack.c.bf16 %v4506, %v4504
    %v4592 = vpack.c.bf16 %v4509, %v4507
    %v4593 = vpack.c.bf16 %v4510, %v4508
    %v4594 = vpack.c.bf16 %v4513, %v4511
    %v4595 = vpack.c.bf16 %v4514, %v4512
    %v4596 = vpack.c.bf16 %v4517, %v4515
    %v4597 = vpack.c.bf16 %v4518, %v4516
    %v4598 = vpack.c.bf16 %v4521, %v4519
    %v4599 = vpack.c.bf16 %v4522, %v4520
    %v4600 = vpack.c.bf16 %v4525, %v4523
    %v4601 = vpack.c.bf16 %v4526, %v4524
    %v4602 = vpack.c.bf16 %v4529, %v4527
    %v4603 = vpack.c.bf16 %v4530, %v4528
    %v4604 = vpack.c.bf16 %v4533, %v4531
    %v4605 = vpack.c.bf16 %v4534, %v4532
    %v4606 = vpack.c.bf16 %v4537, %v4535
    %v4607 = vpack.c.bf16 %v4538, %v4536
    %v4608 = vpack.c.bf16 %v4541, %v4539
    %v4609 = vpack.c.bf16 %v4542, %v4540
    %v4610 = vpack.c.bf16 %v4545, %v4543
    %v4611 = vpack.c.bf16 %v4546, %v4544
    %v4613 = vlaneseq
    %v4614 = vshrl.u32 %v4613, 7
    %v4615 = vsub.s32 0, %v4614
    %v4616 = vrot.slane %v4579, %v4615
    %v4617 = vlaneseq
    %v4618 = vshrl.u32 %v4617, 7
    %v4619 = vsub.s32 1, %v4618
    %v4620 = vrot.slane %v4579, %v4619
    %v4655 = vunpack.c.l.b16 %v4547
    %v4656 = vunpack.c.h.b16 %v4547
    %v4657 = vunpack.c.l.b16 %v4548
    %v4658 = vunpack.c.h.b16 %v4548
    %v4659 = vunpack.c.l.b16 %v4549
    %v4660 = vunpack.c.h.b16 %v4549
    %v4661 = vunpack.c.l.b16 %v4550
    %v4662 = vunpack.c.h.b16 %v4550
    %v4663 = vunpack.c.l.b16 %v4551
    %v4664 = vunpack.c.h.b16 %v4551
    %v4665 = vunpack.c.l.b16 %v4552
    %v4666 = vunpack.c.h.b16 %v4552
    %v4667 = vunpack.c.l.b16 %v4553
    %v4668 = vunpack.c.h.b16 %v4553
    %v4669 = vunpack.c.l.b16 %v4554
    %v4670 = vunpack.c.h.b16 %v4554
    %v4671 = vunpack.c.l.b16 %v4555
    %v4672 = vunpack.c.h.b16 %v4555
    %v4673 = vunpack.c.l.b16 %v4556
    %v4674 = vunpack.c.h.b16 %v4556
    %v4675 = vunpack.c.l.b16 %v4557
    %v4676 = vunpack.c.h.b16 %v4557
    %v4677 = vunpack.c.l.b16 %v4558
    %v4678 = vunpack.c.h.b16 %v4558
    %v4679 = vunpack.c.l.b16 %v4559
    %v4680 = vunpack.c.h.b16 %v4559
    %v4681 = vunpack.c.l.b16 %v4560
    %v4682 = vunpack.c.h.b16 %v4560
    %v4683 = vunpack.c.l.b16 %v4561
    %v4684 = vunpack.c.h.b16 %v4561
    %v4685 = vunpack.c.l.b16 %v4562
    %v4686 = vunpack.c.h.b16 %v4562
    %v4687 = vunpack.c.l.b16 %v4563
    %v4688 = vunpack.c.h.b16 %v4563
    %v4689 = vunpack.c.l.b16 %v4564
    %v4690 = vunpack.c.h.b16 %v4564
    %v4691 = vunpack.c.l.b16 %v4565
    %v4692 = vunpack.c.h.b16 %v4565
    %v4693 = vunpack.c.l.b16 %v4566
    %v4694 = vunpack.c.h.b16 %v4566
    %v4695 = vunpack.c.l.b16 %v4567
    %v4696 = vunpack.c.h.b16 %v4567
    %v4697 = vunpack.c.l.b16 %v4568
    %v4698 = vunpack.c.h.b16 %v4568
    %v4699 = vunpack.c.l.b16 %v4569
    %v4700 = vunpack.c.h.b16 %v4569
    %v4701 = vunpack.c.l.b16 %v4570
    %v4702 = vunpack.c.h.b16 %v4570
    %v4703 = vunpack.c.l.b16 %v4571
    %v4704 = vunpack.c.h.b16 %v4571
    %v4705 = vunpack.c.l.b16 %v4572
    %v4706 = vunpack.c.h.b16 %v4572
    %v4707 = vunpack.c.l.b16 %v4573
    %v4708 = vunpack.c.h.b16 %v4573
    %v4709 = vunpack.c.l.b16 %v4574
    %v4710 = vunpack.c.h.b16 %v4574
    %v4711 = vunpack.c.l.b16 %v4575
    %v4712 = vunpack.c.h.b16 %v4575
    %v4713 = vunpack.c.l.b16 %v4576
    %v4714 = vunpack.c.h.b16 %v4576
    %v4715 = vunpack.c.l.b16 %v4577
    %v4716 = vunpack.c.h.b16 %v4577
    %v4717 = vunpack.c.l.b16 %v4578
    %v4718 = vunpack.c.h.b16 %v4578
    %v4719 = vpack.c.b16 %v4657, %v4655
    %v4720 = vpack.c.b16 %v4658, %v4656
    %v4721 = vpack.c.b16 %v4661, %v4659
    %v4722 = vpack.c.b16 %v4662, %v4660
    %v4723 = vpack.c.b16 %v4665, %v4663
    %v4724 = vpack.c.b16 %v4666, %v4664
    %v4725 = vpack.c.b16 %v4669, %v4667
    %v4726 = vpack.c.b16 %v4670, %v4668
    %v4727 = vpack.c.b16 %v4673, %v4671
    %v4728 = vpack.c.b16 %v4674, %v4672
    %v4729 = vpack.c.b16 %v4677, %v4675
    %v4730 = vpack.c.b16 %v4678, %v4676
    %v4731 = vpack.c.b16 %v4681, %v4679
    %v4732 = vpack.c.b16 %v4682, %v4680
    %v4733 = vpack.c.b16 %v4685, %v4683
    %v4734 = vpack.c.b16 %v4686, %v4684
    %v4735 = vpack.c.b16 %v4689, %v4687
    %v4736 = vpack.c.b16 %v4690, %v4688
    %v4737 = vpack.c.b16 %v4693, %v4691
    %v4738 = vpack.c.b16 %v4694, %v4692
    %v4739 = vpack.c.b16 %v4697, %v4695
    %v4740 = vpack.c.b16 %v4698, %v4696
    %v4741 = vpack.c.b16 %v4701, %v4699
    %v4742 = vpack.c.b16 %v4702, %v4700
    %v4743 = vpack.c.b16 %v4705, %v4703
    %v4744 = vpack.c.b16 %v4706, %v4704
    %v4745 = vpack.c.b16 %v4709, %v4707
    %v4746 = vpack.c.b16 %v4710, %v4708
    %v4747 = vpack.c.b16 %v4713, %v4711
    %v4748 = vpack.c.b16 %v4714, %v4712
    %v4749 = vpack.c.b16 %v4717, %v4715
    %v4750 = vpack.c.b16 %v4718, %v4716
    %4783 = vmatprep.subr.bf16.mxu0 %v4734
    %4784 = vmatpush1.bf16.msra.mxu0 %v4733
    %4785 = vmatprep.subr.bf16.mxu0 %v4732
    %4786 = vmatpush1.bf16.msra.mxu0 %v4731
    %4787 = vmatprep.subr.bf16.mxu0 %v4730
    %4788 = vmatpush1.bf16.msra.mxu0 %v4729
    %4789 = vmatprep.subr.bf16.mxu0 %v4728
    %4790 = vmatpush1.bf16.msra.mxu0 %v4727
    %4791 = vmatprep.subr.bf16.mxu0 %v4726
    %4792 = vmatpush1.bf16.msra.mxu0 %v4725
    %4793 = vmatprep.subr.bf16.mxu0 %v4724
    %4794 = vmatpush1.bf16.msra.mxu0 %v4723
    %4795 = vmatprep.subr.bf16.mxu0 %v4722
    %4796 = vmatpush1.bf16.msra.mxu0 %v4721
    %4797 = vmatprep.subr.bf16.mxu0 %v4720
    %4798 = vmatpush1.bf16.msra.mxu0 %v4719
    %4799 = vmatprep.subr.bf16.mxu0 %v4750
    %4800 = vmatpush2.bf16.msra.mxu0 %v4749
    %4801 = vmatprep.subr.bf16.mxu0 %v4748
    %4802 = vmatpush2.bf16.msra.mxu0 %v4747
    %4803 = vmatprep.subr.bf16.mxu0 %v4746
    %4804 = vmatpush2.bf16.msra.mxu0 %v4745
    %4805 = vmatprep.subr.bf16.mxu0 %v4744
    %4806 = vmatpush2.bf16.msra.mxu0 %v4743
    %4807 = vmatprep.subr.bf16.mxu0 %v4742
    %4808 = vmatpush2.bf16.msra.mxu0 %v4741
    %4809 = vmatprep.subr.bf16.mxu0 %v4740
    %4810 = vmatpush2.bf16.msra.mxu0 %v4739
    %4811 = vmatprep.subr.bf16.mxu0 %v4738
    %4812 = vmatpush2.bf16.msra.mxu0 %v4737
    %4813 = vmatprep.subr.bf16.mxu0 %v4736
    %4814 = vmatpush2.bf16.msra.mxu0 %v4735
    %4815 = vmatprep.mubr.bf16.mxu0 %v4581
    %4816 = vmatmul.mubr.bf16.gmra.mxu0 %v4580
    %v4817 = vpop.f32.mrf.mxu0
    %v4818 = vadd.f32 %v4616, %v4817
    %v4819 = vpop.f32.mrf.mxu0
    %v4820 = vadd.f32 %v4620, %v4819
    %v4821 = vpop.f32.mrf.mxu0
    %v4822 = vadd.f32 %v4616, %v4821
    %v4823 = vpop.f32.mrf.mxu0
    %v4824 = vadd.f32 %v4620, %v4823
    %4825 = vmatprep.mubr.bf16.mxu0 %v4583
    %4826 = vmatmul.mubr.bf16.gmra.mxu0 %v4582
    %v4827 = vpop.f32.mrf.mxu0
    %v4828 = vadd.f32 %v4616, %v4827
    %v4829 = vpop.f32.mrf.mxu0
    %v4830 = vadd.f32 %v4620, %v4829
    %v4831 = vpop.f32.mrf.mxu0
    %v4832 = vadd.f32 %v4616, %v4831
    %v4833 = vpop.f32.mrf.mxu0
    %v4834 = vadd.f32 %v4620, %v4833
    %4835 = vmatprep.mubr.bf16.mxu0 %v4585
    %4836 = vmatmul.mubr.bf16.gmra.mxu0 %v4584
    %v4837 = vpop.f32.mrf.mxu0
    %v4838 = vadd.f32 %v4616, %v4837
    %v4839 = vpop.f32.mrf.mxu0
    %v4840 = vadd.f32 %v4620, %v4839
    %v4841 = vpop.f32.mrf.mxu0
    %v4842 = vadd.f32 %v4616, %v4841
    %v4843 = vpop.f32.mrf.mxu0
    %v4844 = vadd.f32 %v4620, %v4843
    %4845 = vmatprep.mubr.bf16.mxu0 %v4587
    %4846 = vmatmul.mubr.bf16.gmra.mxu0 %v4586
    %v4847 = vpop.f32.mrf.mxu0
    %v4848 = vadd.f32 %v4616, %v4847
    %v4849 = vpop.f32.mrf.mxu0
    %v4850 = vadd.f32 %v4620, %v4849
    %v4851 = vpop.f32.mrf.mxu0
    %v4852 = vadd.f32 %v4616, %v4851
    %v4853 = vpop.f32.mrf.mxu0
    %v4854 = vadd.f32 %v4620, %v4853
    %4855 = vmatprep.mubr.bf16.mxu0 %v4589
    %4856 = vmatmul.mubr.bf16.gmra.mxu0 %v4588
    %v4857 = vpop.f32.mrf.mxu0
    %v4858 = vadd.f32 %v4616, %v4857
    %v4859 = vpop.f32.mrf.mxu0
    %v4860 = vadd.f32 %v4620, %v4859
    %v4861 = vpop.f32.mrf.mxu0
    %v4862 = vadd.f32 %v4616, %v4861
    %v4863 = vpop.f32.mrf.mxu0
    %v4864 = vadd.f32 %v4620, %v4863
    %4865 = vmatprep.mubr.bf16.mxu0 %v4591
    %4866 = vmatmul.mubr.bf16.gmra.mxu0 %v4590
    %v4867 = vpop.f32.mrf.mxu0
    %v4868 = vadd.f32 %v4616, %v4867
    %v4869 = vpop.f32.mrf.mxu0
    %v4870 = vadd.f32 %v4620, %v4869
    %v4871 = vpop.f32.mrf.mxu0
    %v4872 = vadd.f32 %v4616, %v4871
    %v4873 = vpop.f32.mrf.mxu0
    %v4874 = vadd.f32 %v4620, %v4873
    %4875 = vmatprep.mubr.bf16.mxu0 %v4593
    %4876 = vmatmul.mubr.bf16.gmra.mxu0 %v4592
    %v4877 = vpop.f32.mrf.mxu0
    %v4878 = vadd.f32 %v4616, %v4877
    %v4879 = vpop.f32.mrf.mxu0
    %v4880 = vadd.f32 %v4620, %v4879
    %v4881 = vpop.f32.mrf.mxu0
    %v4882 = vadd.f32 %v4616, %v4881
    %v4883 = vpop.f32.mrf.mxu0
    %v4884 = vadd.f32 %v4620, %v4883
    %4885 = vmatprep.mubr.bf16.mxu0 %v4595
    %4886 = vmatmul.mubr.bf16.gmra.mxu0 %v4594
    %v4887 = vpop.f32.mrf.mxu0
    %v4888 = vadd.f32 %v4616, %v4887
    %v4889 = vpop.f32.mrf.mxu0
    %v4890 = vadd.f32 %v4620, %v4889
    %v4891 = vpop.f32.mrf.mxu0
    %v4892 = vadd.f32 %v4616, %v4891
    %v4893 = vpop.f32.mrf.mxu0
    %v4894 = vadd.f32 %v4620, %v4893
    %4895 = vmatprep.mubr.bf16.mxu0 %v4597
    %4896 = vmatmul.mubr.bf16.gmra.mxu0 %v4596
    %v4897 = vpop.f32.mrf.mxu0
    %v4898 = vadd.f32 %v4616, %v4897
    %v4899 = vpop.f32.mrf.mxu0
    %v4900 = vadd.f32 %v4620, %v4899
    %v4901 = vpop.f32.mrf.mxu0
    %v4902 = vadd.f32 %v4616, %v4901
    %v4903 = vpop.f32.mrf.mxu0
    %v4904 = vadd.f32 %v4620, %v4903
    %4905 = vmatprep.mubr.bf16.mxu0 %v4599
    %4906 = vmatmul.mubr.bf16.gmra.mxu0 %v4598
    %v4907 = vpop.f32.mrf.mxu0
    %v4908 = vadd.f32 %v4616, %v4907
    %v4909 = vpop.f32.mrf.mxu0
    %v4910 = vadd.f32 %v4620, %v4909
    %v4911 = vpop.f32.mrf.mxu0
    %v4912 = vadd.f32 %v4616, %v4911
    %v4913 = vpop.f32.mrf.mxu0
    %v4914 = vadd.f32 %v4620, %v4913
    %4915 = vmatprep.mubr.bf16.mxu0 %v4601
    %4916 = vmatmul.mubr.bf16.gmra.mxu0 %v4600
    %v4917 = vpop.f32.mrf.mxu0
    %v4918 = vadd.f32 %v4616, %v4917
    %v4919 = vpop.f32.mrf.mxu0
    %v4920 = vadd.f32 %v4620, %v4919
    %v4921 = vpop.f32.mrf.mxu0
    %v4922 = vadd.f32 %v4616, %v4921
    %v4923 = vpop.f32.mrf.mxu0
    %v4924 = vadd.f32 %v4620, %v4923
    %4925 = vmatprep.mubr.bf16.mxu0 %v4603
    %4926 = vmatmul.mubr.bf16.gmra.mxu0 %v4602
    %v4927 = vpop.f32.mrf.mxu0
    %v4928 = vadd.f32 %v4616, %v4927
    %v4929 = vpop.f32.mrf.mxu0
    %v4930 = vadd.f32 %v4620, %v4929
    %v4931 = vpop.f32.mrf.mxu0
    %v4932 = vadd.f32 %v4616, %v4931
    %v4933 = vpop.f32.mrf.mxu0
    %v4934 = vadd.f32 %v4620, %v4933
    %4935 = vmatprep.mubr.bf16.mxu0 %v4605
    %4936 = vmatmul.mubr.bf16.gmra.mxu0 %v4604
    %v4937 = vpop.f32.mrf.mxu0
    %v4938 = vadd.f32 %v4616, %v4937
    %v4939 = vpop.f32.mrf.mxu0
    %v4940 = vadd.f32 %v4620, %v4939
    %v4941 = vpop.f32.mrf.mxu0
    %v4942 = vadd.f32 %v4616, %v4941
    %v4943 = vpop.f32.mrf.mxu0
    %v4944 = vadd.f32 %v4620, %v4943
    %4945 = vmatprep.mubr.bf16.mxu0 %v4607
    %4946 = vmatmul.mubr.bf16.gmra.mxu0 %v4606
    %v4947 = vpop.f32.mrf.mxu0
    %v4948 = vadd.f32 %v4616, %v4947
    %v4949 = vpop.f32.mrf.mxu0
    %v4950 = vadd.f32 %v4620, %v4949
    %v4951 = vpop.f32.mrf.mxu0
    %v4952 = vadd.f32 %v4616, %v4951
    %v4953 = vpop.f32.mrf.mxu0
    %v4954 = vadd.f32 %v4620, %v4953
    %4955 = vmatprep.mubr.bf16.mxu0 %v4609
    %4956 = vmatmul.mubr.bf16.gmra.mxu0 %v4608
    %v4957 = vpop.f32.mrf.mxu0
    %v4958 = vadd.f32 %v4616, %v4957
    %v4959 = vpop.f32.mrf.mxu0
    %v4960 = vadd.f32 %v4620, %v4959
    %v4961 = vpop.f32.mrf.mxu0
    %v4962 = vadd.f32 %v4616, %v4961
    %v4963 = vpop.f32.mrf.mxu0
    %v4964 = vadd.f32 %v4620, %v4963
    %4965 = vmatprep.mubr.bf16.mxu0 %v4611
    %4966 = vmatmul.mubr.bf16.gmra.mxu0 %v4610
    %v4967 = vpop.f32.mrf.mxu0
    %v4968 = vadd.f32 %v4616, %v4967
    %v4969 = vpop.f32.mrf.mxu0
    %v4970 = vadd.f32 %v4620, %v4969
    %v4971 = vpop.f32.mrf.mxu0
    %v4972 = vadd.f32 %v4616, %v4971
    %v4973 = vpop.f32.mrf.mxu0
    %v4974 = vadd.f32 %v4620, %v4973
    %4975 = vdwg.mxu0
    %v4976 = vmax.f32 %v4818, 0.0
    %v4977 = vmax.f32 %v4820, 0.0
    %v4978 = vmax.f32 %v4822, 0.0
    %v4979 = vmax.f32 %v4824, 0.0
    %v4980 = vmax.f32 %v4828, 0.0
    %v4981 = vmax.f32 %v4830, 0.0
    %v4982 = vmax.f32 %v4832, 0.0
    %v4983 = vmax.f32 %v4834, 0.0
    %v4984 = vmax.f32 %v4838, 0.0
    %v4985 = vmax.f32 %v4840, 0.0
    %v4986 = vmax.f32 %v4842, 0.0
    %v4987 = vmax.f32 %v4844, 0.0
    %v4988 = vmax.f32 %v4848, 0.0
    %v4989 = vmax.f32 %v4850, 0.0
    %v4990 = vmax.f32 %v4852, 0.0
    %v4991 = vmax.f32 %v4854, 0.0
    %v4992 = vmax.f32 %v4858, 0.0
    %v4993 = vmax.f32 %v4860, 0.0
    %v4994 = vmax.f32 %v4862, 0.0
    %v4995 = vmax.f32 %v4864, 0.0
    %v4996 = vmax.f32 %v4868, 0.0
    %v4997 = vmax.f32 %v4870, 0.0
    %v4998 = vmax.f32 %v4872, 0.0
    %v4999 = vmax.f32 %v4874, 0.0
    %v5000 = vmax.f32 %v4878, 0.0
    %v5001 = vmax.f32 %v4880, 0.0
    %v5002 = vmax.f32 %v4882, 0.0
    %v5003 = vmax.f32 %v4884, 0.0
    %v5004 = vmax.f32 %v4888, 0.0
    %v5005 = vmax.f32 %v4890, 0.0
    %v5006 = vmax.f32 %v4892, 0.0
    %v5007 = vmax.f32 %v4894, 0.0
    %v5008 = vmax.f32 %v4898, 0.0
    %v5009 = vmax.f32 %v4900, 0.0
    %v5010 = vmax.f32 %v4902, 0.0
    %v5011 = vmax.f32 %v4904, 0.0
    %v5012 = vmax.f32 %v4908, 0.0
    %v5013 = vmax.f32 %v4910, 0.0
    %v5014 = vmax.f32 %v4912, 0.0
    %v5015 = vmax.f32 %v4914, 0.0
    %v5016 = vmax.f32 %v4918, 0.0
    %v5017 = vmax.f32 %v4920, 0.0
    %v5018 = vmax.f32 %v4922, 0.0
    %v5019 = vmax.f32 %v4924, 0.0
    %v5020 = vmax.f32 %v4928, 0.0
    %v5021 = vmax.f32 %v4930, 0.0
    %v5022 = vmax.f32 %v4932, 0.0
    %v5023 = vmax.f32 %v4934, 0.0
    %v5024 = vmax.f32 %v4938, 0.0
    %v5025 = vmax.f32 %v4940, 0.0
    %v5026 = vmax.f32 %v4942, 0.0
    %v5027 = vmax.f32 %v4944, 0.0
    %v5028 = vmax.f32 %v4948, 0.0
    %v5029 = vmax.f32 %v4950, 0.0
    %v5030 = vmax.f32 %v4952, 0.0
    %v5031 = vmax.f32 %v4954, 0.0
    %v5032 = vmax.f32 %v4958, 0.0
    %v5033 = vmax.f32 %v4960, 0.0
    %v5034 = vmax.f32 %v4962, 0.0
    %v5035 = vmax.f32 %v4964, 0.0
    %v5036 = vmax.f32 %v4968, 0.0
    %v5037 = vmax.f32 %v4970, 0.0
    %v5038 = vmax.f32 %v4972, 0.0
    %v5039 = vmax.f32 %v4974, 0.0
    %v5040 = vld [vmem:[#allocation16] sm:$0xf]
    %v5041 = vld [vmem:[#allocation16 + $0x4] sm:$0xf]
    %v5042 = vld [vmem:[#allocation16 + $0x8] sm:$0xf]
    %v5043 = vld [vmem:[#allocation16 + $0xc] sm:$0xf]
    %v5044 = vld [vmem:[#allocation16 + $0x10] sm:$0xf]
    %v5045 = vld [vmem:[#allocation16 + $0x14] sm:$0xf]
    %v5046 = vld [vmem:[#allocation16 + $0x18] sm:$0xf]
    %v5047 = vld [vmem:[#allocation16 + $0x1c] sm:$0xf]
    %v5048 = vld [vmem:[#allocation16 + $0x20] sm:$0xf]
    %v5049 = vld [vmem:[#allocation16 + $0x24] sm:$0xf]
    %v5050 = vld [vmem:[#allocation16 + $0x28] sm:$0xf]
    %v5051 = vld [vmem:[#allocation16 + $0x2c] sm:$0xf]
    %v5052 = vld [vmem:[#allocation16 + $0x30] sm:$0xf]
    %v5053 = vld [vmem:[#allocation16 + $0x34] sm:$0xf]
    %v5054 = vld [vmem:[#allocation16 + $0x38] sm:$0xf]
    %v5055 = vld [vmem:[#allocation16 + $0x3c] sm:$0xf]
    %v5056 = vld [vmem:[#allocation16 + $0x40] sm:$0xf]
    %v5057 = vld [vmem:[#allocation16 + $0x44] sm:$0xf]
    %v5058 = vld [vmem:[#allocation16 + $0x48] sm:$0xf]
    %v5059 = vld [vmem:[#allocation16 + $0x4c] sm:$0xf]
    %v5060 = vld [vmem:[#allocation16 + $0x50] sm:$0xf]
    %v5061 = vld [vmem:[#allocation16 + $0x54] sm:$0xf]
    %v5062 = vld [vmem:[#allocation16 + $0x58] sm:$0xf]
    %v5063 = vld [vmem:[#allocation16 + $0x5c] sm:$0xf]
    %v5064 = vld [vmem:[#allocation16 + $0x60] sm:$0xf]
    %v5065 = vld [vmem:[#allocation16 + $0x64] sm:$0xf]
    %v5066 = vld [vmem:[#allocation16 + $0x68] sm:$0xf]
    %v5067 = vld [vmem:[#allocation16 + $0x6c] sm:$0xf]
    %v5068 = vld [vmem:[#allocation16 + $0x70] sm:$0xf]
    %v5069 = vld [vmem:[#allocation16 + $0x74] sm:$0xf]
    %v5070 = vld [vmem:[#allocation16 + $0x78] sm:$0xf]
    %v5071 = vld [vmem:[#allocation16 + $0x7c] sm:$0xf]
    %v5072 = vld [vmem:[%s19] sm:$0x1]
    %v5073 = vpack.c.bf16 %v4978, %v4976
    %v5074 = vpack.c.bf16 %v4979, %v4977
    %v5075 = vpack.c.bf16 %v4982, %v4980
    %v5076 = vpack.c.bf16 %v4983, %v4981
    %v5077 = vpack.c.bf16 %v4986, %v4984
    %v5078 = vpack.c.bf16 %v4987, %v4985
    %v5079 = vpack.c.bf16 %v4990, %v4988
    %v5080 = vpack.c.bf16 %v4991, %v4989
    %v5081 = vpack.c.bf16 %v4994, %v4992
    %v5082 = vpack.c.bf16 %v4995, %v4993
    %v5083 = vpack.c.bf16 %v4998, %v4996
    %v5084 = vpack.c.bf16 %v4999, %v4997
    %v5085 = vpack.c.bf16 %v5002, %v5000
    %v5086 = vpack.c.bf16 %v5003, %v5001
    %v5087 = vpack.c.bf16 %v5006, %v5004
    %v5088 = vpack.c.bf16 %v5007, %v5005
    %v5089 = vpack.c.bf16 %v5010, %v5008
    %v5090 = vpack.c.bf16 %v5011, %v5009
    %v5091 = vpack.c.bf16 %v5014, %v5012
    %v5092 = vpack.c.bf16 %v5015, %v5013
    %v5093 = vpack.c.bf16 %v5018, %v5016
    %v5094 = vpack.c.bf16 %v5019, %v5017
    %v5095 = vpack.c.bf16 %v5022, %v5020
    %v5096 = vpack.c.bf16 %v5023, %v5021
    %v5097 = vpack.c.bf16 %v5026, %v5024
    %v5098 = vpack.c.bf16 %v5027, %v5025
    %v5099 = vpack.c.bf16 %v5030, %v5028
    %v5100 = vpack.c.bf16 %v5031, %v5029
    %v5101 = vpack.c.bf16 %v5034, %v5032
    %v5102 = vpack.c.bf16 %v5035, %v5033
    %v5103 = vpack.c.bf16 %v5038, %v5036
    %v5104 = vpack.c.bf16 %v5039, %v5037
    %v5106 = vlaneseq
    %v5107 = vshrl.u32 %v5106, 7
    %v5108 = vsub.s32 0, %v5107
    %v5109 = vrot.slane %v5072, %v5108
    %v5143 = vunpack.c.l.b16 %v5040
    %v5144 = vunpack.c.l.b16 %v5041
    %v5145 = vunpack.c.l.b16 %v5042
    %v5146 = vunpack.c.l.b16 %v5043
    %v5147 = vunpack.c.l.b16 %v5044
    %v5148 = vunpack.c.l.b16 %v5045
    %v5149 = vunpack.c.l.b16 %v5046
    %v5150 = vunpack.c.l.b16 %v5047
    %v5151 = vunpack.c.l.b16 %v5048
    %v5152 = vunpack.c.l.b16 %v5049
    %v5153 = vunpack.c.l.b16 %v5050
    %v5154 = vunpack.c.l.b16 %v5051
    %v5155 = vunpack.c.l.b16 %v5052
    %v5156 = vunpack.c.l.b16 %v5053
    %v5157 = vunpack.c.l.b16 %v5054
    %v5158 = vunpack.c.l.b16 %v5055
    %v5159 = vunpack.c.l.b16 %v5056
    %v5160 = vunpack.c.l.b16 %v5057
    %v5161 = vunpack.c.l.b16 %v5058
    %v5162 = vunpack.c.l.b16 %v5059
    %v5163 = vunpack.c.l.b16 %v5060
    %v5164 = vunpack.c.l.b16 %v5061
    %v5165 = vunpack.c.l.b16 %v5062
    %v5166 = vunpack.c.l.b16 %v5063
    %v5167 = vunpack.c.l.b16 %v5064
    %v5168 = vunpack.c.l.b16 %v5065
    %v5169 = vunpack.c.l.b16 %v5066
    %v5170 = vunpack.c.l.b16 %v5067
    %v5171 = vunpack.c.l.b16 %v5068
    %v5172 = vunpack.c.l.b16 %v5069
    %v5173 = vunpack.c.l.b16 %v5070
    %v5174 = vunpack.c.l.b16 %v5071
    %v5175 = vpack.c.b16 %v5144, %v5143
    %v5176 = vpack.c.b16 %v5146, %v5145
    %v5177 = vpack.c.b16 %v5148, %v5147
    %v5178 = vpack.c.b16 %v5150, %v5149
    %v5179 = vpack.c.b16 %v5152, %v5151
    %v5180 = vpack.c.b16 %v5154, %v5153
    %v5181 = vpack.c.b16 %v5156, %v5155
    %v5182 = vpack.c.b16 %v5158, %v5157
    %v5183 = vpack.c.b16 %v5160, %v5159
    %v5184 = vpack.c.b16 %v5162, %v5161
    %v5185 = vpack.c.b16 %v5164, %v5163
    %v5186 = vpack.c.b16 %v5166, %v5165
    %v5187 = vpack.c.b16 %v5168, %v5167
    %v5188 = vpack.c.b16 %v5170, %v5169
    %v5189 = vpack.c.b16 %v5172, %v5171
    %v5190 = vpack.c.b16 %v5174, %v5173
    %5207 = vmatprep.subr.bf16.mxu0 0
    %5208 = vmatpush1.bf16.msra.mxu0 %v5182
    %5209 = vmatprep.subr.bf16.mxu0 0
    %5210 = vmatpush1.bf16.msra.mxu0 %v5181
    %5211 = vmatprep.subr.bf16.mxu0 0
    %5212 = vmatpush1.bf16.msra.mxu0 %v5180
    %5213 = vmatprep.subr.bf16.mxu0 0
    %5214 = vmatpush1.bf16.msra.mxu0 %v5179
    %5215 = vmatprep.subr.bf16.mxu0 0
    %5216 = vmatpush1.bf16.msra.mxu0 %v5178
    %5217 = vmatprep.subr.bf16.mxu0 0
    %5218 = vmatpush1.bf16.msra.mxu0 %v5177
    %5219 = vmatprep.subr.bf16.mxu0 0
    %5220 = vmatpush1.bf16.msra.mxu0 %v5176
    %5221 = vmatprep.subr.bf16.mxu0 0
    %5222 = vmatpush1.bf16.msra.mxu0 %v5175
    %5223 = vmatprep.subr.bf16.mxu0 0
    %5224 = vmatpush2.bf16.msra.mxu0 %v5190
    %5225 = vmatprep.subr.bf16.mxu0 0
    %5226 = vmatpush2.bf16.msra.mxu0 %v5189
    %5227 = vmatprep.subr.bf16.mxu0 0
    %5228 = vmatpush2.bf16.msra.mxu0 %v5188
    %5229 = vmatprep.subr.bf16.mxu0 0
    %5230 = vmatpush2.bf16.msra.mxu0 %v5187
    %5231 = vmatprep.subr.bf16.mxu0 0
    %5232 = vmatpush2.bf16.msra.mxu0 %v5186
    %5233 = vmatprep.subr.bf16.mxu0 0
    %5234 = vmatpush2.bf16.msra.mxu0 %v5185
    %5235 = vmatprep.subr.bf16.mxu0 0
    %5236 = vmatpush2.bf16.msra.mxu0 %v5184
    %5237 = vmatprep.subr.bf16.mxu0 0
    %5238 = vmatpush2.bf16.msra.mxu0 %v5183
    %5239 = vmatprep.mubr.bf16.mxu0 %v5074
    %5240 = vmatmul.mubr.bf16.gmra.mxu0 %v5073
    %v5241 = vpop.f32.mrf.mxu0
    %v5242 = vadd.f32 %v5109, %v5241
    %v5243 = vpop.f32.mrf.mxu0
    %v5244 = vpop.f32.mrf.mxu0
    %v5245 = vadd.f32 %v5109, %v5244
    %v5246 = vpop.f32.mrf.mxu0
    %5247 = vmatprep.mubr.bf16.mxu0 %v5076
    %5248 = vmatmul.mubr.bf16.gmra.mxu0 %v5075
    %v5249 = vpop.f32.mrf.mxu0
    %v5250 = vadd.f32 %v5109, %v5249
    %v5251 = vpop.f32.mrf.mxu0
    %v5252 = vpop.f32.mrf.mxu0
    %v5253 = vadd.f32 %v5109, %v5252
    %v5254 = vpop.f32.mrf.mxu0
    %5255 = vmatprep.mubr.bf16.mxu0 %v5078
    %5256 = vmatmul.mubr.bf16.gmra.mxu0 %v5077
    %v5257 = vpop.f32.mrf.mxu0
    %v5258 = vadd.f32 %v5109, %v5257
    %v5259 = vpop.f32.mrf.mxu0
    %v5260 = vpop.f32.mrf.mxu0
    %v5261 = vadd.f32 %v5109, %v5260
    %v5262 = vpop.f32.mrf.mxu0
    %5263 = vmatprep.mubr.bf16.mxu0 %v5080
    %5264 = vmatmul.mubr.bf16.gmra.mxu0 %v5079
    %v5265 = vpop.f32.mrf.mxu0
    %v5266 = vadd.f32 %v5109, %v5265
    %v5267 = vpop.f32.mrf.mxu0
    %v5268 = vpop.f32.mrf.mxu0
    %v5269 = vadd.f32 %v5109, %v5268
    %v5270 = vpop.f32.mrf.mxu0
    %5271 = vmatprep.mubr.bf16.mxu0 %v5082
    %5272 = vmatmul.mubr.bf16.gmra.mxu0 %v5081
    %v5273 = vpop.f32.mrf.mxu0
    %v5274 = vadd.f32 %v5109, %v5273
    %v5275 = vpop.f32.mrf.mxu0
    %v5276 = vpop.f32.mrf.mxu0
    %v5277 = vadd.f32 %v5109, %v5276
    %v5278 = vpop.f32.mrf.mxu0
    %5279 = vmatprep.mubr.bf16.mxu0 %v5084
    %5280 = vmatmul.mubr.bf16.gmra.mxu0 %v5083
    %v5281 = vpop.f32.mrf.mxu0
    %v5282 = vadd.f32 %v5109, %v5281
    %v5283 = vpop.f32.mrf.mxu0
    %v5284 = vpop.f32.mrf.mxu0
    %v5285 = vadd.f32 %v5109, %v5284
    %v5286 = vpop.f32.mrf.mxu0
    %5287 = vmatprep.mubr.bf16.mxu0 %v5086
    %5288 = vmatmul.mubr.bf16.gmra.mxu0 %v5085
    %v5289 = vpop.f32.mrf.mxu0
    %v5290 = vadd.f32 %v5109, %v5289
    %v5291 = vpop.f32.mrf.mxu0
    %v5292 = vpop.f32.mrf.mxu0
    %v5293 = vadd.f32 %v5109, %v5292
    %v5294 = vpop.f32.mrf.mxu0
    %5295 = vmatprep.mubr.bf16.mxu0 %v5088
    %5296 = vmatmul.mubr.bf16.gmra.mxu0 %v5087
    %v5297 = vpop.f32.mrf.mxu0
    %v5298 = vadd.f32 %v5109, %v5297
    %v5299 = vpop.f32.mrf.mxu0
    %v5300 = vpop.f32.mrf.mxu0
    %v5301 = vadd.f32 %v5109, %v5300
    %v5302 = vpop.f32.mrf.mxu0
    %5303 = vmatprep.mubr.bf16.mxu0 %v5090
    %5304 = vmatmul.mubr.bf16.gmra.mxu0 %v5089
    %v5305 = vpop.f32.mrf.mxu0
    %v5306 = vadd.f32 %v5109, %v5305
    %v5307 = vpop.f32.mrf.mxu0
    %v5308 = vpop.f32.mrf.mxu0
    %v5309 = vadd.f32 %v5109, %v5308
    %v5310 = vpop.f32.mrf.mxu0
    %5311 = vmatprep.mubr.bf16.mxu0 %v5092
    %5312 = vmatmul.mubr.bf16.gmra.mxu0 %v5091
    %v5313 = vpop.f32.mrf.mxu0
    %v5314 = vadd.f32 %v5109, %v5313
    %v5315 = vpop.f32.mrf.mxu0
    %v5316 = vpop.f32.mrf.mxu0
    %v5317 = vadd.f32 %v5109, %v5316
    %v5318 = vpop.f32.mrf.mxu0
    %5319 = vmatprep.mubr.bf16.mxu0 %v5094
    %5320 = vmatmul.mubr.bf16.gmra.mxu0 %v5093
    %v5321 = vpop.f32.mrf.mxu0
    %v5322 = vadd.f32 %v5109, %v5321
    %v5323 = vpop.f32.mrf.mxu0
    %v5324 = vpop.f32.mrf.mxu0
    %v5325 = vadd.f32 %v5109, %v5324
    %v5326 = vpop.f32.mrf.mxu0
    %5327 = vmatprep.mubr.bf16.mxu0 %v5096
    %5328 = vmatmul.mubr.bf16.gmra.mxu0 %v5095
    %v5329 = vpop.f32.mrf.mxu0
    %v5330 = vadd.f32 %v5109, %v5329
    %v5331 = vpop.f32.mrf.mxu0
    %v5332 = vpop.f32.mrf.mxu0
    %v5333 = vadd.f32 %v5109, %v5332
    %v5334 = vpop.f32.mrf.mxu0
    %5335 = vmatprep.mubr.bf16.mxu0 %v5098
    %5336 = vmatmul.mubr.bf16.gmra.mxu0 %v5097
    %v5337 = vpop.f32.mrf.mxu0
    %v5338 = vadd.f32 %v5109, %v5337
    %v5339 = vpop.f32.mrf.mxu0
    %v5340 = vpop.f32.mrf.mxu0
    %v5341 = vadd.f32 %v5109, %v5340
    %v5342 = vpop.f32.mrf.mxu0
    %5343 = vmatprep.mubr.bf16.mxu0 %v5100
    %5344 = vmatmul.mubr.bf16.gmra.mxu0 %v5099
    %v5345 = vpop.f32.mrf.mxu0
    %v5346 = vadd.f32 %v5109, %v5345
    %v5347 = vpop.f32.mrf.mxu0
    %v5348 = vpop.f32.mrf.mxu0
    %v5349 = vadd.f32 %v5109, %v5348
    %v5350 = vpop.f32.mrf.mxu0
    %5351 = vmatprep.mubr.bf16.mxu0 %v5102
    %5352 = vmatmul.mubr.bf16.gmra.mxu0 %v5101
    %v5353 = vpop.f32.mrf.mxu0
    %v5354 = vadd.f32 %v5109, %v5353
    %v5355 = vpop.f32.mrf.mxu0
    %v5356 = vpop.f32.mrf.mxu0
    %v5357 = vadd.f32 %v5109, %v5356
    %v5358 = vpop.f32.mrf.mxu0
    %5359 = vmatprep.mubr.bf16.mxu0 %v5104
    %5360 = vmatmul.mubr.bf16.gmra.mxu0 %v5103
    %v5361 = vpop.f32.mrf.mxu0
    %v5362 = vadd.f32 %v5109, %v5361
    %v5363 = vpop.f32.mrf.mxu0
    %v5364 = vpop.f32.mrf.mxu0
    %v5365 = vadd.f32 %v5109, %v5364
    %v5366 = vpop.f32.mrf.mxu0
    %5367 = vdwg.mxu0
    %5368 = vst [vmem:[#allocation17] sm:$0xff] %v5242
    %5369 = vst [vmem:[#allocation17 + $0x8] sm:$0xff] %v5245
    %5370 = vst [vmem:[#allocation17 + $0x10] sm:$0xff] %v5250
    %5371 = vst [vmem:[#allocation17 + $0x18] sm:$0xff] %v5253
    %5372 = vst [vmem:[#allocation17 + $0x20] sm:$0xff] %v5258
    %5373 = vst [vmem:[#allocation17 + $0x28] sm:$0xff] %v5261
    %5374 = vst [vmem:[#allocation17 + $0x30] sm:$0xff] %v5266
    %5375 = vst [vmem:[#allocation17 + $0x38] sm:$0xff] %v5269
    %5376 = vst [vmem:[#allocation17 + $0x40] sm:$0xff] %v5274
    %5377 = vst [vmem:[#allocation17 + $0x48] sm:$0xff] %v5277
    %5378 = vst [vmem:[#allocation17 + $0x50] sm:$0xff] %v5282
    %5379 = vst [vmem:[#allocation17 + $0x58] sm:$0xff] %v5285
    %5380 = vst [vmem:[#allocation17 + $0x60] sm:$0xff] %v5290
    %5381 = vst [vmem:[#allocation17 + $0x68] sm:$0xff] %v5293
    %5382 = vst [vmem:[#allocation17 + $0x70] sm:$0xff] %v5298
    %5383 = vst [vmem:[#allocation17 + $0x78] sm:$0xff] %v5301
    %5384 = vst [vmem:[#allocation17 + $0x80] sm:$0xff] %v5306
    %5385 = vst [vmem:[#allocation17 + $0x88] sm:$0xff] %v5309
    %5386 = vst [vmem:[#allocation17 + $0x90] sm:$0xff] %v5314
    %5387 = vst [vmem:[#allocation17 + $0x98] sm:$0xff] %v5317
    %5388 = vst [vmem:[#allocation17 + $0xa0] sm:$0xff] %v5322
    %5389 = vst [vmem:[#allocation17 + $0xa8] sm:$0xff] %v5325
    %5390 = vst [vmem:[#allocation17 + $0xb0] sm:$0xff] %v5330
    %5391 = vst [vmem:[#allocation17 + $0xb8] sm:$0xff] %v5333
    %5392 = vst [vmem:[#allocation17 + $0xc0] sm:$0xff] %v5338
    %5393 = vst [vmem:[#allocation17 + $0xc8] sm:$0xff] %v5341
    %5394 = vst [vmem:[#allocation17 + $0xd0] sm:$0xff] %v5346
    %5395 = vst [vmem:[#allocation17 + $0xd8] sm:$0xff] %v5349
    %5396 = vst [vmem:[#allocation17 + $0xe0] sm:$0xff] %v5354
    %5397 = vst [vmem:[#allocation17 + $0xe8] sm:$0xff] %v5357
    %5398 = vst [vmem:[#allocation17 + $0xf0] sm:$0xff] %v5362
    %5399 = vst [vmem:[#allocation17 + $0xf8] sm:$0xff] %v5365
    // Predicated region
    $region118: #{tpu_custom_call.1} parent=1 // pred_check
      _
    $region119: #{tpu_custom_call.1} parent=1 // pred_check_branch
      %5401 = sbr.rel (0) target = $region121
    $region120: #{tpu_custom_call.1} parent=1 // pred_region
      %s5403 = ssub.s32 4096, 4096
      %5404 = vsyncadd [#allocation4], %s5403
      %s5405 = sshll.u32 [#allocation17], 4
      %s5406 = int_to_ptr.vmem [resolvable:$true] %s5405
      %5411 = dma.vmem_to_hbm [thread:$0]  %s5406, 4096, %s20, [#allocation4], 128, 128, 8
    $region121: #{tpu_custom_call.1} parent=1 // pred_fallthru
      _
    // Predicated region
    $region122: #{tpu_custom_call.1} parent=1 // pred_check
      _
    $region123: #{tpu_custom_call.1} parent=1 // pred_check_branch
      %5413 = sbr.rel (0) target = $region125
    $region124: #{tpu_custom_call.1} parent=1 // pred_region
      %5414 = dma.done [#allocation4], 4096
    $region125: #{tpu_custom_call.1} parent=1 // pred_fallthru
      _
    %5415 = vsyncpa [#allocation3], 1
    %5416 = vsyncpa [#allocation6], 1
    %5417 = vsyncpa [#allocation9], 1
    %5418 = vsyncpa [#allocation12], 1
    %5419 = vsyncpa [#allocation15], 1
    %5420 = vsyncpa [#allocation4], 1

</llo_original>
